<compile_context>
chip_gen: v6e
topology: v6e:2x2x1
jax: 0.10.0
libtpu: 0.0.40
codegen_flags: <defaults>
</compile_context>

<pallas_src>
import jax
import jax.numpy as jnp
import numpy as np
from jax.experimental import pallas as pl
from jax.experimental.pallas import tpu as pltpu

LANE = 128   # lane-dense padded width for all activation / weight columns
HID = 192    # fc1 hidden width (from the PyTorch module)


# ----------------------------------------------------------------------------
# Fused forward kernel (one grid step == NB images)
# ----------------------------------------------------------------------------
def make_fused_kernel(NB, S0, S1, SP, S2, S3):
    """NB: images per grid step.  S0: input spatial, S1: after conv1,
    SP: after pool, S2/S3: after conv2/conv3 (square images, static)."""
    bf16, f32 = jnp.bfloat16, jnp.float32

    def conv_from(get_rows, c_ref, b_row, oh):
        # get_rows(i, oh): [oh, LANE] activation rows at vertical offset i.
        # c_ref: [3, LANE, LANE] bf16 banded weights (one per kernel row).
        acc = jnp.dot(get_rows(0, oh).astype(bf16), c_ref[0],
                      preferred_element_type=f32)
        for i in range(1, 3):
            acc = acc + jnp.dot(get_rows(i, oh).astype(bf16), c_ref[i],
                                preferred_element_type=f32)
        return jnp.maximum(acc + b_row, 0.0)

    def kernel(x_ref, c1_ref, b1_ref, re_ref, ro_ref, se_ref, so_ref,
               c2_ref, b2_ref, c3_ref, b3_ref,
               w1p_ref, bfc1_ref, wc_ref, bc_ref,
               out_ref, p_scr, y2_scr, y3_scr, h_scr):
        # Hoist small broadcast-style reads out of the per-image loop.
        b1 = b1_ref[...]
        b2 = b2_ref[...]
        b3 = b3_ref[...]
        re = re_ref[...]
        ro = ro_ref[...]
        se = se_ref[...]
        so = so_ref[...]
        bfc1 = bfc1_ref[...]

        for b in range(NB):                                    # static unroll
            # conv1 + relu (row windows read straight from the input block)
            y1 = conv_from(lambda i, oh: x_ref[b, i:i + oh, :],
                           c1_ref, b1, S1)                     # [S1, LANE]

            # 2x2 max-pool via exact 0/1 selection matmuls + elementwise max
            rp = jnp.maximum(
                jnp.dot(re, y1, preferred_element_type=f32),
                jnp.dot(ro, y1, preferred_element_type=f32))       # rows
            p_scr[b] = jnp.maximum(
                jnp.dot(rp, se, preferred_element_type=f32),
                jnp.dot(rp, so, preferred_element_type=f32))       # cols

            # conv2 + relu, conv3 + relu (activations stay in VMEM scratch)
            y2_scr[b] = conv_from(lambda i, oh: p_scr[b, i:i + oh, :],
                                  c2_ref, b2, S2)              # [S2, LANE]
            y3_scr[b] = conv_from(lambda i, oh: y2_scr[b, i:i + oh, :],
                                  c3_ref, b3, S3)              # [S3, LANE]

            # fc1 (PyTorch NCHW flatten folded into permuted weights)
            h = bfc1                                           # [1, HID]
            for r in range(S3):
                h = h + jnp.dot(y3_scr[b, r:r + 1, :].astype(bf16),
                                w1p_ref[r], preferred_element_type=f32)
            h_scr[b:b + 1, :] = h

        # classifier for all NB images at once -> one dense [NB, LANE] store
        out_ref[...] = (jnp.dot(h_scr[...].astype(bf16), wc_ref[...],
                                preferred_element_type=f32) + bc_ref[...])

    return kernel


# ----------------------------------------------------------------------------
# Parameter construction / repacking (host-side, done once)
# ----------------------------------------------------------------------------
def init_params(key, input_size):
    """Deterministic synthetic parameters with the PyTorch module's shapes."""
    s = ((input_size - 2) // 2) - 4
    feature_dim = 3 * s * s
    ks = jax.random.split(key, 10)

    def n(k, shape, scale=0.1):
        return scale * jax.random.normal(k, shape, dtype=jnp.float32)

    params = {
        "conv1_w": n(ks[0], (5, 3, 3, 3)), "conv1_b": n(ks[1], (5,)),
        "conv2_w": n(ks[2], (7, 5, 3, 3)), "conv2_b": n(ks[3], (7,)),
        "conv3_w": n(ks[4], (3, 7, 3, 3)), "conv3_b": n(ks[5], (3,)),
        "fc1_w": n(ks[6], (HID, feature_dim)), "fc1_b": n(ks[7], (HID,)),
        "cls_w": n(ks[8], (10, HID)), "cls_b": n(ks[9], (10,)),
    }
    return params, feature_dim


def prepare_packed(params, input_size):
    """Repack PyTorch-shaped params into the kernel's banded / selection /
    permuted matrices.  All column widths are zero-padded to LANE=128 so every
    matmul is lane-dense and K-aligned; padding is exact (zeros)."""
    Cin, C1, C2, C3, NCLS = 3, 5, 7, 3, 10
    S0 = input_size
    S1 = S0 - 2          # after conv1
    SP = S1 // 2         # after 2x2 pool
    S2 = SP - 2          # after conv2
    S3 = S2 - 2          # after conv3
    # TODO(synk): input_size=64 (module default) needs S0*Cin=192 > 128 lanes;
    # would require multi-tile width handling.  This script uses input_size=16.
    assert max(S0 * Cin, S1 * C1, S2 * C2, S3 * C3, NCLS) <= LANE, \
        "increase LANE for this input_size"

    def banded(w, out_sp, cin, cout):
        # C_i[(wo+j)*cin+ci, wo*cout+co] = w[co, ci, i, j]
        w = np.asarray(w, np.float32)                       # [cout, cin, 3, 3]
        c = np.zeros((3, LANE, LANE), np.float32)
        for i in range(3):
            for wo in range(out_sp):
                for j in range(3):
                    c[i, (wo + j) * cin:(wo + j) * cin + cin,
                      wo * cout:wo * cout + cout] = w[:, :, i, j].T
        return c

    def bias_row(b, out_sp, cout):
        r = np.zeros((1, LANE), np.float32)
        b = np.asarray(b, np.float32)
        for wo in range(out_sp):
            r[0, wo * cout:wo * cout + cout] = b
        return r

    # 2x2 max-pool selection matrices (exact 0/1)
    p_re = np.zeros((SP, S1), np.float32)
    p_ro = np.zeros((SP, S1), np.float32)
    for h in range(SP):
        p_re[h, 2 * h] = 1.0
        p_ro[h, 2 * h + 1] = 1.0
    se = np.zeros((LANE, LANE), np.float32)
    so = np.zeros((LANE, LANE), np.float32)
    for w in range(SP):
        for c in range(C1):
            se[(2 * w) * C1 + c, w * C1 + c] = 1.0
            so[(2 * w + 1) * C1 + c, w * C1 + c] = 1.0

    # fc1 with the PyTorch NCHW flatten folded in:
    #   W1p[r, w*C3 + c, o] = fc1_w[o, c*S3*S3 + r*S3 + w]
    fc1_w = np.asarray(params["fc1_w"], np.float32)
    w1p = np.zeros((S3, LANE, HID), np.float32)
    for r in range(S3):
        for w in range(S3):
            for c in range(C3):
                w1p[r, w * C3 + c, :] = fc1_w[:, c * S3 * S3 + r * S3 + w]

    cls_w = np.asarray(params["cls_w"], np.float32)
    wc = np.zeros((HID, LANE), np.float32)
    wc[:, :NCLS] = cls_w.T
    bc = np.zeros((1, LANE), np.float32)
    bc[0, :NCLS] = np.asarray(params["cls_b"], np.float32)

    prep = {
        "c1": jnp.asarray(banded(params["conv1_w"], S1, Cin, C1),
                          dtype=jnp.bfloat16),
        "b1": jnp.asarray(bias_row(params["conv1_b"], S1, C1)),
        "re": jnp.asarray(p_re), "ro": jnp.asarray(p_ro),
        "se": jnp.asarray(se), "so": jnp.asarray(so),
        "c2": jnp.asarray(banded(params["conv2_w"], S2, C1, C2),
                          dtype=jnp.bfloat16),
        "b2": jnp.asarray(bias_row(params["conv2_b"], S2, C2)),
        "c3": jnp.asarray(banded(params["conv3_w"], S3, C2, C3),
                          dtype=jnp.bfloat16),
        "b3": jnp.asarray(bias_row(params["conv3_b"], S3, C3)),
        "w1p": jnp.asarray(w1p, dtype=jnp.bfloat16),
        "bfc1": jnp.asarray(np.asarray(params["fc1_b"], np.float32)[None, :]),
        "wc": jnp.asarray(wc, dtype=jnp.bfloat16),
        "bc": jnp.asarray(bc),
    }
    dims = dict(S0=S0, S1=S1, SP=SP, S2=S2, S3=S3)
    return prep, dims


# ----------------------------------------------------------------------------
# Wrapper: single fused pallas_call over a batch-blocked grid
# ----------------------------------------------------------------------------
def cnn_forward(x_nchw, prep, dims, images_per_step=8):
    N, Cin = x_nchw.shape[0], x_nchw.shape[1]
    S0, S1, SP, S2, S3 = (dims["S0"], dims["S1"], dims["SP"],
                          dims["S2"], dims["S3"])

    NB = min(images_per_step, N)
    Npad = ((N + NB - 1) // NB) * NB

    # NCHW -> [N, H, W*Cin] lane-padded, bf16 (one tiny layout transform)
    x2d = jnp.transpose(x_nchw, (0, 2, 3, 1)).astype(jnp.float32)
    x2d = x2d.reshape(N, S0, S0 * Cin)
    x2d = jnp.pad(x2d, ((0, Npad - N), (0, 0), (0, LANE - S0 * Cin)))
    x2d = x2d.astype(jnp.bfloat16)

    kernel = make_fused_kernel(NB, S0, S1, SP, S2, S3)

    def full(shape):
        return pl.BlockSpec(shape, lambda n: (0,) * len(shape))

    in_specs = [
        pl.BlockSpec((NB, S0, LANE), lambda n: (n, 0, 0)),  # x (NB images)
        full((3, LANE, LANE)), full((1, LANE)),             # c1, b1
        full((SP, S1)), full((SP, S1)),                     # pool row sel
        full((LANE, LANE)), full((LANE, LANE)),             # pool col sel
        full((3, LANE, LANE)), full((1, LANE)),             # c2, b2
        full((3, LANE, LANE)), full((1, LANE)),             # c3, b3
        full((S3, LANE, HID)), full((1, HID)),              # fc1 (permuted)
        full((HID, LANE)), full((1, LANE)),                 # classifier
    ]

    macs = Npad * LANE * (3 * (S1 + S2 + S3) * LANE + 2 * SP * (S1 + LANE)
                          + S3 * HID + HID)
    bytes_accessed = int(x2d.size * x2d.dtype.itemsize + Npad * LANE * 4
                         + sum(int(v.size) * v.dtype.itemsize
                               for v in prep.values()))

    out = pl.pallas_call(
        kernel,
        grid=(Npad // NB,),
        in_specs=in_specs,
        out_specs=pl.BlockSpec((NB, LANE), lambda n: (n, 0)),
        out_shape=jax.ShapeDtypeStruct((Npad, LANE), jnp.float32),
        scratch_shapes=[pltpu.VMEM((NB, SP, LANE), jnp.float32),
                        pltpu.VMEM((NB, S2, LANE), jnp.float32),
                        pltpu.VMEM((NB, S3, LANE), jnp.float32),
                        pltpu.VMEM((NB, HID), jnp.float32)],
        compiler_params=pltpu.CompilerParams(
            dimension_semantics=("parallel",)),
        cost_estimate=pl.CostEstimate(flops=2 * macs, transcendentals=0,
                                      bytes_accessed=bytes_accessed),
    )(x2d, prep["c1"], prep["b1"], prep["re"], prep["ro"], prep["se"],
      prep["so"], prep["c2"], prep["b2"], prep["c3"], prep["b3"],
      prep["w1p"], prep["bfc1"], prep["wc"], prep["bc"])

    return out[:N, :10]


# ----------------------------------------------------------------------------
# Pure-JAX reference (numerical sanity check)
# ----------------------------------------------------------------------------
def reference_forward(x_nchw, params):
    def conv(x, w, b):
        y = jax.lax.conv_general_dilated(
            x, w, window_strides=(1, 1), padding="VALID",
            dimension_numbers=("NCHW", "OIHW", "NCHW"))
        return y + b[None, :, None, None]

    x = x_nchw.astype(jnp.float32)
    y = jax.nn.relu(conv(x, params["conv1_w"], params["conv1_b"]))
    y = jax.lax.reduce_window(y, -jnp.inf, jax.lax.max,
                              (1, 1, 2, 2), (1, 1, 2, 2), "VALID")
    y = jax.nn.relu(conv(y, params["conv2_w"], params["conv2_b"]))
    y = jax.nn.relu(conv(y, params["conv3_w"], params["conv3_b"]))
    feat = y.reshape(y.shape[0], -1)
    h = feat @ params["fc1_w"].T + params["fc1_b"]
    return h @ params["cls_w"].T + params["cls_b"]


# ----------------------------------------------------------------------------
if __name__ == "__main__":
    INPUT_SIZE = 16   # 16 -> conv1 14 -> pool 7 -> conv2 5 -> conv3 3
    BATCH = 2

    root = jax.random.PRNGKey(0)
    k_x, k_p = jax.random.split(root)

    x = jax.random.normal(k_x, (BATCH, 3, INPUT_SIZE, INPUT_SIZE),
                          dtype=jnp.float32)
    params, feature_dim = init_params(k_p, INPUT_SIZE)
    assert feature_dim == 27  # 3 channels * 3 * 3 for INPUT_SIZE=16

    prep, dims = prepare_packed(params, INPUT_SIZE)

    out = jax.block_until_ready(cnn_forward(x, prep, dims))
    assert out.shape == (BATCH, 10)

    ref = jax.block_until_ready(reference_forward(x, params))
    # bf16 MXU operands with f32 accumulation -> loose-ish tolerance
    assert jnp.allclose(out, ref, rtol=2e-2, atol=2e-2), (
        "Pallas output mismatch vs reference")

    print("KERNEL_OK")
</pallas_src>

<mosaic_0001>
module attributes {stable_mosaic.version = 11 : i64} {
  func.func @kernel(%arg0: i32, %arg1: memref<2x16x128xbf16, #tpu.memory_space<vmem>>, %arg2: memref<3x128x128xbf16, #tpu.memory_space<vmem>>, %arg3: memref<1x128xf32, #tpu.memory_space<vmem>>, %arg4: memref<7x14xf32, #tpu.memory_space<vmem>>, %arg5: memref<7x14xf32, #tpu.memory_space<vmem>>, %arg6: memref<128x128xf32, #tpu.memory_space<vmem>>, %arg7: memref<128x128xf32, #tpu.memory_space<vmem>>, %arg8: memref<3x128x128xbf16, #tpu.memory_space<vmem>>, %arg9: memref<1x128xf32, #tpu.memory_space<vmem>>, %arg10: memref<3x128x128xbf16, #tpu.memory_space<vmem>>, %arg11: memref<1x128xf32, #tpu.memory_space<vmem>>, %arg12: memref<3x128x192xbf16, #tpu.memory_space<vmem>>, %arg13: memref<1x192xf32, #tpu.memory_space<vmem>>, %arg14: memref<192x128xbf16, #tpu.memory_space<vmem>>, %arg15: memref<1x128xf32, #tpu.memory_space<vmem>>, %arg16: memref<2x128xf32, #tpu.memory_space<vmem>>, %arg17: memref<2x7x128xf32, #tpu.memory_space<vmem>>, %arg18: memref<2x5x128xf32, #tpu.memory_space<vmem>>, %arg19: memref<2x3x128xf32, #tpu.memory_space<vmem>>, %arg20: memref<2x192xf32, #tpu.memory_space<vmem>>) attributes {dimension_semantics = [#tpu.dimension_semantics<parallel>], iteration_bounds = array<i64: 1>, scalar_prefetch = 0 : i64, scratch_operands = 4 : i64, tpu.core_type = #tpu.core_type<tc>, window_params = [{transform_indices = @transform_0, window_bounds = array<i64: 2, 16, 128>}, {pipeline_mode = #tpu.pipeline_mode<synchronous>, transform_indices = @transform_1, window_bounds = array<i64: 3, 128, 128>}, {pipeline_mode = #tpu.pipeline_mode<synchronous>, transform_indices = @transform_2, window_bounds = array<i64: 1, 128>}, {pipeline_mode = #tpu.pipeline_mode<synchronous>, transform_indices = @transform_3, window_bounds = array<i64: 7, 14>}, {pipeline_mode = #tpu.pipeline_mode<synchronous>, transform_indices = @transform_4, window_bounds = array<i64: 7, 14>}, {pipeline_mode = #tpu.pipeline_mode<synchronous>, transform_indices = @transform_5, window_bounds = array<i64: 128, 128>}, {pipeline_mode = #tpu.pipeline_mode<synchronous>, transform_indices = @transform_6, window_bounds = array<i64: 128, 128>}, {pipeline_mode = #tpu.pipeline_mode<synchronous>, transform_indices = @transform_7, window_bounds = array<i64: 3, 128, 128>}, {pipeline_mode = #tpu.pipeline_mode<synchronous>, transform_indices = @transform_8, window_bounds = array<i64: 1, 128>}, {pipeline_mode = #tpu.pipeline_mode<synchronous>, transform_indices = @transform_9, window_bounds = array<i64: 3, 128, 128>}, {pipeline_mode = #tpu.pipeline_mode<synchronous>, transform_indices = @transform_10, window_bounds = array<i64: 1, 128>}, {pipeline_mode = #tpu.pipeline_mode<synchronous>, transform_indices = @transform_11, window_bounds = array<i64: 3, 128, 192>}, {pipeline_mode = #tpu.pipeline_mode<synchronous>, transform_indices = @transform_12, window_bounds = array<i64: 1, 192>}, {pipeline_mode = #tpu.pipeline_mode<synchronous>, transform_indices = @transform_13, window_bounds = array<i64: 192, 128>}, {pipeline_mode = #tpu.pipeline_mode<synchronous>, transform_indices = @transform_14, window_bounds = array<i64: 1, 128>}, {transform_indices = @transform_15, window_bounds = array<i64: 2, 128>}]} {
    %c0 = arith.constant 0 : index
    %c0_0 = arith.constant 0 : index
    %0 = vector.load %arg3[%c0, %c0_0] : memref<1x128xf32, #tpu.memory_space<vmem>>, vector<1x128xf32>
    %c0_1 = arith.constant 0 : index
    %c0_2 = arith.constant 0 : index
    %1 = vector.load %arg9[%c0_1, %c0_2] : memref<1x128xf32, #tpu.memory_space<vmem>>, vector<1x128xf32>
    %c0_3 = arith.constant 0 : index
    %c0_4 = arith.constant 0 : index
    %2 = vector.load %arg11[%c0_3, %c0_4] : memref<1x128xf32, #tpu.memory_space<vmem>>, vector<1x128xf32>
    %c0_5 = arith.constant 0 : index
    %c0_6 = arith.constant 0 : index
    %3 = vector.load %arg4[%c0_5, %c0_6] : memref<7x14xf32, #tpu.memory_space<vmem>>, vector<7x14xf32>
    %c0_7 = arith.constant 0 : index
    %c0_8 = arith.constant 0 : index
    %4 = vector.load %arg5[%c0_7, %c0_8] : memref<7x14xf32, #tpu.memory_space<vmem>>, vector<7x14xf32>
    %c0_9 = arith.constant 0 : index
    %c0_10 = arith.constant 0 : index
    %5 = vector.load %arg6[%c0_9, %c0_10] : memref<128x128xf32, #tpu.memory_space<vmem>>, vector<128x128xf32>
    %c0_11 = arith.constant 0 : index
    %c0_12 = arith.constant 0 : index
    %6 = vector.load %arg7[%c0_11, %c0_12] : memref<128x128xf32, #tpu.memory_space<vmem>>, vector<128x128xf32>
    %c0_13 = arith.constant 0 : index
    %c0_14 = arith.constant 0 : index
    %7 = vector.load %arg13[%c0_13, %c0_14] : memref<1x192xf32, #tpu.memory_space<vmem>>, vector<1x192xf32>
    %c0_15 = arith.constant 0 : index
    %c0_16 = arith.constant 0 : index
    %c0_17 = arith.constant 0 : index
    %8 = vector.load %arg1[%c0_15, %c0_16, %c0_17] : memref<2x16x128xbf16, #tpu.memory_space<vmem>>, vector<1x14x128xbf16>
    %9 = vector.shape_cast %8 : vector<1x14x128xbf16> to vector<14x128xbf16>
    %c0_18 = arith.constant 0 : index
    %c0_19 = arith.constant 0 : index
    %c0_20 = arith.constant 0 : index
    %10 = vector.load %arg2[%c0_18, %c0_19, %c0_20] : memref<3x128x128xbf16, #tpu.memory_space<vmem>>, vector<1x128x128xbf16>
    %11 = vector.shape_cast %10 : vector<1x128x128xbf16> to vector<128x128xbf16>
    %cst = arith.constant dense<0.000000e+00> : vector<14x128xf32>
    %12 = tpu.matmul %9, %11, %cst {dimension_numbers = #tpu.dot_dimension_numbers<[1], [0], [0], [1], [0, 0, 1, 1], [], []>} : vector<14x128xbf16>, vector<128x128xbf16>, vector<14x128xf32> -> vector<14x128xf32>
    %c0_21 = arith.constant 0 : index
    %c1 = arith.constant 1 : index
    %c0_22 = arith.constant 0 : index
    %13 = vector.load %arg1[%c0_21, %c1, %c0_22] : memref<2x16x128xbf16, #tpu.memory_space<vmem>>, vector<1x14x128xbf16>
    %14 = vector.shape_cast %13 : vector<1x14x128xbf16> to vector<14x128xbf16>
    %c1_23 = arith.constant 1 : index
    %c0_24 = arith.constant 0 : index
    %c0_25 = arith.constant 0 : index
    %15 = vector.load %arg2[%c1_23, %c0_24, %c0_25] : memref<3x128x128xbf16, #tpu.memory_space<vmem>>, vector<1x128x128xbf16>
    %16 = vector.shape_cast %15 : vector<1x128x128xbf16> to vector<128x128xbf16>
    %cst_26 = arith.constant dense<0.000000e+00> : vector<14x128xf32>
    %17 = tpu.matmul %14, %16, %cst_26 {dimension_numbers = #tpu.dot_dimension_numbers<[1], [0], [0], [1], [0, 0, 1, 1], [], []>} : vector<14x128xbf16>, vector<128x128xbf16>, vector<14x128xf32> -> vector<14x128xf32>
    %18 = arith.addf %12, %17 : vector<14x128xf32>
    %c0_27 = arith.constant 0 : index
    %c2 = arith.constant 2 : index
    %c0_28 = arith.constant 0 : index
    %19 = vector.load %arg1[%c0_27, %c2, %c0_28] : memref<2x16x128xbf16, #tpu.memory_space<vmem>>, vector<1x14x128xbf16>
    %20 = vector.shape_cast %19 : vector<1x14x128xbf16> to vector<14x128xbf16>
    %c2_29 = arith.constant 2 : index
    %c0_30 = arith.constant 0 : index
    %c0_31 = arith.constant 0 : index
    %21 = vector.load %arg2[%c2_29, %c0_30, %c0_31] : memref<3x128x128xbf16, #tpu.memory_space<vmem>>, vector<1x128x128xbf16>
    %22 = vector.shape_cast %21 : vector<1x128x128xbf16> to vector<128x128xbf16>
    %cst_32 = arith.constant dense<0.000000e+00> : vector<14x128xf32>
    %23 = tpu.matmul %20, %22, %cst_32 {dimension_numbers = #tpu.dot_dimension_numbers<[1], [0], [0], [1], [0, 0, 1, 1], [], []>} : vector<14x128xbf16>, vector<128x128xbf16>, vector<14x128xf32> -> vector<14x128xf32>
    %24 = arith.addf %18, %23 : vector<14x128xf32>
    %25 = vector.broadcast %0 : vector<1x128xf32> to vector<14x128xf32>
    %26 = arith.addf %24, %25 : vector<14x128xf32>
    %cst_33 = arith.constant 0.000000e+00 : f32
    %27 = vector.broadcast %cst_33 : f32 to vector<14x128xf32>
    %28 = arith.maximumf %26, %27 : vector<14x128xf32>
    %cst_34 = arith.constant dense<0.000000e+00> : vector<7x128xf32>
    %29 = tpu.matmul %3, %28, %cst_34 {dimension_numbers = #tpu.dot_dimension_numbers<[1], [0], [0], [1], [0, 0, 1, 1], [], []>} : vector<7x14xf32>, vector<14x128xf32>, vector<7x128xf32> -> vector<7x128xf32>
    %cst_35 = arith.constant dense<0.000000e+00> : vector<7x128xf32>
    %30 = tpu.matmul %4, %28, %cst_35 {dimension_numbers = #tpu.dot_dimension_numbers<[1], [0], [0], [1], [0, 0, 1, 1], [], []>} : vector<7x14xf32>, vector<14x128xf32>, vector<7x128xf32> -> vector<7x128xf32>
    %31 = arith.maximumf %29, %30 : vector<7x128xf32>
    %cst_36 = arith.constant dense<0.000000e+00> : vector<7x128xf32>
    %32 = tpu.matmul %31, %5, %cst_36 {dimension_numbers = #tpu.dot_dimension_numbers<[1], [0], [0], [1], [0, 0, 1, 1], [], []>} : vector<7x128xf32>, vector<128x128xf32>, vector<7x128xf32> -> vector<7x128xf32>
    %cst_37 = arith.constant dense<0.000000e+00> : vector<7x128xf32>
    %33 = tpu.matmul %31, %6, %cst_37 {dimension_numbers = #tpu.dot_dimension_numbers<[1], [0], [0], [1], [0, 0, 1, 1], [], []>} : vector<7x128xf32>, vector<128x128xf32>, vector<7x128xf32> -> vector<7x128xf32>
    %34 = arith.maximumf %32, %33 : vector<7x128xf32>
    %c0_38 = arith.constant 0 : index
    %c0_39 = arith.constant 0 : index
    %c0_40 = arith.constant 0 : index
    %35 = vector.load %arg17[%c0_38, %c0_39, %c0_40] : memref<2x7x128xf32, #tpu.memory_space<vmem>>, vector<1x7x128xf32>
    %36 = vector.shape_cast %35 : vector<1x7x128xf32> to vector<7x128xf32>
    %37 = vector.shape_cast %34 : vector<7x128xf32> to vector<1x7x128xf32>
    tpu.vector_store %arg17[%c0_38, %c0_39, %c0_40], %37 {strides = array<i32>} : memref<2x7x128xf32, #tpu.memory_space<vmem>>, vector<1x7x128xf32>,
    %c0_41 = arith.constant 0 : index
    %c0_42 = arith.constant 0 : index
    %c0_43 = arith.constant 0 : index
    %38 = vector.load %arg17[%c0_41, %c0_42, %c0_43] : memref<2x7x128xf32, #tpu.memory_space<vmem>>, vector<1x5x128xf32>
    %39 = vector.shape_cast %38 : vector<1x5x128xf32> to vector<5x128xf32>
    %40 = arith.truncf %39 : vector<5x128xf32> to vector<5x128xbf16>
    %c0_44 = arith.constant 0 : index
    %c0_45 = arith.constant 0 : index
    %c0_46 = arith.constant 0 : index
    %41 = vector.load %arg8[%c0_44, %c0_45, %c0_46] : memref<3x128x128xbf16, #tpu.memory_space<vmem>>, vector<1x128x128xbf16>
    %42 = vector.shape_cast %41 : vector<1x128x128xbf16> to vector<128x128xbf16>
    %cst_47 = arith.constant dense<0.000000e+00> : vector<5x128xf32>
    %43 = tpu.matmul %40, %42, %cst_47 {dimension_numbers = #tpu.dot_dimension_numbers<[1], [0], [0], [1], [0, 0, 1, 1], [], []>} : vector<5x128xbf16>, vector<128x128xbf16>, vector<5x128xf32> -> vector<5x128xf32>
    %c0_48 = arith.constant 0 : index
    %c1_49 = arith.constant 1 : index
    %c0_50 = arith.constant 0 : index
    %44 = vector.load %arg17[%c0_48, %c1_49, %c0_50] : memref<2x7x128xf32, #tpu.memory_space<vmem>>, vector<1x5x128xf32>
    %45 = vector.shape_cast %44 : vector<1x5x128xf32> to vector<5x128xf32>
    %46 = arith.truncf %45 : vector<5x128xf32> to vector<5x128xbf16>
    %c1_51 = arith.constant 1 : index
    %c0_52 = arith.constant 0 : index
    %c0_53 = arith.constant 0 : index
    %47 = vector.load %arg8[%c1_51, %c0_52, %c0_53] : memref<3x128x128xbf16, #tpu.memory_space<vmem>>, vector<1x128x128xbf16>
    %48 = vector.shape_cast %47 : vector<1x128x128xbf16> to vector<128x128xbf16>
    %cst_54 = arith.constant dense<0.000000e+00> : vector<5x128xf32>
    %49 = tpu.matmul %46, %48, %cst_54 {dimension_numbers = #tpu.dot_dimension_numbers<[1], [0], [0], [1], [0, 0, 1, 1], [], []>} : vector<5x128xbf16>, vector<128x128xbf16>, vector<5x128xf32> -> vector<5x128xf32>
    %50 = arith.addf %43, %49 : vector<5x128xf32>
    %c0_55 = arith.constant 0 : index
    %c2_56 = arith.constant 2 : index
    %c0_57 = arith.constant 0 : index
    %51 = vector.load %arg17[%c0_55, %c2_56, %c0_57] : memref<2x7x128xf32, #tpu.memory_space<vmem>>, vector<1x5x128xf32>
    %52 = vector.shape_cast %51 : vector<1x5x128xf32> to vector<5x128xf32>
    %53 = arith.truncf %52 : vector<5x128xf32> to vector<5x128xbf16>
    %c2_58 = arith.constant 2 : index
    %c0_59 = arith.constant 0 : index
    %c0_60 = arith.constant 0 : index
    %54 = vector.load %arg8[%c2_58, %c0_59, %c0_60] : memref<3x128x128xbf16, #tpu.memory_space<vmem>>, vector<1x128x128xbf16>
    %55 = vector.shape_cast %54 : vector<1x128x128xbf16> to vector<128x128xbf16>
    %cst_61 = arith.constant dense<0.000000e+00> : vector<5x128xf32>
    %56 = tpu.matmul %53, %55, %cst_61 {dimension_numbers = #tpu.dot_dimension_numbers<[1], [0], [0], [1], [0, 0, 1, 1], [], []>} : vector<5x128xbf16>, vector<128x128xbf16>, vector<5x128xf32> -> vector<5x128xf32>
    %57 = arith.addf %50, %56 : vector<5x128xf32>
    %58 = vector.broadcast %1 : vector<1x128xf32> to vector<5x128xf32>
    %59 = arith.addf %57, %58 : vector<5x128xf32>
    %cst_62 = arith.constant 0.000000e+00 : f32
    %60 = vector.broadcast %cst_62 : f32 to vector<5x128xf32>
    %61 = arith.maximumf %59, %60 : vector<5x128xf32>
    %c0_63 = arith.constant 0 : index
    %c0_64 = arith.constant 0 : index
    %c0_65 = arith.constant 0 : index
    %62 = vector.load %arg18[%c0_63, %c0_64, %c0_65] : memref<2x5x128xf32, #tpu.memory_space<vmem>>, vector<1x5x128xf32>
    %63 = vector.shape_cast %62 : vector<1x5x128xf32> to vector<5x128xf32>
    %64 = vector.shape_cast %61 : vector<5x128xf32> to vector<1x5x128xf32>
    tpu.vector_store %arg18[%c0_63, %c0_64, %c0_65], %64 {strides = array<i32>} : memref<2x5x128xf32, #tpu.memory_space<vmem>>, vector<1x5x128xf32>,
    %c0_66 = arith.constant 0 : index
    %c0_67 = arith.constant 0 : index
    %c0_68 = arith.constant 0 : index
    %65 = vector.load %arg18[%c0_66, %c0_67, %c0_68] : memref<2x5x128xf32, #tpu.memory_space<vmem>>, vector<1x3x128xf32>
    %66 = vector.shape_cast %65 : vector<1x3x128xf32> to vector<3x128xf32>
    %67 = arith.truncf %66 : vector<3x128xf32> to vector<3x128xbf16>
    %c0_69 = arith.constant 0 : index
    %c0_70 = arith.constant 0 : index
    %c0_71 = arith.constant 0 : index
    %68 = vector.load %arg10[%c0_69, %c0_70, %c0_71] : memref<3x128x128xbf16, #tpu.memory_space<vmem>>, vector<1x128x128xbf16>
    %69 = vector.shape_cast %68 : vector<1x128x128xbf16> to vector<128x128xbf16>
    %cst_72 = arith.constant dense<0.000000e+00> : vector<3x128xf32>
    %70 = tpu.matmul %67, %69, %cst_72 {dimension_numbers = #tpu.dot_dimension_numbers<[1], [0], [0], [1], [0, 0, 1, 1], [], []>} : vector<3x128xbf16>, vector<128x128xbf16>, vector<3x128xf32> -> vector<3x128xf32>
    %c0_73 = arith.constant 0 : index
    %c1_74 = arith.constant 1 : index
    %c0_75 = arith.constant 0 : index
    %71 = vector.load %arg18[%c0_73, %c1_74, %c0_75] : memref<2x5x128xf32, #tpu.memory_space<vmem>>, vector<1x3x128xf32>
    %72 = vector.shape_cast %71 : vector<1x3x128xf32> to vector<3x128xf32>
    %73 = arith.truncf %72 : vector<3x128xf32> to vector<3x128xbf16>
    %c1_76 = arith.constant 1 : index
    %c0_77 = arith.constant 0 : index
    %c0_78 = arith.constant 0 : index
    %74 = vector.load %arg10[%c1_76, %c0_77, %c0_78] : memref<3x128x128xbf16, #tpu.memory_space<vmem>>, vector<1x128x128xbf16>
    %75 = vector.shape_cast %74 : vector<1x128x128xbf16> to vector<128x128xbf16>
    %cst_79 = arith.constant dense<0.000000e+00> : vector<3x128xf32>
    %76 = tpu.matmul %73, %75, %cst_79 {dimension_numbers = #tpu.dot_dimension_numbers<[1], [0], [0], [1], [0, 0, 1, 1], [], []>} : vector<3x128xbf16>, vector<128x128xbf16>, vector<3x128xf32> -> vector<3x128xf32>
    %77 = arith.addf %70, %76 : vector<3x128xf32>
    %c0_80 = arith.constant 0 : index
    %c2_81 = arith.constant 2 : index
    %c0_82 = arith.constant 0 : index
    %78 = vector.load %arg18[%c0_80, %c2_81, %c0_82] : memref<2x5x128xf32, #tpu.memory_space<vmem>>, vector<1x3x128xf32>
    %79 = vector.shape_cast %78 : vector<1x3x128xf32> to vector<3x128xf32>
    %80 = arith.truncf %79 : vector<3x128xf32> to vector<3x128xbf16>
    %c2_83 = arith.constant 2 : index
    %c0_84 = arith.constant 0 : index
    %c0_85 = arith.constant 0 : index
    %81 = vector.load %arg10[%c2_83, %c0_84, %c0_85] : memref<3x128x128xbf16, #tpu.memory_space<vmem>>, vector<1x128x128xbf16>
    %82 = vector.shape_cast %81 : vector<1x128x128xbf16> to vector<128x128xbf16>
    %cst_86 = arith.constant dense<0.000000e+00> : vector<3x128xf32>
    %83 = tpu.matmul %80, %82, %cst_86 {dimension_numbers = #tpu.dot_dimension_numbers<[1], [0], [0], [1], [0, 0, 1, 1], [], []>} : vector<3x128xbf16>, vector<128x128xbf16>, vector<3x128xf32> -> vector<3x128xf32>
    %84 = arith.addf %77, %83 : vector<3x128xf32>
    %85 = vector.broadcast %2 : vector<1x128xf32> to vector<3x128xf32>
    %86 = arith.addf %84, %85 : vector<3x128xf32>
    %cst_87 = arith.constant 0.000000e+00 : f32
    %87 = vector.broadcast %cst_87 : f32 to vector<3x128xf32>
    %88 = arith.maximumf %86, %87 : vector<3x128xf32>
    %c0_88 = arith.constant 0 : index
    %c0_89 = arith.constant 0 : index
    %c0_90 = arith.constant 0 : index
    %89 = vector.load %arg19[%c0_88, %c0_89, %c0_90] : memref<2x3x128xf32, #tpu.memory_space<vmem>>, vector<1x3x128xf32>
    %90 = vector.shape_cast %89 : vector<1x3x128xf32> to vector<3x128xf32>
    %91 = vector.shape_cast %88 : vector<3x128xf32> to vector<1x3x128xf32>
    tpu.vector_store %arg19[%c0_88, %c0_89, %c0_90], %91 {strides = array<i32>} : memref<2x3x128xf32, #tpu.memory_space<vmem>>, vector<1x3x128xf32>,
    %c0_91 = arith.constant 0 : index
    %c0_92 = arith.constant 0 : index
    %c0_93 = arith.constant 0 : index
    %92 = vector.load %arg19[%c0_91, %c0_92, %c0_93] : memref<2x3x128xf32, #tpu.memory_space<vmem>>, vector<1x1x128xf32>
    %93 = vector.shape_cast %92 : vector<1x1x128xf32> to vector<1x128xf32>
    %94 = arith.truncf %93 : vector<1x128xf32> to vector<1x128xbf16>
    %c0_94 = arith.constant 0 : index
    %c0_95 = arith.constant 0 : index
    %c0_96 = arith.constant 0 : index
    %95 = vector.load %arg12[%c0_94, %c0_95, %c0_96] : memref<3x128x192xbf16, #tpu.memory_space<vmem>>, vector<1x128x192xbf16>
    %96 = vector.shape_cast %95 : vector<1x128x192xbf16> to vector<128x192xbf16>
    %cst_97 = arith.constant dense<0.000000e+00> : vector<1x192xf32>
    %97 = tpu.matmul %94, %96, %cst_97 {dimension_numbers = #tpu.dot_dimension_numbers<[1], [0], [0], [1], [0, 0, 1, 1], [], []>} : vector<1x128xbf16>, vector<128x192xbf16>, vector<1x192xf32> -> vector<1x192xf32>
    %98 = arith.addf %7, %97 : vector<1x192xf32>
    %c0_98 = arith.constant 0 : index
    %c1_99 = arith.constant 1 : index
    %c0_100 = arith.constant 0 : index
    %99 = vector.load %arg19[%c0_98, %c1_99, %c0_100] : memref<2x3x128xf32, #tpu.memory_space<vmem>>, vector<1x1x128xf32>
    %100 = vector.shape_cast %99 : vector<1x1x128xf32> to vector<1x128xf32>
    %101 = arith.truncf %100 : vector<1x128xf32> to vector<1x128xbf16>
    %c1_101 = arith.constant 1 : index
    %c0_102 = arith.constant 0 : index
    %c0_103 = arith.constant 0 : index
    %102 = vector.load %arg12[%c1_101, %c0_102, %c0_103] : memref<3x128x192xbf16, #tpu.memory_space<vmem>>, vector<1x128x192xbf16>
    %103 = vector.shape_cast %102 : vector<1x128x192xbf16> to vector<128x192xbf16>
    %cst_104 = arith.constant dense<0.000000e+00> : vector<1x192xf32>
    %104 = tpu.matmul %101, %103, %cst_104 {dimension_numbers = #tpu.dot_dimension_numbers<[1], [0], [0], [1], [0, 0, 1, 1], [], []>} : vector<1x128xbf16>, vector<128x192xbf16>, vector<1x192xf32> -> vector<1x192xf32>
    %105 = arith.addf %98, %104 : vector<1x192xf32>
    %c0_105 = arith.constant 0 : index
    %c2_106 = arith.constant 2 : index
    %c0_107 = arith.constant 0 : index
    %106 = vector.load %arg19[%c0_105, %c2_106, %c0_107] : memref<2x3x128xf32, #tpu.memory_space<vmem>>, vector<1x1x128xf32>
    %107 = vector.shape_cast %106 : vector<1x1x128xf32> to vector<1x128xf32>
    %108 = arith.truncf %107 : vector<1x128xf32> to vector<1x128xbf16>
    %c2_108 = arith.constant 2 : index
    %c0_109 = arith.constant 0 : index
    %c0_110 = arith.constant 0 : index
    %109 = vector.load %arg12[%c2_108, %c0_109, %c0_110] : memref<3x128x192xbf16, #tpu.memory_space<vmem>>, vector<1x128x192xbf16>
    %110 = vector.shape_cast %109 : vector<1x128x192xbf16> to vector<128x192xbf16>
    %cst_111 = arith.constant dense<0.000000e+00> : vector<1x192xf32>
    %111 = tpu.matmul %108, %110, %cst_111 {dimension_numbers = #tpu.dot_dimension_numbers<[1], [0], [0], [1], [0, 0, 1, 1], [], []>} : vector<1x128xbf16>, vector<128x192xbf16>, vector<1x192xf32> -> vector<1x192xf32>
    %112 = arith.addf %105, %111 : vector<1x192xf32>
    %c0_112 = arith.constant 0 : index
    %c0_113 = arith.constant 0 : index
    %113 = vector.load %arg20[%c0_112, %c0_113] : memref<2x192xf32, #tpu.memory_space<vmem>>, vector<1x192xf32>
    tpu.vector_store %arg20[%c0_112, %c0_113], %112 {strides = array<i32>} : memref<2x192xf32, #tpu.memory_space<vmem>>, vector<1x192xf32>,
    %c1_114 = arith.constant 1 : index
    %c0_115 = arith.constant 0 : index
    %c0_116 = arith.constant 0 : index
    %114 = vector.load %arg1[%c1_114, %c0_115, %c0_116] : memref<2x16x128xbf16, #tpu.memory_space<vmem>>, vector<1x14x128xbf16>
    %115 = vector.shape_cast %114 : vector<1x14x128xbf16> to vector<14x128xbf16>
    %c0_117 = arith.constant 0 : index
    %c0_118 = arith.constant 0 : index
    %c0_119 = arith.constant 0 : index
    %116 = vector.load %arg2[%c0_117, %c0_118, %c0_119] : memref<3x128x128xbf16, #tpu.memory_space<vmem>>, vector<1x128x128xbf16>
    %117 = vector.shape_cast %116 : vector<1x128x128xbf16> to vector<128x128xbf16>
    %cst_120 = arith.constant dense<0.000000e+00> : vector<14x128xf32>
    %118 = tpu.matmul %115, %117, %cst_120 {dimension_numbers = #tpu.dot_dimension_numbers<[1], [0], [0], [1], [0, 0, 1, 1], [], []>} : vector<14x128xbf16>, vector<128x128xbf16>, vector<14x128xf32> -> vector<14x128xf32>
    %c1_121 = arith.constant 1 : index
    %c1_122 = arith.constant 1 : index
    %c0_123 = arith.constant 0 : index
    %119 = vector.load %arg1[%c1_121, %c1_122, %c0_123] : memref<2x16x128xbf16, #tpu.memory_space<vmem>>, vector<1x14x128xbf16>
    %120 = vector.shape_cast %119 : vector<1x14x128xbf16> to vector<14x128xbf16>
    %c1_124 = arith.constant 1 : index
    %c0_125 = arith.constant 0 : index
    %c0_126 = arith.constant 0 : index
    %121 = vector.load %arg2[%c1_124, %c0_125, %c0_126] : memref<3x128x128xbf16, #tpu.memory_space<vmem>>, vector<1x128x128xbf16>
    %122 = vector.shape_cast %121 : vector<1x128x128xbf16> to vector<128x128xbf16>
    %cst_127 = arith.constant dense<0.000000e+00> : vector<14x128xf32>
    %123 = tpu.matmul %120, %122, %cst_127 {dimension_numbers = #tpu.dot_dimension_numbers<[1], [0], [0], [1], [0, 0, 1, 1], [], []>} : vector<14x128xbf16>, vector<128x128xbf16>, vector<14x128xf32> -> vector<14x128xf32>
    %124 = arith.addf %118, %123 : vector<14x128xf32>
    %c1_128 = arith.constant 1 : index
    %c2_129 = arith.constant 2 : index
    %c0_130 = arith.constant 0 : index
    %125 = vector.load %arg1[%c1_128, %c2_129, %c0_130] : memref<2x16x128xbf16, #tpu.memory_space<vmem>>, vector<1x14x128xbf16>
    %126 = vector.shape_cast %125 : vector<1x14x128xbf16> to vector<14x128xbf16>
    %c2_131 = arith.constant 2 : index
    %c0_132 = arith.constant 0 : index
    %c0_133 = arith.constant 0 : index
    %127 = vector.load %arg2[%c2_131, %c0_132, %c0_133] : memref<3x128x128xbf16, #tpu.memory_space<vmem>>, vector<1x128x128xbf16>
    %128 = vector.shape_cast %127 : vector<1x128x128xbf16> to vector<128x128xbf16>
    %cst_134 = arith.constant dense<0.000000e+00> : vector<14x128xf32>
    %129 = tpu.matmul %126, %128, %cst_134 {dimension_numbers = #tpu.dot_dimension_numbers<[1], [0], [0], [1], [0, 0, 1, 1], [], []>} : vector<14x128xbf16>, vector<128x128xbf16>, vector<14x128xf32> -> vector<14x128xf32>
    %130 = arith.addf %124, %129 : vector<14x128xf32>
    %131 = vector.broadcast %0 : vector<1x128xf32> to vector<14x128xf32>
    %132 = arith.addf %130, %131 : vector<14x128xf32>
    %cst_135 = arith.constant 0.000000e+00 : f32
    %133 = vector.broadcast %cst_135 : f32 to vector<14x128xf32>
    %134 = arith.maximumf %132, %133 : vector<14x128xf32>
    %cst_136 = arith.constant dense<0.000000e+00> : vector<7x128xf32>
    %135 = tpu.matmul %3, %134, %cst_136 {dimension_numbers = #tpu.dot_dimension_numbers<[1], [0], [0], [1], [0, 0, 1, 1], [], []>} : vector<7x14xf32>, vector<14x128xf32>, vector<7x128xf32> -> vector<7x128xf32>
    %cst_137 = arith.constant dense<0.000000e+00> : vector<7x128xf32>
    %136 = tpu.matmul %4, %134, %cst_137 {dimension_numbers = #tpu.dot_dimension_numbers<[1], [0], [0], [1], [0, 0, 1, 1], [], []>} : vector<7x14xf32>, vector<14x128xf32>, vector<7x128xf32> -> vector<7x128xf32>
    %137 = arith.maximumf %135, %136 : vector<7x128xf32>
    %cst_138 = arith.constant dense<0.000000e+00> : vector<7x128xf32>
    %138 = tpu.matmul %137, %5, %cst_138 {dimension_numbers = #tpu.dot_dimension_numbers<[1], [0], [0], [1], [0, 0, 1, 1], [], []>} : vector<7x128xf32>, vector<128x128xf32>, vector<7x128xf32> -> vector<7x128xf32>
    %cst_139 = arith.constant dense<0.000000e+00> : vector<7x128xf32>
    %139 = tpu.matmul %137, %6, %cst_139 {dimension_numbers = #tpu.dot_dimension_numbers<[1], [0], [0], [1], [0, 0, 1, 1], [], []>} : vector<7x128xf32>, vector<128x128xf32>, vector<7x128xf32> -> vector<7x128xf32>
    %140 = arith.maximumf %138, %139 : vector<7x128xf32>
    %c1_140 = arith.constant 1 : index
    %c0_141 = arith.constant 0 : index
    %c0_142 = arith.constant 0 : index
    %141 = vector.load %arg17[%c1_140, %c0_141, %c0_142] : memref<2x7x128xf32, #tpu.memory_space<vmem>>, vector<1x7x128xf32>
    %142 = vector.shape_cast %141 : vector<1x7x128xf32> to vector<7x128xf32>
    %143 = vector.shape_cast %140 : vector<7x128xf32> to vector<1x7x128xf32>
    tpu.vector_store %arg17[%c1_140, %c0_141, %c0_142], %143 {strides = array<i32>} : memref<2x7x128xf32, #tpu.memory_space<vmem>>, vector<1x7x128xf32>,
    %c1_143 = arith.constant 1 : index
    %c0_144 = arith.constant 0 : index
    %c0_145 = arith.constant 0 : index
    %144 = vector.load %arg17[%c1_143, %c0_144, %c0_145] : memref<2x7x128xf32, #tpu.memory_space<vmem>>, vector<1x5x128xf32>
    %145 = vector.shape_cast %144 : vector<1x5x128xf32> to vector<5x128xf32>
    %146 = arith.truncf %145 : vector<5x128xf32> to vector<5x128xbf16>
    %c0_146 = arith.constant 0 : index
    %c0_147 = arith.constant 0 : index
    %c0_148 = arith.constant 0 : index
    %147 = vector.load %arg8[%c0_146, %c0_147, %c0_148] : memref<3x128x128xbf16, #tpu.memory_space<vmem>>, vector<1x128x128xbf16>
    %148 = vector.shape_cast %147 : vector<1x128x128xbf16> to vector<128x128xbf16>
    %cst_149 = arith.constant dense<0.000000e+00> : vector<5x128xf32>
    %149 = tpu.matmul %146, %148, %cst_149 {dimension_numbers = #tpu.dot_dimension_numbers<[1], [0], [0], [1], [0, 0, 1, 1], [], []>} : vector<5x128xbf16>, vector<128x128xbf16>, vector<5x128xf32> -> vector<5x128xf32>
    %c1_150 = arith.constant 1 : index
    %c1_151 = arith.constant 1 : index
    %c0_152 = arith.constant 0 : index
    %150 = vector.load %arg17[%c1_150, %c1_151, %c0_152] : memref<2x7x128xf32, #tpu.memory_space<vmem>>, vector<1x5x128xf32>
    %151 = vector.shape_cast %150 : vector<1x5x128xf32> to vector<5x128xf32>
    %152 = arith.truncf %151 : vector<5x128xf32> to vector<5x128xbf16>
    %c1_153 = arith.constant 1 : index
    %c0_154 = arith.constant 0 : index
    %c0_155 = arith.constant 0 : index
    %153 = vector.load %arg8[%c1_153, %c0_154, %c0_155] : memref<3x128x128xbf16, #tpu.memory_space<vmem>>, vector<1x128x128xbf16>
    %154 = vector.shape_cast %153 : vector<1x128x128xbf16> to vector<128x128xbf16>
    %cst_156 = arith.constant dense<0.000000e+00> : vector<5x128xf32>
    %155 = tpu.matmul %152, %154, %cst_156 {dimension_numbers = #tpu.dot_dimension_numbers<[1], [0], [0], [1], [0, 0, 1, 1], [], []>} : vector<5x128xbf16>, vector<128x128xbf16>, vector<5x128xf32> -> vector<5x128xf32>
    %156 = arith.addf %149, %155 : vector<5x128xf32>
    %c1_157 = arith.constant 1 : index
    %c2_158 = arith.constant 2 : index
    %c0_159 = arith.constant 0 : index
    %157 = vector.load %arg17[%c1_157, %c2_158, %c0_159] : memref<2x7x128xf32, #tpu.memory_space<vmem>>, vector<1x5x128xf32>
    %158 = vector.shape_cast %157 : vector<1x5x128xf32> to vector<5x128xf32>
    %159 = arith.truncf %158 : vector<5x128xf32> to vector<5x128xbf16>
    %c2_160 = arith.constant 2 : index
    %c0_161 = arith.constant 0 : index
    %c0_162 = arith.constant 0 : index
    %160 = vector.load %arg8[%c2_160, %c0_161, %c0_162] : memref<3x128x128xbf16, #tpu.memory_space<vmem>>, vector<1x128x128xbf16>
    %161 = vector.shape_cast %160 : vector<1x128x128xbf16> to vector<128x128xbf16>
    %cst_163 = arith.constant dense<0.000000e+00> : vector<5x128xf32>
    %162 = tpu.matmul %159, %161, %cst_163 {dimension_numbers = #tpu.dot_dimension_numbers<[1], [0], [0], [1], [0, 0, 1, 1], [], []>} : vector<5x128xbf16>, vector<128x128xbf16>, vector<5x128xf32> -> vector<5x128xf32>
    %163 = arith.addf %156, %162 : vector<5x128xf32>
    %164 = vector.broadcast %1 : vector<1x128xf32> to vector<5x128xf32>
    %165 = arith.addf %163, %164 : vector<5x128xf32>
    %cst_164 = arith.constant 0.000000e+00 : f32
    %166 = vector.broadcast %cst_164 : f32 to vector<5x128xf32>
    %167 = arith.maximumf %165, %166 : vector<5x128xf32>
    %c1_165 = arith.constant 1 : index
    %c0_166 = arith.constant 0 : index
    %c0_167 = arith.constant 0 : index
    %168 = vector.load %arg18[%c1_165, %c0_166, %c0_167] : memref<2x5x128xf32, #tpu.memory_space<vmem>>, vector<1x5x128xf32>
    %169 = vector.shape_cast %168 : vector<1x5x128xf32> to vector<5x128xf32>
    %170 = vector.shape_cast %167 : vector<5x128xf32> to vector<1x5x128xf32>
    tpu.vector_store %arg18[%c1_165, %c0_166, %c0_167], %170 {strides = array<i32>} : memref<2x5x128xf32, #tpu.memory_space<vmem>>, vector<1x5x128xf32>,
    %c1_168 = arith.constant 1 : index
    %c0_169 = arith.constant 0 : index
    %c0_170 = arith.constant 0 : index
    %171 = vector.load %arg18[%c1_168, %c0_169, %c0_170] : memref<2x5x128xf32, #tpu.memory_space<vmem>>, vector<1x3x128xf32>
    %172 = vector.shape_cast %171 : vector<1x3x128xf32> to vector<3x128xf32>
    %173 = arith.truncf %172 : vector<3x128xf32> to vector<3x128xbf16>
    %c0_171 = arith.constant 0 : index
    %c0_172 = arith.constant 0 : index
    %c0_173 = arith.constant 0 : index
    %174 = vector.load %arg10[%c0_171, %c0_172, %c0_173] : memref<3x128x128xbf16, #tpu.memory_space<vmem>>, vector<1x128x128xbf16>
    %175 = vector.shape_cast %174 : vector<1x128x128xbf16> to vector<128x128xbf16>
    %cst_174 = arith.constant dense<0.000000e+00> : vector<3x128xf32>
    %176 = tpu.matmul %173, %175, %cst_174 {dimension_numbers = #tpu.dot_dimension_numbers<[1], [0], [0], [1], [0, 0, 1, 1], [], []>} : vector<3x128xbf16>, vector<128x128xbf16>, vector<3x128xf32> -> vector<3x128xf32>
    %c1_175 = arith.constant 1 : index
    %c1_176 = arith.constant 1 : index
    %c0_177 = arith.constant 0 : index
    %177 = vector.load %arg18[%c1_175, %c1_176, %c0_177] : memref<2x5x128xf32, #tpu.memory_space<vmem>>, vector<1x3x128xf32>
    %178 = vector.shape_cast %177 : vector<1x3x128xf32> to vector<3x128xf32>
    %179 = arith.truncf %178 : vector<3x128xf32> to vector<3x128xbf16>
    %c1_178 = arith.constant 1 : index
    %c0_179 = arith.constant 0 : index
    %c0_180 = arith.constant 0 : index
    %180 = vector.load %arg10[%c1_178, %c0_179, %c0_180] : memref<3x128x128xbf16, #tpu.memory_space<vmem>>, vector<1x128x128xbf16>
    %181 = vector.shape_cast %180 : vector<1x128x128xbf16> to vector<128x128xbf16>
    %cst_181 = arith.constant dense<0.000000e+00> : vector<3x128xf32>
    %182 = tpu.matmul %179, %181, %cst_181 {dimension_numbers = #tpu.dot_dimension_numbers<[1], [0], [0], [1], [0, 0, 1, 1], [], []>} : vector<3x128xbf16>, vector<128x128xbf16>, vector<3x128xf32> -> vector<3x128xf32>
    %183 = arith.addf %176, %182 : vector<3x128xf32>
    %c1_182 = arith.constant 1 : index
    %c2_183 = arith.constant 2 : index
    %c0_184 = arith.constant 0 : index
    %184 = vector.load %arg18[%c1_182, %c2_183, %c0_184] : memref<2x5x128xf32, #tpu.memory_space<vmem>>, vector<1x3x128xf32>
    %185 = vector.shape_cast %184 : vector<1x3x128xf32> to vector<3x128xf32>
    %186 = arith.truncf %185 : vector<3x128xf32> to vector<3x128xbf16>
    %c2_185 = arith.constant 2 : index
    %c0_186 = arith.constant 0 : index
    %c0_187 = arith.constant 0 : index
    %187 = vector.load %arg10[%c2_185, %c0_186, %c0_187] : memref<3x128x128xbf16, #tpu.memory_space<vmem>>, vector<1x128x128xbf16>
    %188 = vector.shape_cast %187 : vector<1x128x128xbf16> to vector<128x128xbf16>
    %cst_188 = arith.constant dense<0.000000e+00> : vector<3x128xf32>
    %189 = tpu.matmul %186, %188, %cst_188 {dimension_numbers = #tpu.dot_dimension_numbers<[1], [0], [0], [1], [0, 0, 1, 1], [], []>} : vector<3x128xbf16>, vector<128x128xbf16>, vector<3x128xf32> -> vector<3x128xf32>
    %190 = arith.addf %183, %189 : vector<3x128xf32>
    %191 = vector.broadcast %2 : vector<1x128xf32> to vector<3x128xf32>
    %192 = arith.addf %190, %191 : vector<3x128xf32>
    %cst_189 = arith.constant 0.000000e+00 : f32
    %193 = vector.broadcast %cst_189 : f32 to vector<3x128xf32>
    %194 = arith.maximumf %192, %193 : vector<3x128xf32>
    %c1_190 = arith.constant 1 : index
    %c0_191 = arith.constant 0 : index
    %c0_192 = arith.constant 0 : index
    %195 = vector.load %arg19[%c1_190, %c0_191, %c0_192] : memref<2x3x128xf32, #tpu.memory_space<vmem>>, vector<1x3x128xf32>
    %196 = vector.shape_cast %195 : vector<1x3x128xf32> to vector<3x128xf32>
    %197 = vector.shape_cast %194 : vector<3x128xf32> to vector<1x3x128xf32>
    tpu.vector_store %arg19[%c1_190, %c0_191, %c0_192], %197 {strides = array<i32>} : memref<2x3x128xf32, #tpu.memory_space<vmem>>, vector<1x3x128xf32>,
    %c1_193 = arith.constant 1 : index
    %c0_194 = arith.constant 0 : index
    %c0_195 = arith.constant 0 : index
    %198 = vector.load %arg19[%c1_193, %c0_194, %c0_195] : memref<2x3x128xf32, #tpu.memory_space<vmem>>, vector<1x1x128xf32>
    %199 = vector.shape_cast %198 : vector<1x1x128xf32> to vector<1x128xf32>
    %200 = arith.truncf %199 : vector<1x128xf32> to vector<1x128xbf16>
    %c0_196 = arith.constant 0 : index
    %c0_197 = arith.constant 0 : index
    %c0_198 = arith.constant 0 : index
    %201 = vector.load %arg12[%c0_196, %c0_197, %c0_198] : memref<3x128x192xbf16, #tpu.memory_space<vmem>>, vector<1x128x192xbf16>
    %202 = vector.shape_cast %201 : vector<1x128x192xbf16> to vector<128x192xbf16>
    %cst_199 = arith.constant dense<0.000000e+00> : vector<1x192xf32>
    %203 = tpu.matmul %200, %202, %cst_199 {dimension_numbers = #tpu.dot_dimension_numbers<[1], [0], [0], [1], [0, 0, 1, 1], [], []>} : vector<1x128xbf16>, vector<128x192xbf16>, vector<1x192xf32> -> vector<1x192xf32>
    %204 = arith.addf %7, %203 : vector<1x192xf32>
    %c1_200 = arith.constant 1 : index
    %c1_201 = arith.constant 1 : index
    %c0_202 = arith.constant 0 : index
    %205 = vector.load %arg19[%c1_200, %c1_201, %c0_202] : memref<2x3x128xf32, #tpu.memory_space<vmem>>, vector<1x1x128xf32>
    %206 = vector.shape_cast %205 : vector<1x1x128xf32> to vector<1x128xf32>
    %207 = arith.truncf %206 : vector<1x128xf32> to vector<1x128xbf16>
    %c1_203 = arith.constant 1 : index
    %c0_204 = arith.constant 0 : index
    %c0_205 = arith.constant 0 : index
    %208 = vector.load %arg12[%c1_203, %c0_204, %c0_205] : memref<3x128x192xbf16, #tpu.memory_space<vmem>>, vector<1x128x192xbf16>
    %209 = vector.shape_cast %208 : vector<1x128x192xbf16> to vector<128x192xbf16>
    %cst_206 = arith.constant dense<0.000000e+00> : vector<1x192xf32>
    %210 = tpu.matmul %207, %209, %cst_206 {dimension_numbers = #tpu.dot_dimension_numbers<[1], [0], [0], [1], [0, 0, 1, 1], [], []>} : vector<1x128xbf16>, vector<128x192xbf16>, vector<1x192xf32> -> vector<1x192xf32>
    %211 = arith.addf %204, %210 : vector<1x192xf32>
    %c1_207 = arith.constant 1 : index
    %c2_208 = arith.constant 2 : index
    %c0_209 = arith.constant 0 : index
    %212 = vector.load %arg19[%c1_207, %c2_208, %c0_209] : memref<2x3x128xf32, #tpu.memory_space<vmem>>, vector<1x1x128xf32>
    %213 = vector.shape_cast %212 : vector<1x1x128xf32> to vector<1x128xf32>
    %214 = arith.truncf %213 : vector<1x128xf32> to vector<1x128xbf16>
    %c2_210 = arith.constant 2 : index
    %c0_211 = arith.constant 0 : index
    %c0_212 = arith.constant 0 : index
    %215 = vector.load %arg12[%c2_210, %c0_211, %c0_212] : memref<3x128x192xbf16, #tpu.memory_space<vmem>>, vector<1x128x192xbf16>
    %216 = vector.shape_cast %215 : vector<1x128x192xbf16> to vector<128x192xbf16>
    %cst_213 = arith.constant dense<0.000000e+00> : vector<1x192xf32>
    %217 = tpu.matmul %214, %216, %cst_213 {dimension_numbers = #tpu.dot_dimension_numbers<[1], [0], [0], [1], [0, 0, 1, 1], [], []>} : vector<1x128xbf16>, vector<128x192xbf16>, vector<1x192xf32> -> vector<1x192xf32>
    %218 = arith.addf %211, %217 : vector<1x192xf32>
    %c1_214 = arith.constant 1 : index
    %c0_215 = arith.constant 0 : index
    %219 = vector.load %arg20[%c1_214, %c0_215] : memref<2x192xf32, #tpu.memory_space<vmem>>, vector<1x192xf32>
    tpu.vector_store %arg20[%c1_214, %c0_215], %218 {strides = array<i32>} : memref<2x192xf32, #tpu.memory_space<vmem>>, vector<1x192xf32>,
    %c0_216 = arith.constant 0 : index
    %c0_217 = arith.constant 0 : index
    %220 = vector.load %arg20[%c0_216, %c0_217] : memref<2x192xf32, #tpu.memory_space<vmem>>, vector<2x192xf32>
    %221 = arith.truncf %220 : vector<2x192xf32> to vector<2x192xbf16>
    %c0_218 = arith.constant 0 : index
    %c0_219 = arith.constant 0 : index
    %222 = vector.load %arg14[%c0_218, %c0_219] : memref<192x128xbf16, #tpu.memory_space<vmem>>, vector<192x128xbf16>
    %cst_220 = arith.constant dense<0.000000e+00> : vector<2x128xf32>
    %223 = tpu.matmul %221, %222, %cst_220 {dimension_numbers = #tpu.dot_dimension_numbers<[1], [0], [0], [1], [0, 0, 1, 1], [], []>} : vector<2x192xbf16>, vector<192x128xbf16>, vector<2x128xf32> -> vector<2x128xf32>
    %c0_221 = arith.constant 0 : index
    %c0_222 = arith.constant 0 : index
    %224 = vector.load %arg15[%c0_221, %c0_222] : memref<1x128xf32, #tpu.memory_space<vmem>>, vector<1x128xf32>
    %225 = vector.broadcast %224 : vector<1x128xf32> to vector<2x128xf32>
    %226 = arith.addf %223, %225 : vector<2x128xf32>
    %c0_223 = arith.constant 0 : index
    %c0_224 = arith.constant 0 : index
    %227 = vector.load %arg16[%c0_223, %c0_224] : memref<2x128xf32, #tpu.memory_space<vmem>>, vector<2x128xf32>
    tpu.vector_store %arg16[%c0_223, %c0_224], %226 {strides = array<i32>} : memref<2x128xf32, #tpu.memory_space<vmem>>, vector<2x128xf32>,
    return
  }
  func.func @transform_0(%arg0: i32) -> (i32, i32, i32) {
    %c0_i32 = arith.constant 0 : i32
    %c0_i32_0 = arith.constant 0 : i32
    %c0_i32_1 = arith.constant 0 : i32
    return %arg0, %c0_i32, %c0_i32_0 : i32, i32, i32
  }
  func.func @transform_1(%arg0: i32) -> (i32, i32, i32) {
    %c0_i32 = arith.constant 0 : i32
    %c0_i32_0 = arith.constant 0 : i32
    %c0_i32_1 = arith.constant 0 : i32
    %c0_i32_2 = arith.constant 0 : i32
    return %c0_i32, %c0_i32_0, %c0_i32_1 : i32, i32, i32
  }
  func.func @transform_2(%arg0: i32) -> (i32, i32) {
    %c0_i32 = arith.constant 0 : i32
    %c0_i32_0 = arith.constant 0 : i32
    %c0_i32_1 = arith.constant 0 : i32
    return %c0_i32, %c0_i32_0 : i32, i32
  }
  func.func @transform_3(%arg0: i32) -> (i32, i32) {
    %c0_i32 = arith.constant 0 : i32
    %c0_i32_0 = arith.constant 0 : i32
    %c0_i32_1 = arith.constant 0 : i32
    return %c0_i32, %c0_i32_0 : i32, i32
  }
  func.func @transform_4(%arg0: i32) -> (i32, i32) {
    %c0_i32 = arith.constant 0 : i32
    %c0_i32_0 = arith.constant 0 : i32
    %c0_i32_1 = arith.constant 0 : i32
    return %c0_i32, %c0_i32_0 : i32, i32
  }
  func.func @transform_5(%arg0: i32) -> (i32, i32) {
    %c0_i32 = arith.constant 0 : i32
    %c0_i32_0 = arith.constant 0 : i32
    %c0_i32_1 = arith.constant 0 : i32
    return %c0_i32, %c0_i32_0 : i32, i32
  }
  func.func @transform_6(%arg0: i32) -> (i32, i32) {
    %c0_i32 = arith.constant 0 : i32
    %c0_i32_0 = arith.constant 0 : i32
    %c0_i32_1 = arith.constant 0 : i32
    return %c0_i32, %c0_i32_0 : i32, i32
  }
  func.func @transform_7(%arg0: i32) -> (i32, i32, i32) {
    %c0_i32 = arith.constant 0 : i32
    %c0_i32_0 = arith.constant 0 : i32
    %c0_i32_1 = arith.constant 0 : i32
    %c0_i32_2 = arith.constant 0 : i32
    return %c0_i32, %c0_i32_0, %c0_i32_1 : i32, i32, i32
  }
  func.func @transform_8(%arg0: i32) -> (i32, i32) {
    %c0_i32 = arith.constant 0 : i32
    %c0_i32_0 = arith.constant 0 : i32
    %c0_i32_1 = arith.constant 0 : i32
    return %c0_i32, %c0_i32_0 : i32, i32
  }
  func.func @transform_9(%arg0: i32) -> (i32, i32, i32) {
    %c0_i32 = arith.constant 0 : i32
    %c0_i32_0 = arith.constant 0 : i32
    %c0_i32_1 = arith.constant 0 : i32
    %c0_i32_2 = arith.constant 0 : i32
    return %c0_i32, %c0_i32_0, %c0_i32_1 : i32, i32, i32
  }
  func.func @transform_10(%arg0: i32) -> (i32, i32) {
    %c0_i32 = arith.constant 0 : i32
    %c0_i32_0 = arith.constant 0 : i32
    %c0_i32_1 = arith.constant 0 : i32
    return %c0_i32, %c0_i32_0 : i32, i32
  }
  func.func @transform_11(%arg0: i32) -> (i32, i32, i32) {
    %c0_i32 = arith.constant 0 : i32
    %c0_i32_0 = arith.constant 0 : i32
    %c0_i32_1 = arith.constant 0 : i32
    %c0_i32_2 = arith.constant 0 : i32
    return %c0_i32, %c0_i32_0, %c0_i32_1 : i32, i32, i32
  }
  func.func @transform_12(%arg0: i32) -> (i32, i32) {
    %c0_i32 = arith.constant 0 : i32
    %c0_i32_0 = arith.constant 0 : i32
    %c0_i32_1 = arith.constant 0 : i32
    return %c0_i32, %c0_i32_0 : i32, i32
  }
  func.func @transform_13(%arg0: i32) -> (i32, i32) {
    %c0_i32 = arith.constant 0 : i32
    %c0_i32_0 = arith.constant 0 : i32
    %c0_i32_1 = arith.constant 0 : i32
    return %c0_i32, %c0_i32_0 : i32, i32
  }
  func.func @transform_14(%arg0: i32) -> (i32, i32) {
    %c0_i32 = arith.constant 0 : i32
    %c0_i32_0 = arith.constant 0 : i32
    %c0_i32_1 = arith.constant 0 : i32
    return %c0_i32, %c0_i32_0 : i32, i32
  }
  func.func @transform_15(%arg0: i32) -> (i32, i32) {
    %c0_i32 = arith.constant 0 : i32
    %c0_i32_0 = arith.constant 0 : i32
    return %arg0, %c0_i32 : i32, i32
  }
}

</mosaic_0001>

<llo_original>
// kernel: tpu_custom_call.1
$region0: #{tpu_custom_call.1}
  #allocation0 [shape = 'u32[]', space=smem, size = 0x4, offset = 0x4, fixed_abs, tag = 'smem constant byte address 0x4 - core index']
  #allocation1 [shape = 'u32[144,128]{1,0:T(1,128)}', space=vmem, size = 0x12000, scoped, tag = 'internal scratch']
  #allocation2 [shape = 'f32[2,7,128]{2,1,0:T(8,128)}', space=vmem, size = 0x2000, scoped, tag = 'scratch operand']
  #allocation3 [shape = 'f32[2,5,128]{2,1,0:T(8,128)}', space=vmem, size = 0x2000, scoped, tag = 'scratch operand']
  #allocation4 [shape = 'f32[2,3,128]{2,1,0:T(4,128)}', space=vmem, size = 0x1000, scoped, tag = 'scratch operand']
  #allocation5 [shape = 'f32[2,192]{1,0:T(2,128)}', space=vmem, size = 0x800, scoped, tag = 'scratch operand']
  %s0 = inlined_call_operand.hbm [shape: bf16[2,16,128], index: 0, kind: input, shape index: {}]
  %s1 = inlined_call_operand.vmem [shape: bf16[3,128,128], index: 1, kind: input, shape index: {}]
  %s2 = inlined_call_operand.hbm [shape: f32[1,128], index: 2, kind: input, shape index: {}]
  %s3 = inlined_call_operand.hbm [shape: f32[7,14], index: 3, kind: input, shape index: {}]
  %s4 = inlined_call_operand.hbm [shape: f32[7,14], index: 4, kind: input, shape index: {}]
  %s5 = inlined_call_operand.hbm [shape: f32[128,128], index: 5, kind: input, shape index: {}]
  %s6 = inlined_call_operand.hbm [shape: f32[128,128], index: 6, kind: input, shape index: {}]
  %s7 = inlined_call_operand.vmem [shape: bf16[3,128,128], index: 7, kind: input, shape index: {}]
  %s8 = inlined_call_operand.vmem [shape: f32[1,128], index: 8, kind: input, shape index: {}]
  %s9 = inlined_call_operand.vmem [shape: bf16[3,128,128], index: 9, kind: input, shape index: {}]
  %s10 = inlined_call_operand.vmem [shape: f32[1,128], index: 10, kind: input, shape index: {}]
  %s11 = inlined_call_operand.vmem [shape: bf16[3,128,192], index: 11, kind: input, shape index: {}]
  %s12 = inlined_call_operand.vmem [shape: f32[1,192], index: 12, kind: input, shape index: {}]
  %s13 = inlined_call_operand.vmem [shape: bf16[192,128], index: 13, kind: input, shape index: {}]
  %s14 = inlined_call_operand.vmem [shape: f32[1,128], index: 14, kind: input, shape index: {}]
  %s15 = inlined_call_operand.hbm [shape: f32[2,128], index: 15, kind: output, shape index: {}]
  %s16 = sld [smem:[#allocation0]]
  $region94: #{tpu_custom_call.1} parent=0
    _
  %s18 = ssub.s32 1, %s16
  %s19 = scalar_select 0, %s18, %s16
  $region1: #{tpu_custom_call.1} parent=0
    #allocation6 [shape = 'u8[8192]{0}', space=vmem, size = 0x2000, scoped, tag = 'input window, operand 0, single buffered']
    #allocation7 [shape = 's32[1]{0}', space=sflag, size = 0x4, scoped, tag = 'scoped memory for tpu_custom_call.1']
    #allocation8 [shape = 's32[1]{0}', space=sflag, size = 0x4, scoped, tag = 'scoped memory for tpu_custom_call.1']
    #allocation9 [shape = 'u8[512]{0}', space=vmem, size = 0x400, scoped, tag = 'input window, operand 2, single buffered']
    #allocation10 [shape = 's32[1]{0}', space=sflag, size = 0x4, scoped, tag = 'scoped memory for tpu_custom_call.1']
    #allocation11 [shape = 'u8[4096]{0}', space=vmem, size = 0x1000, scoped, tag = 'input window, operand 3, single buffered']
    #allocation12 [shape = 'u8[4096]{0}', space=vmem, size = 0x1000, scoped, tag = 'input window, operand 4, single buffered']
    #allocation13 [shape = 's32[1]{0}', space=sflag, size = 0x4, scoped, tag = 'scoped memory for tpu_custom_call.1']
    #allocation14 [shape = 'u8[65536]{0}', space=vmem, size = 0x10000, scoped, tag = 'input window, operand 5, single buffered']
    #allocation15 [shape = 'u8[65536]{0}', space=vmem, size = 0x10000, scoped, tag = 'input window, operand 6, single buffered']
    #allocation16 [shape = 's32[1]{0}', space=sflag, size = 0x4, scoped, tag = 'scoped memory for tpu_custom_call.1']
    #allocation17 [shape = 'u8[1024]{0}', space=vmem, size = 0x400, scoped, tag = 'output window, operand 0, single buffered']
    %20 = vsyncpa [#allocation7], 0
    %21 = vsyncpa [#allocation10], 0
    %22 = vsyncpa [#allocation13], 0
    %23 = vsyncpa [#allocation16], 0
    %24 = vsyncpa [#allocation8], 0
    // Predicated region
    $region2: #{tpu_custom_call.1} parent=1 // pred_check
      _
    $region3: #{tpu_custom_call.1} parent=1 // pred_check_branch
      %26 = sbr.rel (0) target = $region5
    $region4: #{tpu_custom_call.1} parent=1 // pred_region
      %s28 = ssub.s32 256, 256
      %29 = vsyncadd [#allocation7], %s28
      %s30 = sshll.u32 [#allocation6], 4
      %s31 = int_to_ptr.vmem [resolvable:$true] %s30
      %36 = dma.hbm_to_vmem [thread:$0]  %s0, 256, %s31, [#allocation7], 64, 64, 4
    $region5: #{tpu_custom_call.1} parent=1 // pred_fallthru
      _
    // Predicated region
    $region6: #{tpu_custom_call.1} parent=1 // pred_check
      _
    $region7: #{tpu_custom_call.1} parent=1 // pred_check_branch
      %38 = sbr.rel (0) target = $region9
    $region8: #{tpu_custom_call.1} parent=1 // pred_region
      _
    $region9: #{tpu_custom_call.1} parent=1 // pred_fallthru
      _
    // Predicated region
    $region10: #{tpu_custom_call.1} parent=1 // pred_check
      _
    $region11: #{tpu_custom_call.1} parent=1 // pred_check_branch
      %40 = sbr.rel (0) target = $region13
    $region12: #{tpu_custom_call.1} parent=1 // pred_region
      %s42 = ssub.s32 16, 16
      %43 = vsyncadd [#allocation10], %s42
      %s45 = sshll.u32 [#allocation9], 4
      %s46 = int_to_ptr.vmem [resolvable:$true] %s45
      %48 = dma.hbm_to_vmem [thread:$0]  %s2, 16, %s46, [#allocation10]
    $region13: #{tpu_custom_call.1} parent=1 // pred_fallthru
      _
    // Predicated region
    $region14: #{tpu_custom_call.1} parent=1 // pred_check
      _
    $region15: #{tpu_custom_call.1} parent=1 // pred_check_branch
      %50 = sbr.rel (0) target = $region17
    $region16: #{tpu_custom_call.1} parent=1 // pred_region
      %s52 = ssub.s32 128, 128
      %53 = vsyncadd [#allocation10], %s52
      %s55 = sshll.u32 [#allocation11], 4
      %s56 = int_to_ptr.vmem [resolvable:$true] %s55
      %58 = dma.hbm_to_vmem [thread:$0]  %s3, 128, %s56, [#allocation10]
    $region17: #{tpu_custom_call.1} parent=1 // pred_fallthru
      _
    // Predicated region
    $region18: #{tpu_custom_call.1} parent=1 // pred_check
      _
    $region19: #{tpu_custom_call.1} parent=1 // pred_check_branch
      %60 = sbr.rel (0) target = $region21
    $region20: #{tpu_custom_call.1} parent=1 // pred_region
      %s62 = ssub.s32 128, 128
      %63 = vsyncadd [#allocation13], %s62
      %s65 = sshll.u32 [#allocation12], 4
      %s66 = int_to_ptr.vmem [resolvable:$true] %s65
      %68 = dma.hbm_to_vmem [thread:$0]  %s4, 128, %s66, [#allocation13]
    $region21: #{tpu_custom_call.1} parent=1 // pred_fallthru
      _
    // Predicated region
    $region22: #{tpu_custom_call.1} parent=1 // pred_check
      _
    $region23: #{tpu_custom_call.1} parent=1 // pred_check_branch
      %70 = sbr.rel (0) target = $region25
    $region24: #{tpu_custom_call.1} parent=1 // pred_region
      %s72 = ssub.s32 2048, 2048
      %73 = vsyncadd [#allocation13], %s72
      %s74 = sshll.u32 [#allocation14], 4
      %s75 = int_to_ptr.vmem [resolvable:$true] %s74
      %80 = dma.hbm_to_vmem [thread:$0]  %s5, 2048, %s75, [#allocation13], 128, 128, 8
    $region25: #{tpu_custom_call.1} parent=1 // pred_fallthru
      _
    // Predicated region
    $region26: #{tpu_custom_call.1} parent=1 // pred_check
      _
    $region27: #{tpu_custom_call.1} parent=1 // pred_check_branch
      %82 = sbr.rel (0) target = $region29
    $region28: #{tpu_custom_call.1} parent=1 // pred_region
      %s84 = ssub.s32 2048, 2048
      %85 = vsyncadd [#allocation16], %s84
      %s86 = sshll.u32 [#allocation15], 4
      %s87 = int_to_ptr.vmem [resolvable:$true] %s86
      %92 = dma.hbm_to_vmem [thread:$0]  %s6, 2048, %s87, [#allocation16], 128, 128, 8
    $region29: #{tpu_custom_call.1} parent=1 // pred_fallthru
      _
    // Predicated region
    $region30: #{tpu_custom_call.1} parent=1 // pred_check
      _
    $region31: #{tpu_custom_call.1} parent=1 // pred_check_branch
      %94 = sbr.rel (0) target = $region33
    $region32: #{tpu_custom_call.1} parent=1 // pred_region
      _
    $region33: #{tpu_custom_call.1} parent=1 // pred_fallthru
      _
    // Predicated region
    $region34: #{tpu_custom_call.1} parent=1 // pred_check
      _
    $region35: #{tpu_custom_call.1} parent=1 // pred_check_branch
      %96 = sbr.rel (0) target = $region37
    $region36: #{tpu_custom_call.1} parent=1 // pred_region
      _
    $region37: #{tpu_custom_call.1} parent=1 // pred_fallthru
      _
    // Predicated region
    $region38: #{tpu_custom_call.1} parent=1 // pred_check
      _
    $region39: #{tpu_custom_call.1} parent=1 // pred_check_branch
      %98 = sbr.rel (0) target = $region41
    $region40: #{tpu_custom_call.1} parent=1 // pred_region
      _
    $region41: #{tpu_custom_call.1} parent=1 // pred_fallthru
      _
    // Predicated region
    $region42: #{tpu_custom_call.1} parent=1 // pred_check
      _
    $region43: #{tpu_custom_call.1} parent=1 // pred_check_branch
      %100 = sbr.rel (0) target = $region45
    $region44: #{tpu_custom_call.1} parent=1 // pred_region
      _
    $region45: #{tpu_custom_call.1} parent=1 // pred_fallthru
      _
    // Predicated region
    $region46: #{tpu_custom_call.1} parent=1 // pred_check
      _
    $region47: #{tpu_custom_call.1} parent=1 // pred_check_branch
      %102 = sbr.rel (0) target = $region49
    $region48: #{tpu_custom_call.1} parent=1 // pred_region
      _
    $region49: #{tpu_custom_call.1} parent=1 // pred_fallthru
      _
    // Predicated region
    $region50: #{tpu_custom_call.1} parent=1 // pred_check
      _
    $region51: #{tpu_custom_call.1} parent=1 // pred_check_branch
      %104 = sbr.rel (0) target = $region53
    $region52: #{tpu_custom_call.1} parent=1 // pred_region
      _
    $region53: #{tpu_custom_call.1} parent=1 // pred_fallthru
      _
    // Predicated region
    $region54: #{tpu_custom_call.1} parent=1 // pred_check
      _
    $region55: #{tpu_custom_call.1} parent=1 // pred_check_branch
      %106 = sbr.rel (0) target = $region57
    $region56: #{tpu_custom_call.1} parent=1 // pred_region
      _
    $region57: #{tpu_custom_call.1} parent=1 // pred_fallthru
      _
    // Predicated region
    $region58: #{tpu_custom_call.1} parent=1 // pred_check
      _
    $region59: #{tpu_custom_call.1} parent=1 // pred_check_branch
      %108 = sbr.rel (0) target = $region61
    $region60: #{tpu_custom_call.1} parent=1 // pred_region
      _
    $region61: #{tpu_custom_call.1} parent=1 // pred_fallthru
      _
    // Predicated region
    $region62: #{tpu_custom_call.1} parent=1 // pred_check
      _
    $region63: #{tpu_custom_call.1} parent=1 // pred_check_branch
      %110 = sbr.rel (0) target = $region65
    $region64: #{tpu_custom_call.1} parent=1 // pred_region
      %111 = dma.done [#allocation7], 256
    $region65: #{tpu_custom_call.1} parent=1 // pred_fallthru
      _
    // Predicated region
    $region66: #{tpu_custom_call.1} parent=1 // pred_check
      _
    $region67: #{tpu_custom_call.1} parent=1 // pred_check_branch
      %113 = sbr.rel (0) target = $region69
    $region68: #{tpu_custom_call.1} parent=1 // pred_region
      %114 = dma.done [#allocation10], 16
    $region69: #{tpu_custom_call.1} parent=1 // pred_fallthru
      _
    // Predicated region
    $region70: #{tpu_custom_call.1} parent=1 // pred_check
      _
    $region71: #{tpu_custom_call.1} parent=1 // pred_check_branch
      %116 = sbr.rel (0) target = $region73
    $region72: #{tpu_custom_call.1} parent=1 // pred_region
      %117 = dma.done [#allocation10], 128
    $region73: #{tpu_custom_call.1} parent=1 // pred_fallthru
      _
    // Predicated region
    $region74: #{tpu_custom_call.1} parent=1 // pred_check
      _
    $region75: #{tpu_custom_call.1} parent=1 // pred_check_branch
      %119 = sbr.rel (0) target = $region77
    $region76: #{tpu_custom_call.1} parent=1 // pred_region
      %120 = dma.done [#allocation13], 128
    $region77: #{tpu_custom_call.1} parent=1 // pred_fallthru
      _
    // Predicated region
    $region78: #{tpu_custom_call.1} parent=1 // pred_check
      _
    $region79: #{tpu_custom_call.1} parent=1 // pred_check_branch
      %122 = sbr.rel (0) target = $region81
    $region80: #{tpu_custom_call.1} parent=1 // pred_region
      %123 = dma.done [#allocation13], 2048
    $region81: #{tpu_custom_call.1} parent=1 // pred_fallthru
      _
    // Predicated region
    $region82: #{tpu_custom_call.1} parent=1 // pred_check
      _
    $region83: #{tpu_custom_call.1} parent=1 // pred_check_branch
      %125 = sbr.rel (0) target = $region85
    $region84: #{tpu_custom_call.1} parent=1 // pred_region
      %126 = dma.done [#allocation16], 2048
    $region85: #{tpu_custom_call.1} parent=1 // pred_fallthru
      _
    %v128 = vld [vmem:[#allocation9] sm:$0x1]
    %v129 = vld [vmem:[%s8] sm:$0x1]
    %v130 = vld [vmem:[%s10] sm:$0x1]
    %v131 = vld [vmem:[#allocation11] sm:$0x7f]
    %v132 = vld [vmem:[#allocation12] sm:$0x7f]
    %v133 = vld [vmem:[#allocation14] sm:$0xff]
    %v134 = vld [vmem:[#allocation14 + $0x8] sm:$0xff]
    %v135 = vld [vmem:[#allocation14 + $0x10] sm:$0xff]
    %v136 = vld [vmem:[#allocation14 + $0x18] sm:$0xff]
    %v137 = vld [vmem:[#allocation14 + $0x20] sm:$0xff]
    %v138 = vld [vmem:[#allocation14 + $0x28] sm:$0xff]
    %v139 = vld [vmem:[#allocation14 + $0x30] sm:$0xff]
    %v140 = vld [vmem:[#allocation14 + $0x38] sm:$0xff]
    %v141 = vld [vmem:[#allocation14 + $0x40] sm:$0xff]
    %v142 = vld [vmem:[#allocation14 + $0x48] sm:$0xff]
    %v143 = vld [vmem:[#allocation14 + $0x50] sm:$0xff]
    %v144 = vld [vmem:[#allocation14 + $0x58] sm:$0xff]
    %v145 = vld [vmem:[#allocation14 + $0x60] sm:$0xff]
    %v146 = vld [vmem:[#allocation14 + $0x68] sm:$0xff]
    %v147 = vld [vmem:[#allocation14 + $0x70] sm:$0xff]
    %v148 = vld [vmem:[#allocation14 + $0x78] sm:$0xff]
    %v149 = vld [vmem:[#allocation15] sm:$0xff]
    %v150 = vld [vmem:[#allocation15 + $0x8] sm:$0xff]
    %v151 = vld [vmem:[#allocation15 + $0x10] sm:$0xff]
    %v152 = vld [vmem:[#allocation15 + $0x18] sm:$0xff]
    %v153 = vld [vmem:[#allocation15 + $0x20] sm:$0xff]
    %v154 = vld [vmem:[#allocation15 + $0x28] sm:$0xff]
    %v155 = vld [vmem:[#allocation15 + $0x30] sm:$0xff]
    %v156 = vld [vmem:[#allocation15 + $0x38] sm:$0xff]
    %v157 = vld [vmem:[#allocation15 + $0x40] sm:$0xff]
    %v158 = vld [vmem:[#allocation15 + $0x48] sm:$0xff]
    %v159 = vld [vmem:[#allocation15 + $0x50] sm:$0xff]
    %v160 = vld [vmem:[#allocation15 + $0x58] sm:$0xff]
    %v161 = vld [vmem:[#allocation15 + $0x60] sm:$0xff]
    %v162 = vld [vmem:[#allocation15 + $0x68] sm:$0xff]
    %v163 = vld [vmem:[#allocation15 + $0x70] sm:$0xff]
    %v164 = vld [vmem:[#allocation15 + $0x78] sm:$0xff]
    %v165 = vld [vmem:[%s12] sm:$0x3]
    %v166 = vld [vmem:[#allocation6] sm:$0xf]
    %v167 = vld [vmem:[#allocation6 + $0x4] sm:$0x7]
    %v168 = vld [vmem:[%s1] sm:$0xf]
    %v169 = vld [vmem:[%s1 + $0x4] sm:$0xf]
    %v170 = vld [vmem:[%s1 + $0x8] sm:$0xf]
    %v171 = vld [vmem:[%s1 + $0xc] sm:$0xf]
    %v172 = vld [vmem:[%s1 + $0x10] sm:$0xf]
    %v173 = vld [vmem:[%s1 + $0x14] sm:$0xf]
    %v174 = vld [vmem:[%s1 + $0x18] sm:$0xf]
    %v175 = vld [vmem:[%s1 + $0x1c] sm:$0xf]
    %v176 = vld [vmem:[%s1 + $0x20] sm:$0xf]
    %v177 = vld [vmem:[%s1 + $0x24] sm:$0xf]
    %v178 = vld [vmem:[%s1 + $0x28] sm:$0xf]
    %v179 = vld [vmem:[%s1 + $0x2c] sm:$0xf]
    %v180 = vld [vmem:[%s1 + $0x30] sm:$0xf]
    %v181 = vld [vmem:[%s1 + $0x34] sm:$0xf]
    %v182 = vld [vmem:[%s1 + $0x38] sm:$0xf]
    %v183 = vld [vmem:[%s1 + $0x3c] sm:$0xf]
    %v184 = vld [vmem:[#allocation6 + $0x4] sm:$0xf]
    %s185 = scalar_lea.vmem %s1, 64
    %v186 = vld [vmem:[%s185] sm:$0xf]
    %v187 = vld [vmem:[%s185 + $0x4] sm:$0xf]
    %v188 = vld [vmem:[%s185 + $0x8] sm:$0xf]
    %v189 = vld [vmem:[%s185 + $0xc] sm:$0xf]
    %v190 = vld [vmem:[%s185 + $0x10] sm:$0xf]
    %v191 = vld [vmem:[%s185 + $0x14] sm:$0xf]
    %v192 = vld [vmem:[%s185 + $0x18] sm:$0xf]
    %v193 = vld [vmem:[%s185 + $0x1c] sm:$0xf]
    %v194 = vld [vmem:[%s185 + $0x20] sm:$0xf]
    %v195 = vld [vmem:[%s185 + $0x24] sm:$0xf]
    %v196 = vld [vmem:[%s185 + $0x28] sm:$0xf]
    %v197 = vld [vmem:[%s185 + $0x2c] sm:$0xf]
    %v198 = vld [vmem:[%s185 + $0x30] sm:$0xf]
    %v199 = vld [vmem:[%s185 + $0x34] sm:$0xf]
    %v200 = vld [vmem:[%s185 + $0x38] sm:$0xf]
    %v201 = vld [vmem:[%s185 + $0x3c] sm:$0xf]
    %v204 = vunpack.c.l.b16 %v166
    %v205 = vunpack.c.l.b16 %v184
    %v206 = vpack.c.b16 %v205, %v204
    %v208 = vshrl.u32 %v206, 16
    %v210 = vshll.u32 %v206, 16
    %v212 = vrot.slane %v210, 1
    %v213 = vor.u32 %v208, %v212
    %v231 = vunpack.c.l.b16 %v186
    %v232 = vunpack.c.l.b16 %v187
    %v233 = vunpack.c.l.b16 %v188
    %v234 = vunpack.c.l.b16 %v189
    %v235 = vunpack.c.l.b16 %v190
    %v236 = vunpack.c.l.b16 %v191
    %v237 = vunpack.c.l.b16 %v192
    %v238 = vunpack.c.l.b16 %v193
    %v239 = vunpack.c.l.b16 %v194
    %v240 = vunpack.c.l.b16 %v195
    %v241 = vunpack.c.l.b16 %v196
    %v242 = vunpack.c.l.b16 %v197
    %v243 = vunpack.c.l.b16 %v198
    %v244 = vunpack.c.l.b16 %v199
    %v245 = vunpack.c.l.b16 %v200
    %v246 = vunpack.c.l.b16 %v201
    %v247 = vpack.c.b16 %v232, %v231
    %v248 = vpack.c.b16 %v234, %v233
    %v249 = vpack.c.b16 %v236, %v235
    %v250 = vpack.c.b16 %v238, %v237
    %v251 = vpack.c.b16 %v240, %v239
    %v252 = vpack.c.b16 %v242, %v241
    %v253 = vpack.c.b16 %v244, %v243
    %v254 = vpack.c.b16 %v246, %v245
    %263 = vmatprep.subr.bf16.mxu0 0
    %264 = vmatpush1.bf16.msra.mxu0 %v254
    %265 = vmatprep.subr.bf16.mxu0 0
    %266 = vmatpush1.bf16.msra.mxu0 %v253
    %267 = vmatprep.subr.bf16.mxu0 0
    %268 = vmatpush1.bf16.msra.mxu0 %v252
    %269 = vmatprep.subr.bf16.mxu0 0
    %270 = vmatpush1.bf16.msra.mxu0 %v251
    %271 = vmatprep.subr.bf16.mxu0 0
    %272 = vmatpush1.bf16.msra.mxu0 %v250
    %273 = vmatprep.subr.bf16.mxu0 0
    %274 = vmatpush1.bf16.msra.mxu0 %v249
    %275 = vmatprep.subr.bf16.mxu0 0
    %276 = vmatpush1.bf16.msra.mxu0 %v248
    %277 = vmatprep.subr.bf16.mxu0 0
    %278 = vmatpush1.bf16.msra.mxu0 %v247
    %279 = vmatprep.subr.bf16.mxu0 0
    %280 = vmatpush2.bf16.msra.mxu0 0
    %281 = vmatprep.subr.bf16.mxu0 0
    %282 = vmatpush2.bf16.msra.mxu0 0
    %283 = vmatprep.subr.bf16.mxu0 0
    %284 = vmatpush2.bf16.msra.mxu0 0
    %285 = vmatprep.subr.bf16.mxu0 0
    %286 = vmatpush2.bf16.msra.mxu0 0
    %287 = vmatprep.subr.bf16.mxu0 0
    %288 = vmatpush2.bf16.msra.mxu0 0
    %289 = vmatprep.subr.bf16.mxu0 0
    %290 = vmatpush2.bf16.msra.mxu0 0
    %291 = vmatprep.subr.bf16.mxu0 0
    %292 = vmatpush2.bf16.msra.mxu0 0
    %293 = vmatprep.subr.bf16.mxu0 0
    %294 = vmatpush2.bf16.msra.mxu0 0
    %295 = vmatprep.mubr.bf16.mxu0 0
    %296 = vmatmul.mubr.bf16.gmra.mxu0 %v213
    %v297 = vpop.f32.mrf.mxu0
    %v298 = vadd.f32 0.0, %v297
    %v299 = vpop.f32.mrf.mxu0
    %v300 = vpop.f32.mrf.mxu0
    %v301 = vadd.f32 0.0, %v300
    %v302 = vpop.f32.mrf.mxu0
    %303 = vdwg.mxu0
    %v305 = vunpack.c.l.b16 %v167
    %v306 = vpack.c.b16 %v305, %v204
    %v324 = vunpack.c.l.b16 %v168
    %v325 = vunpack.c.l.b16 %v169
    %v326 = vunpack.c.l.b16 %v170
    %v327 = vunpack.c.l.b16 %v171
    %v328 = vunpack.c.l.b16 %v172
    %v329 = vunpack.c.l.b16 %v173
    %v330 = vunpack.c.l.b16 %v174
    %v331 = vunpack.c.l.b16 %v175
    %v332 = vunpack.c.l.b16 %v176
    %v333 = vunpack.c.l.b16 %v177
    %v334 = vunpack.c.l.b16 %v178
    %v335 = vunpack.c.l.b16 %v179
    %v336 = vunpack.c.l.b16 %v180
    %v337 = vunpack.c.l.b16 %v181
    %v338 = vunpack.c.l.b16 %v182
    %v339 = vunpack.c.l.b16 %v183
    %v340 = vpack.c.b16 %v325, %v324
    %v341 = vpack.c.b16 %v327, %v326
    %v342 = vpack.c.b16 %v329, %v328
    %v343 = vpack.c.b16 %v331, %v330
    %v344 = vpack.c.b16 %v333, %v332
    %v345 = vpack.c.b16 %v335, %v334
    %v346 = vpack.c.b16 %v337, %v336
    %v347 = vpack.c.b16 %v339, %v338
    %356 = vmatprep.subr.bf16.mxu0 0
    %357 = vmatpush1.bf16.msra.mxu0 %v347
    %358 = vmatprep.subr.bf16.mxu0 0
    %359 = vmatpush1.bf16.msra.mxu0 %v346
    %360 = vmatprep.subr.bf16.mxu0 0
    %361 = vmatpush1.bf16.msra.mxu0 %v345
    %362 = vmatprep.subr.bf16.mxu0 0
    %363 = vmatpush1.bf16.msra.mxu0 %v344
    %364 = vmatprep.subr.bf16.mxu0 0
    %365 = vmatpush1.bf16.msra.mxu0 %v343
    %366 = vmatprep.subr.bf16.mxu0 0
    %367 = vmatpush1.bf16.msra.mxu0 %v342
    %368 = vmatprep.subr.bf16.mxu0 0
    %369 = vmatpush1.bf16.msra.mxu0 %v341
    %370 = vmatprep.subr.bf16.mxu0 0
    %371 = vmatpush1.bf16.msra.mxu0 %v340
    %372 = vmatprep.subr.bf16.mxu0 0
    %373 = vmatpush2.bf16.msra.mxu0 0
    %374 = vmatprep.subr.bf16.mxu0 0
    %375 = vmatpush2.bf16.msra.mxu0 0
    %376 = vmatprep.subr.bf16.mxu0 0
    %377 = vmatpush2.bf16.msra.mxu0 0
    %378 = vmatprep.subr.bf16.mxu0 0
    %379 = vmatpush2.bf16.msra.mxu0 0
    %380 = vmatprep.subr.bf16.mxu0 0
    %381 = vmatpush2.bf16.msra.mxu0 0
    %382 = vmatprep.subr.bf16.mxu0 0
    %383 = vmatpush2.bf16.msra.mxu0 0
    %384 = vmatprep.subr.bf16.mxu0 0
    %385 = vmatpush2.bf16.msra.mxu0 0
    %386 = vmatprep.subr.bf16.mxu0 0
    %387 = vmatpush2.bf16.msra.mxu0 0
    %388 = vmatprep.mubr.bf16.mxu0 0
    %389 = vmatmul.mubr.bf16.gmra.mxu0 %v306
    %v390 = vpop.f32.mrf.mxu0
    %v391 = vadd.f32 %v298, %v390
    %v392 = vpop.f32.mrf.mxu0
    %v393 = vpop.f32.mrf.mxu0
    %v394 = vadd.f32 %v301, %v393
    %v395 = vpop.f32.mrf.mxu0
    %396 = vdwg.mxu0
    %v397 = vld [vmem:[#allocation6] sm:$0xe]
    %s398 = scalar_lea.vmem %s1, 128
    %v399 = vld [vmem:[%s398] sm:$0xf]
    %v400 = vld [vmem:[%s398 + $0x4] sm:$0xf]
    %v401 = vld [vmem:[%s398 + $0x8] sm:$0xf]
    %v402 = vld [vmem:[%s398 + $0xc] sm:$0xf]
    %v403 = vld [vmem:[%s398 + $0x10] sm:$0xf]
    %v404 = vld [vmem:[%s398 + $0x14] sm:$0xf]
    %v405 = vld [vmem:[%s398 + $0x18] sm:$0xf]
    %v406 = vld [vmem:[%s398 + $0x1c] sm:$0xf]
    %v407 = vld [vmem:[%s398 + $0x20] sm:$0xf]
    %v408 = vld [vmem:[%s398 + $0x24] sm:$0xf]
    %v409 = vld [vmem:[%s398 + $0x28] sm:$0xf]
    %v410 = vld [vmem:[%s398 + $0x2c] sm:$0xf]
    %v411 = vld [vmem:[%s398 + $0x30] sm:$0xf]
    %v412 = vld [vmem:[%s398 + $0x34] sm:$0xf]
    %v413 = vld [vmem:[%s398 + $0x38] sm:$0xf]
    %v414 = vld [vmem:[%s398 + $0x3c] sm:$0xf]
    %v416 = vunpack.c.l.b16 %v397
    %v417 = vpack.c.b16 %v205, %v416
    %v418 = vrot.slane %v417, 1
    %v436 = vunpack.c.l.b16 %v399
    %v437 = vunpack.c.l.b16 %v400
    %v438 = vunpack.c.l.b16 %v401
    %v439 = vunpack.c.l.b16 %v402
    %v440 = vunpack.c.l.b16 %v403
    %v441 = vunpack.c.l.b16 %v404
    %v442 = vunpack.c.l.b16 %v405
    %v443 = vunpack.c.l.b16 %v406
    %v444 = vunpack.c.l.b16 %v407
    %v445 = vunpack.c.l.b16 %v408
    %v446 = vunpack.c.l.b16 %v409
    %v447 = vunpack.c.l.b16 %v410
    %v448 = vunpack.c.l.b16 %v411
    %v449 = vunpack.c.l.b16 %v412
    %v450 = vunpack.c.l.b16 %v413
    %v451 = vunpack.c.l.b16 %v414
    %v452 = vpack.c.b16 %v437, %v436
    %v453 = vpack.c.b16 %v439, %v438
    %v454 = vpack.c.b16 %v441, %v440
    %v455 = vpack.c.b16 %v443, %v442
    %v456 = vpack.c.b16 %v445, %v444
    %v457 = vpack.c.b16 %v447, %v446
    %v458 = vpack.c.b16 %v449, %v448
    %v459 = vpack.c.b16 %v451, %v450
    %468 = vmatprep.subr.bf16.mxu0 0
    %469 = vmatpush1.bf16.msra.mxu0 %v459
    %470 = vmatprep.subr.bf16.mxu0 0
    %471 = vmatpush1.bf16.msra.mxu0 %v458
    %472 = vmatprep.subr.bf16.mxu0 0
    %473 = vmatpush1.bf16.msra.mxu0 %v457
    %474 = vmatprep.subr.bf16.mxu0 0
    %475 = vmatpush1.bf16.msra.mxu0 %v456
    %476 = vmatprep.subr.bf16.mxu0 0
    %477 = vmatpush1.bf16.msra.mxu0 %v455
    %478 = vmatprep.subr.bf16.mxu0 0
    %479 = vmatpush1.bf16.msra.mxu0 %v454
    %480 = vmatprep.subr.bf16.mxu0 0
    %481 = vmatpush1.bf16.msra.mxu0 %v453
    %482 = vmatprep.subr.bf16.mxu0 0
    %483 = vmatpush1.bf16.msra.mxu0 %v452
    %484 = vmatprep.subr.bf16.mxu0 0
    %485 = vmatpush2.bf16.msra.mxu0 0
    %486 = vmatprep.subr.bf16.mxu0 0
    %487 = vmatpush2.bf16.msra.mxu0 0
    %488 = vmatprep.subr.bf16.mxu0 0
    %489 = vmatpush2.bf16.msra.mxu0 0
    %490 = vmatprep.subr.bf16.mxu0 0
    %491 = vmatpush2.bf16.msra.mxu0 0
    %492 = vmatprep.subr.bf16.mxu0 0
    %493 = vmatpush2.bf16.msra.mxu0 0
    %494 = vmatprep.subr.bf16.mxu0 0
    %495 = vmatpush2.bf16.msra.mxu0 0
    %496 = vmatprep.subr.bf16.mxu0 0
    %497 = vmatpush2.bf16.msra.mxu0 0
    %498 = vmatprep.subr.bf16.mxu0 0
    %499 = vmatpush2.bf16.msra.mxu0 0
    %500 = vmatprep.mubr.bf16.mxu0 0
    %501 = vmatmul.mubr.bf16.gmra.mxu0 %v418
    %v502 = vpop.f32.mrf.mxu0
    %v503 = vadd.f32 0.0, %v502
    %v504 = vpop.f32.mrf.mxu0
    %v505 = vpop.f32.mrf.mxu0
    %v506 = vadd.f32 0.0, %v505
    %v507 = vpop.f32.mrf.mxu0
    %508 = vdwg.mxu0
    %v509 = vadd.f32 %v391, %v503
    %v510 = vadd.f32 %v394, %v506
    %v512 = vlaneseq
    %v513 = vshrl.u32 %v512, 7
    %v514 = vsub.s32 0, %v513
    %v515 = vrot.slane %v128, %v514
    %v517 = vadd.f32 %v509, %v515
    %v518 = vadd.f32 %v510, %v515
    %v519 = vmax.f32 %v517, 0.0
    %v520 = vmax.f32 %v518, 0.0
    %vm521 = vcmask 113664
    %v523 = vsel %vm521, %v131, 0
    %vm525 = vcmask 1045504
    %v527 = vsel %vm525, %v520, 0
    %529 = vmatprep.subr.mxu0 0.0
    %530 = vmatpush1.msra.mxu0 0.0
    %531 = vmatprep.subr.mxu0 0.0
    %532 = vmatpush1.msra.mxu0 0.0
    %533 = vmatprep.subr.mxu0 0.0
    %534 = vmatpush1.msra.mxu0 0.0
    %535 = vmatprep.subr.mxu0 0.0
    %536 = vmatpush1.msra.mxu0 0.0
    %537 = vmatprep.subr.mxu0 0.0
    %538 = vmatpush1.msra.mxu0 0.0
    %539 = vmatprep.subr.mxu0 0.0
    %540 = vmatpush1.msra.mxu0 0.0
    %541 = vmatprep.subr.mxu0 0.0
    %542 = vmatpush1.msra.mxu0 0.0
    %543 = vmatprep.subr.mxu0 0.0
    %544 = vmatpush1.msra.mxu0 0.0
    %545 = vmatprep.subr.mxu0 0.0
    %546 = vmatpush1.msra.mxu0 0.0
    %547 = vmatprep.subr.mxu0 0.0
    %548 = vmatpush1.msra.mxu0 0.0
    %549 = vmatprep.subr.mxu0 0.0
    %550 = vmatpush1.msra.mxu0 0.0
    %551 = vmatprep.subr.mxu0 0.0
    %552 = vmatpush1.msra.mxu0 0.0
    %553 = vmatprep.subr.mxu0 0.0
    %554 = vmatpush1.msra.mxu0 0.0
    %555 = vmatprep.subr.mxu0 0.0
    %556 = vmatpush1.msra.mxu0 0.0
    %557 = vmatprep.subr.mxu0 0.0
    %558 = vmatpush1.msra.mxu0 %v527
    %559 = vmatprep.subr.mxu0 0.0
    %560 = vmatpush1.msra.mxu0 %v519
    %561 = vmatprep.subr.mxu0 0.0
    %562 = vmatpush2.msra.mxu0 0.0
    %563 = vmatprep.subr.mxu0 0.0
    %564 = vmatpush2.msra.mxu0 0.0
    %565 = vmatprep.subr.mxu0 0.0
    %566 = vmatpush2.msra.mxu0 0.0
    %567 = vmatprep.subr.mxu0 0.0
    %568 = vmatpush2.msra.mxu0 0.0
    %569 = vmatprep.subr.mxu0 0.0
    %570 = vmatpush2.msra.mxu0 0.0
    %571 = vmatprep.subr.mxu0 0.0
    %572 = vmatpush2.msra.mxu0 0.0
    %573 = vmatprep.subr.mxu0 0.0
    %574 = vmatpush2.msra.mxu0 0.0
    %575 = vmatprep.subr.mxu0 0.0
    %576 = vmatpush2.msra.mxu0 0.0
    %577 = vmatprep.subr.mxu0 0.0
    %578 = vmatpush2.msra.mxu0 0.0
    %579 = vmatprep.subr.mxu0 0.0
    %580 = vmatpush2.msra.mxu0 0.0
    %581 = vmatprep.subr.mxu0 0.0
    %582 = vmatpush2.msra.mxu0 0.0
    %583 = vmatprep.subr.mxu0 0.0
    %584 = vmatpush2.msra.mxu0 0.0
    %585 = vmatprep.subr.mxu0 0.0
    %586 = vmatpush2.msra.mxu0 0.0
    %587 = vmatprep.subr.mxu0 0.0
    %588 = vmatpush2.msra.mxu0 0.0
    %589 = vmatprep.subr.mxu0 0.0
    %590 = vmatpush2.msra.mxu0 0.0
    %591 = vmatprep.subr.mxu0 0.0
    %592 = vmatpush2.msra.mxu0 0.0
    %593 = vmatprep.mubr.f32.mxu0 0.0
    %594 = vmatmul.mubr.f32.gmra.mxu0 %v523
    %v595 = vpop.f32.mrf.mxu0
    %v596 = vadd.f32 0.0, %v595
    %v597 = vpop.f32.mrf.mxu0
    %598 = vdwg.mxu0
    %v600 = vsel %vm521, %v132, 0
    %602 = vmatprep.subr.mxu0 0.0
    %603 = vmatpush1.msra.mxu0 0.0
    %604 = vmatprep.subr.mxu0 0.0
    %605 = vmatpush1.msra.mxu0 0.0
    %606 = vmatprep.subr.mxu0 0.0
    %607 = vmatpush1.msra.mxu0 0.0
    %608 = vmatprep.subr.mxu0 0.0
    %609 = vmatpush1.msra.mxu0 0.0
    %610 = vmatprep.subr.mxu0 0.0
    %611 = vmatpush1.msra.mxu0 0.0
    %612 = vmatprep.subr.mxu0 0.0
    %613 = vmatpush1.msra.mxu0 0.0
    %614 = vmatprep.subr.mxu0 0.0
    %615 = vmatpush1.msra.mxu0 0.0
    %616 = vmatprep.subr.mxu0 0.0
    %617 = vmatpush1.msra.mxu0 0.0
    %618 = vmatprep.subr.mxu0 0.0
    %619 = vmatpush1.msra.mxu0 0.0
    %620 = vmatprep.subr.mxu0 0.0
    %621 = vmatpush1.msra.mxu0 0.0
    %622 = vmatprep.subr.mxu0 0.0
    %623 = vmatpush1.msra.mxu0 0.0
    %624 = vmatprep.subr.mxu0 0.0
    %625 = vmatpush1.msra.mxu0 0.0
    %626 = vmatprep.subr.mxu0 0.0
    %627 = vmatpush1.msra.mxu0 0.0
    %628 = vmatprep.subr.mxu0 0.0
    %629 = vmatpush1.msra.mxu0 0.0
    %630 = vmatprep.subr.mxu0 0.0
    %631 = vmatpush1.msra.mxu0 %v527
    %632 = vmatprep.subr.mxu0 0.0
    %633 = vmatpush1.msra.mxu0 %v519
    %634 = vmatprep.subr.mxu0 0.0
    %635 = vmatpush2.msra.mxu0 0.0
    %636 = vmatprep.subr.mxu0 0.0
    %637 = vmatpush2.msra.mxu0 0.0
    %638 = vmatprep.subr.mxu0 0.0
    %639 = vmatpush2.msra.mxu0 0.0
    %640 = vmatprep.subr.mxu0 0.0
    %641 = vmatpush2.msra.mxu0 0.0
    %642 = vmatprep.subr.mxu0 0.0
    %643 = vmatpush2.msra.mxu0 0.0
    %644 = vmatprep.subr.mxu0 0.0
    %645 = vmatpush2.msra.mxu0 0.0
    %646 = vmatprep.subr.mxu0 0.0
    %647 = vmatpush2.msra.mxu0 0.0
    %648 = vmatprep.subr.mxu0 0.0
    %649 = vmatpush2.msra.mxu0 0.0
    %650 = vmatprep.subr.mxu0 0.0
    %651 = vmatpush2.msra.mxu0 0.0
    %652 = vmatprep.subr.mxu0 0.0
    %653 = vmatpush2.msra.mxu0 0.0
    %654 = vmatprep.subr.mxu0 0.0
    %655 = vmatpush2.msra.mxu0 0.0
    %656 = vmatprep.subr.mxu0 0.0
    %657 = vmatpush2.msra.mxu0 0.0
    %658 = vmatprep.subr.mxu0 0.0
    %659 = vmatpush2.msra.mxu0 0.0
    %660 = vmatprep.subr.mxu0 0.0
    %661 = vmatpush2.msra.mxu0 0.0
    %662 = vmatprep.subr.mxu0 0.0
    %663 = vmatpush2.msra.mxu0 0.0
    %664 = vmatprep.subr.mxu0 0.0
    %665 = vmatpush2.msra.mxu0 0.0
    %666 = vmatprep.mubr.f32.mxu0 0.0
    %667 = vmatmul.mubr.f32.gmra.mxu0 %v600
    %v668 = vpop.f32.mrf.mxu0
    %v669 = vadd.f32 0.0, %v668
    %v670 = vpop.f32.mrf.mxu0
    %671 = vdwg.mxu0
    %v672 = vmax.f32 %v596, %v669
    %673 = vmatprep.subr.mxu0 0.0
    %674 = vmatpush1.msra.mxu0 %v148
    %675 = vmatprep.subr.mxu0 0.0
    %676 = vmatpush1.msra.mxu0 %v147
    %677 = vmatprep.subr.mxu0 0.0
    %678 = vmatpush1.msra.mxu0 %v146
    %679 = vmatprep.subr.mxu0 0.0
    %680 = vmatpush1.msra.mxu0 %v145
    %681 = vmatprep.subr.mxu0 0.0
    %682 = vmatpush1.msra.mxu0 %v144
    %683 = vmatprep.subr.mxu0 0.0
    %684 = vmatpush1.msra.mxu0 %v143
    %685 = vmatprep.subr.mxu0 0.0
    %686 = vmatpush1.msra.mxu0 %v142
    %687 = vmatprep.subr.mxu0 0.0
    %688 = vmatpush1.msra.mxu0 %v141
    %689 = vmatprep.subr.mxu0 0.0
    %690 = vmatpush1.msra.mxu0 %v140
    %691 = vmatprep.subr.mxu0 0.0
    %692 = vmatpush1.msra.mxu0 %v139
    %693 = vmatprep.subr.mxu0 0.0
    %694 = vmatpush1.msra.mxu0 %v138
    %695 = vmatprep.subr.mxu0 0.0
    %696 = vmatpush1.msra.mxu0 %v137
    %697 = vmatprep.subr.mxu0 0.0
    %698 = vmatpush1.msra.mxu0 %v136
    %699 = vmatprep.subr.mxu0 0.0
    %700 = vmatpush1.msra.mxu0 %v135
    %701 = vmatprep.subr.mxu0 0.0
    %702 = vmatpush1.msra.mxu0 %v134
    %703 = vmatprep.subr.mxu0 0.0
    %704 = vmatpush1.msra.mxu0 %v133
    %705 = vmatprep.subr.mxu0 0.0
    %706 = vmatpush2.msra.mxu0 0.0
    %707 = vmatprep.subr.mxu0 0.0
    %708 = vmatpush2.msra.mxu0 0.0
    %709 = vmatprep.subr.mxu0 0.0
    %710 = vmatpush2.msra.mxu0 0.0
    %711 = vmatprep.subr.mxu0 0.0
    %712 = vmatpush2.msra.mxu0 0.0
    %713 = vmatprep.subr.mxu0 0.0
    %714 = vmatpush2.msra.mxu0 0.0
    %715 = vmatprep.subr.mxu0 0.0
    %716 = vmatpush2.msra.mxu0 0.0
    %717 = vmatprep.subr.mxu0 0.0
    %718 = vmatpush2.msra.mxu0 0.0
    %719 = vmatprep.subr.mxu0 0.0
    %720 = vmatpush2.msra.mxu0 0.0
    %721 = vmatprep.subr.mxu0 0.0
    %722 = vmatpush2.msra.mxu0 0.0
    %723 = vmatprep.subr.mxu0 0.0
    %724 = vmatpush2.msra.mxu0 0.0
    %725 = vmatprep.subr.mxu0 0.0
    %726 = vmatpush2.msra.mxu0 0.0
    %727 = vmatprep.subr.mxu0 0.0
    %728 = vmatpush2.msra.mxu0 0.0
    %729 = vmatprep.subr.mxu0 0.0
    %730 = vmatpush2.msra.mxu0 0.0
    %731 = vmatprep.subr.mxu0 0.0
    %732 = vmatpush2.msra.mxu0 0.0
    %733 = vmatprep.subr.mxu0 0.0
    %734 = vmatpush2.msra.mxu0 0.0
    %735 = vmatprep.subr.mxu0 0.0
    %736 = vmatpush2.msra.mxu0 0.0
    %737 = vmatprep.mubr.f32.mxu0 0.0
    %738 = vmatmul.mubr.f32.gmra.mxu0 %v672
    %v739 = vpop.f32.mrf.mxu0
    %v740 = vadd.f32 0.0, %v739
    %v741 = vpop.f32.mrf.mxu0
    %742 = vdwg.mxu0
    %743 = vmatprep.subr.mxu0 0.0
    %744 = vmatpush1.msra.mxu0 %v164
    %745 = vmatprep.subr.mxu0 0.0
    %746 = vmatpush1.msra.mxu0 %v163
    %747 = vmatprep.subr.mxu0 0.0
    %748 = vmatpush1.msra.mxu0 %v162
    %749 = vmatprep.subr.mxu0 0.0
    %750 = vmatpush1.msra.mxu0 %v161
    %751 = vmatprep.subr.mxu0 0.0
    %752 = vmatpush1.msra.mxu0 %v160
    %753 = vmatprep.subr.mxu0 0.0
    %754 = vmatpush1.msra.mxu0 %v159
    %755 = vmatprep.subr.mxu0 0.0
    %756 = vmatpush1.msra.mxu0 %v158
    %757 = vmatprep.subr.mxu0 0.0
    %758 = vmatpush1.msra.mxu0 %v157
    %759 = vmatprep.subr.mxu0 0.0
    %760 = vmatpush1.msra.mxu0 %v156
    %761 = vmatprep.subr.mxu0 0.0
    %762 = vmatpush1.msra.mxu0 %v155
    %763 = vmatprep.subr.mxu0 0.0
    %764 = vmatpush1.msra.mxu0 %v154
    %765 = vmatprep.subr.mxu0 0.0
    %766 = vmatpush1.msra.mxu0 %v153
    %767 = vmatprep.subr.mxu0 0.0
    %768 = vmatpush1.msra.mxu0 %v152
    %769 = vmatprep.subr.mxu0 0.0
    %770 = vmatpush1.msra.mxu0 %v151
    %771 = vmatprep.subr.mxu0 0.0
    %772 = vmatpush1.msra.mxu0 %v150
    %773 = vmatprep.subr.mxu0 0.0
    %774 = vmatpush1.msra.mxu0 %v149
    %775 = vmatprep.subr.mxu0 0.0
    %776 = vmatpush2.msra.mxu0 0.0
    %777 = vmatprep.subr.mxu0 0.0
    %778 = vmatpush2.msra.mxu0 0.0
    %779 = vmatprep.subr.mxu0 0.0
    %780 = vmatpush2.msra.mxu0 0.0
    %781 = vmatprep.subr.mxu0 0.0
    %782 = vmatpush2.msra.mxu0 0.0
    %783 = vmatprep.subr.mxu0 0.0
    %784 = vmatpush2.msra.mxu0 0.0
    %785 = vmatprep.subr.mxu0 0.0
    %786 = vmatpush2.msra.mxu0 0.0
    %787 = vmatprep.subr.mxu0 0.0
    %788 = vmatpush2.msra.mxu0 0.0
    %789 = vmatprep.subr.mxu0 0.0
    %790 = vmatpush2.msra.mxu0 0.0
    %791 = vmatprep.subr.mxu0 0.0
    %792 = vmatpush2.msra.mxu0 0.0
    %793 = vmatprep.subr.mxu0 0.0
    %794 = vmatpush2.msra.mxu0 0.0
    %795 = vmatprep.subr.mxu0 0.0
    %796 = vmatpush2.msra.mxu0 0.0
    %797 = vmatprep.subr.mxu0 0.0
    %798 = vmatpush2.msra.mxu0 0.0
    %799 = vmatprep.subr.mxu0 0.0
    %800 = vmatpush2.msra.mxu0 0.0
    %801 = vmatprep.subr.mxu0 0.0
    %802 = vmatpush2.msra.mxu0 0.0
    %803 = vmatprep.subr.mxu0 0.0
    %804 = vmatpush2.msra.mxu0 0.0
    %805 = vmatprep.subr.mxu0 0.0
    %806 = vmatpush2.msra.mxu0 0.0
    %807 = vmatprep.mubr.f32.mxu0 0.0
    %808 = vmatmul.mubr.f32.gmra.mxu0 %v672
    %v809 = vpop.f32.mrf.mxu0
    %v810 = vadd.f32 0.0, %v809
    %v811 = vpop.f32.mrf.mxu0
    %812 = vdwg.mxu0
    %v813 = vmax.f32 %v740, %v810
    %814 = vst [vmem:[#allocation2] sm:$0x7f] %v813
    %v815 = vld [vmem:[#allocation2] sm:$0x1f]
    %v816 = vpack.c.bf16 %v815, %v815
    %v817 = vld [vmem:[%s7] sm:$0xf]
    %v818 = vld [vmem:[%s7 + $0x4] sm:$0xf]
    %v819 = vld [vmem:[%s7 + $0x8] sm:$0xf]
    %v820 = vld [vmem:[%s7 + $0xc] sm:$0xf]
    %v821 = vld [vmem:[%s7 + $0x10] sm:$0xf]
    %v822 = vld [vmem:[%s7 + $0x14] sm:$0xf]
    %v823 = vld [vmem:[%s7 + $0x18] sm:$0xf]
    %v824 = vld [vmem:[%s7 + $0x1c] sm:$0xf]
    %v825 = vld [vmem:[%s7 + $0x20] sm:$0xf]
    %v826 = vld [vmem:[%s7 + $0x24] sm:$0xf]
    %v827 = vld [vmem:[%s7 + $0x28] sm:$0xf]
    %v828 = vld [vmem:[%s7 + $0x2c] sm:$0xf]
    %v829 = vld [vmem:[%s7 + $0x30] sm:$0xf]
    %v830 = vld [vmem:[%s7 + $0x34] sm:$0xf]
    %v831 = vld [vmem:[%s7 + $0x38] sm:$0xf]
    %v832 = vld [vmem:[%s7 + $0x3c] sm:$0xf]
    %v833 = vld [vmem:[#allocation2 + $0x1] sm:$0x1f]
    %v834 = vpack.c.bf16 %v833, %v833
    %s835 = scalar_lea.vmem %s7, 64
    %v836 = vld [vmem:[%s835] sm:$0xf]
    %v837 = vld [vmem:[%s835 + $0x4] sm:$0xf]
    %v838 = vld [vmem:[%s835 + $0x8] sm:$0xf]
    %v839 = vld [vmem:[%s835 + $0xc] sm:$0xf]
    %v840 = vld [vmem:[%s835 + $0x10] sm:$0xf]
    %v841 = vld [vmem:[%s835 + $0x14] sm:$0xf]
    %v842 = vld [vmem:[%s835 + $0x18] sm:$0xf]
    %v843 = vld [vmem:[%s835 + $0x1c] sm:$0xf]
    %v844 = vld [vmem:[%s835 + $0x20] sm:$0xf]
    %v845 = vld [vmem:[%s835 + $0x24] sm:$0xf]
    %v846 = vld [vmem:[%s835 + $0x28] sm:$0xf]
    %v847 = vld [vmem:[%s835 + $0x2c] sm:$0xf]
    %v848 = vld [vmem:[%s835 + $0x30] sm:$0xf]
    %v849 = vld [vmem:[%s835 + $0x34] sm:$0xf]
    %v850 = vld [vmem:[%s835 + $0x38] sm:$0xf]
    %v851 = vld [vmem:[%s835 + $0x3c] sm:$0xf]
    %v868 = vunpack.c.l.b16 %v836
    %v869 = vunpack.c.l.b16 %v837
    %v870 = vunpack.c.l.b16 %v838
    %v871 = vunpack.c.l.b16 %v839
    %v872 = vunpack.c.l.b16 %v840
    %v873 = vunpack.c.l.b16 %v841
    %v874 = vunpack.c.l.b16 %v842
    %v875 = vunpack.c.l.b16 %v843
    %v876 = vunpack.c.l.b16 %v844
    %v877 = vunpack.c.l.b16 %v845
    %v878 = vunpack.c.l.b16 %v846
    %v879 = vunpack.c.l.b16 %v847
    %v880 = vunpack.c.l.b16 %v848
    %v881 = vunpack.c.l.b16 %v849
    %v882 = vunpack.c.l.b16 %v850
    %v883 = vunpack.c.l.b16 %v851
    %v884 = vpack.c.b16 %v869, %v868
    %v885 = vpack.c.b16 %v871, %v870
    %v886 = vpack.c.b16 %v873, %v872
    %v887 = vpack.c.b16 %v875, %v874
    %v888 = vpack.c.b16 %v877, %v876
    %v889 = vpack.c.b16 %v879, %v878
    %v890 = vpack.c.b16 %v881, %v880
    %v891 = vpack.c.b16 %v883, %v882
    %900 = vmatprep.subr.bf16.mxu0 0
    %901 = vmatpush1.bf16.msra.mxu0 %v891
    %902 = vmatprep.subr.bf16.mxu0 0
    %903 = vmatpush1.bf16.msra.mxu0 %v890
    %904 = vmatprep.subr.bf16.mxu0 0
    %905 = vmatpush1.bf16.msra.mxu0 %v889
    %906 = vmatprep.subr.bf16.mxu0 0
    %907 = vmatpush1.bf16.msra.mxu0 %v888
    %908 = vmatprep.subr.bf16.mxu0 0
    %909 = vmatpush1.bf16.msra.mxu0 %v887
    %910 = vmatprep.subr.bf16.mxu0 0
    %911 = vmatpush1.bf16.msra.mxu0 %v886
    %912 = vmatprep.subr.bf16.mxu0 0
    %913 = vmatpush1.bf16.msra.mxu0 %v885
    %914 = vmatprep.subr.bf16.mxu0 0
    %915 = vmatpush1.bf16.msra.mxu0 %v884
    %916 = vmatprep.subr.bf16.mxu0 0
    %917 = vmatpush2.bf16.msra.mxu0 0
    %918 = vmatprep.subr.bf16.mxu0 0
    %919 = vmatpush2.bf16.msra.mxu0 0
    %920 = vmatprep.subr.bf16.mxu0 0
    %921 = vmatpush2.bf16.msra.mxu0 0
    %922 = vmatprep.subr.bf16.mxu0 0
    %923 = vmatpush2.bf16.msra.mxu0 0
    %924 = vmatprep.subr.bf16.mxu0 0
    %925 = vmatpush2.bf16.msra.mxu0 0
    %926 = vmatprep.subr.bf16.mxu0 0
    %927 = vmatpush2.bf16.msra.mxu0 0
    %928 = vmatprep.subr.bf16.mxu0 0
    %929 = vmatpush2.bf16.msra.mxu0 0
    %930 = vmatprep.subr.bf16.mxu0 0
    %931 = vmatpush2.bf16.msra.mxu0 0
    %932 = vmatprep.mubr.bf16.mxu0 0
    %933 = vmatmul.mubr.bf16.gmra.mxu0 %v834
    %v934 = vpop.f32.mrf.mxu0
    %v935 = vadd.f32 0.0, %v934
    %v936 = vpop.f32.mrf.mxu0
    %v937 = vpop.f32.mrf.mxu0
    %v938 = vpop.f32.mrf.mxu0
    %939 = vdwg.mxu0
    %v956 = vunpack.c.l.b16 %v817
    %v957 = vunpack.c.l.b16 %v818
    %v958 = vunpack.c.l.b16 %v819
    %v959 = vunpack.c.l.b16 %v820
    %v960 = vunpack.c.l.b16 %v821
    %v961 = vunpack.c.l.b16 %v822
    %v962 = vunpack.c.l.b16 %v823
    %v963 = vunpack.c.l.b16 %v824
    %v964 = vunpack.c.l.b16 %v825
    %v965 = vunpack.c.l.b16 %v826
    %v966 = vunpack.c.l.b16 %v827
    %v967 = vunpack.c.l.b16 %v828
    %v968 = vunpack.c.l.b16 %v829
    %v969 = vunpack.c.l.b16 %v830
    %v970 = vunpack.c.l.b16 %v831
    %v971 = vunpack.c.l.b16 %v832
    %v972 = vpack.c.b16 %v957, %v956
    %v973 = vpack.c.b16 %v959, %v958
    %v974 = vpack.c.b16 %v961, %v960
    %v975 = vpack.c.b16 %v963, %v962
    %v976 = vpack.c.b16 %v965, %v964
    %v977 = vpack.c.b16 %v967, %v966
    %v978 = vpack.c.b16 %v969, %v968
    %v979 = vpack.c.b16 %v971, %v970
    %988 = vmatprep.subr.bf16.mxu0 0
    %989 = vmatpush1.bf16.msra.mxu0 %v979
    %990 = vmatprep.subr.bf16.mxu0 0
    %991 = vmatpush1.bf16.msra.mxu0 %v978
    %992 = vmatprep.subr.bf16.mxu0 0
    %993 = vmatpush1.bf16.msra.mxu0 %v977
    %994 = vmatprep.subr.bf16.mxu0 0
    %995 = vmatpush1.bf16.msra.mxu0 %v976
    %996 = vmatprep.subr.bf16.mxu0 0
    %997 = vmatpush1.bf16.msra.mxu0 %v975
    %998 = vmatprep.subr.bf16.mxu0 0
    %999 = vmatpush1.bf16.msra.mxu0 %v974
    %1000 = vmatprep.subr.bf16.mxu0 0
    %1001 = vmatpush1.bf16.msra.mxu0 %v973
    %1002 = vmatprep.subr.bf16.mxu0 0
    %1003 = vmatpush1.bf16.msra.mxu0 %v972
    %1004 = vmatprep.subr.bf16.mxu0 0
    %1005 = vmatpush2.bf16.msra.mxu0 0
    %1006 = vmatprep.subr.bf16.mxu0 0
    %1007 = vmatpush2.bf16.msra.mxu0 0
    %1008 = vmatprep.subr.bf16.mxu0 0
    %1009 = vmatpush2.bf16.msra.mxu0 0
    %1010 = vmatprep.subr.bf16.mxu0 0
    %1011 = vmatpush2.bf16.msra.mxu0 0
    %1012 = vmatprep.subr.bf16.mxu0 0
    %1013 = vmatpush2.bf16.msra.mxu0 0
    %1014 = vmatprep.subr.bf16.mxu0 0
    %1015 = vmatpush2.bf16.msra.mxu0 0
    %1016 = vmatprep.subr.bf16.mxu0 0
    %1017 = vmatpush2.bf16.msra.mxu0 0
    %1018 = vmatprep.subr.bf16.mxu0 0
    %1019 = vmatpush2.bf16.msra.mxu0 0
    %1020 = vmatprep.mubr.bf16.mxu0 0
    %1021 = vmatmul.mubr.bf16.gmra.mxu0 %v816
    %v1022 = vpop.f32.mrf.mxu0
    %v1023 = vadd.f32 %v935, %v1022
    %v1024 = vpop.f32.mrf.mxu0
    %v1025 = vpop.f32.mrf.mxu0
    %v1026 = vpop.f32.mrf.mxu0
    %1027 = vdwg.mxu0
    %v1028 = vld [vmem:[#allocation2 + $0x2] sm:$0x1f]
    %v1029 = vpack.c.bf16 %v1028, %v1028
    %s1030 = scalar_lea.vmem %s7, 128
    %v1031 = vld [vmem:[%s1030] sm:$0xf]
    %v1032 = vld [vmem:[%s1030 + $0x4] sm:$0xf]
    %v1033 = vld [vmem:[%s1030 + $0x8] sm:$0xf]
    %v1034 = vld [vmem:[%s1030 + $0xc] sm:$0xf]
    %v1035 = vld [vmem:[%s1030 + $0x10] sm:$0xf]
    %v1036 = vld [vmem:[%s1030 + $0x14] sm:$0xf]
    %v1037 = vld [vmem:[%s1030 + $0x18] sm:$0xf]
    %v1038 = vld [vmem:[%s1030 + $0x1c] sm:$0xf]
    %v1039 = vld [vmem:[%s1030 + $0x20] sm:$0xf]
    %v1040 = vld [vmem:[%s1030 + $0x24] sm:$0xf]
    %v1041 = vld [vmem:[%s1030 + $0x28] sm:$0xf]
    %v1042 = vld [vmem:[%s1030 + $0x2c] sm:$0xf]
    %v1043 = vld [vmem:[%s1030 + $0x30] sm:$0xf]
    %v1044 = vld [vmem:[%s1030 + $0x34] sm:$0xf]
    %v1045 = vld [vmem:[%s1030 + $0x38] sm:$0xf]
    %v1046 = vld [vmem:[%s1030 + $0x3c] sm:$0xf]
    %v1063 = vunpack.c.l.b16 %v1031
    %v1064 = vunpack.c.l.b16 %v1032
    %v1065 = vunpack.c.l.b16 %v1033
    %v1066 = vunpack.c.l.b16 %v1034
    %v1067 = vunpack.c.l.b16 %v1035
    %v1068 = vunpack.c.l.b16 %v1036
    %v1069 = vunpack.c.l.b16 %v1037
    %v1070 = vunpack.c.l.b16 %v1038
    %v1071 = vunpack.c.l.b16 %v1039
    %v1072 = vunpack.c.l.b16 %v1040
    %v1073 = vunpack.c.l.b16 %v1041
    %v1074 = vunpack.c.l.b16 %v1042
    %v1075 = vunpack.c.l.b16 %v1043
    %v1076 = vunpack.c.l.b16 %v1044
    %v1077 = vunpack.c.l.b16 %v1045
    %v1078 = vunpack.c.l.b16 %v1046
    %v1079 = vpack.c.b16 %v1064, %v1063
    %v1080 = vpack.c.b16 %v1066, %v1065
    %v1081 = vpack.c.b16 %v1068, %v1067
    %v1082 = vpack.c.b16 %v1070, %v1069
    %v1083 = vpack.c.b16 %v1072, %v1071
    %v1084 = vpack.c.b16 %v1074, %v1073
    %v1085 = vpack.c.b16 %v1076, %v1075
    %v1086 = vpack.c.b16 %v1078, %v1077
    %1095 = vmatprep.subr.bf16.mxu0 0
    %1096 = vmatpush1.bf16.msra.mxu0 %v1086
    %1097 = vmatprep.subr.bf16.mxu0 0
    %1098 = vmatpush1.bf16.msra.mxu0 %v1085
    %1099 = vmatprep.subr.bf16.mxu0 0
    %1100 = vmatpush1.bf16.msra.mxu0 %v1084
    %1101 = vmatprep.subr.bf16.mxu0 0
    %1102 = vmatpush1.bf16.msra.mxu0 %v1083
    %1103 = vmatprep.subr.bf16.mxu0 0
    %1104 = vmatpush1.bf16.msra.mxu0 %v1082
    %1105 = vmatprep.subr.bf16.mxu0 0
    %1106 = vmatpush1.bf16.msra.mxu0 %v1081
    %1107 = vmatprep.subr.bf16.mxu0 0
    %1108 = vmatpush1.bf16.msra.mxu0 %v1080
    %1109 = vmatprep.subr.bf16.mxu0 0
    %1110 = vmatpush1.bf16.msra.mxu0 %v1079
    %1111 = vmatprep.subr.bf16.mxu0 0
    %1112 = vmatpush2.bf16.msra.mxu0 0
    %1113 = vmatprep.subr.bf16.mxu0 0
    %1114 = vmatpush2.bf16.msra.mxu0 0
    %1115 = vmatprep.subr.bf16.mxu0 0
    %1116 = vmatpush2.bf16.msra.mxu0 0
    %1117 = vmatprep.subr.bf16.mxu0 0
    %1118 = vmatpush2.bf16.msra.mxu0 0
    %1119 = vmatprep.subr.bf16.mxu0 0
    %1120 = vmatpush2.bf16.msra.mxu0 0
    %1121 = vmatprep.subr.bf16.mxu0 0
    %1122 = vmatpush2.bf16.msra.mxu0 0
    %1123 = vmatprep.subr.bf16.mxu0 0
    %1124 = vmatpush2.bf16.msra.mxu0 0
    %1125 = vmatprep.subr.bf16.mxu0 0
    %1126 = vmatpush2.bf16.msra.mxu0 0
    %1127 = vmatprep.mubr.bf16.mxu0 0
    %1128 = vmatmul.mubr.bf16.gmra.mxu0 %v1029
    %v1129 = vpop.f32.mrf.mxu0
    %v1130 = vadd.f32 0.0, %v1129
    %v1131 = vpop.f32.mrf.mxu0
    %v1132 = vpop.f32.mrf.mxu0
    %v1133 = vpop.f32.mrf.mxu0
    %1134 = vdwg.mxu0
    %v1135 = vadd.f32 %v1023, %v1130
    %v1137 = vlaneseq
    %v1138 = vshrl.u32 %v1137, 7
    %v1139 = vsub.s32 0, %v1138
    %v1140 = vrot.slane %v129, %v1139
    %v1142 = vadd.f32 %v1135, %v1140
    %v1143 = vmax.f32 %v1142, 0.0
    %1144 = vst [vmem:[#allocation3] sm:$0x1f] %v1143
    %v1145 = vld [vmem:[#allocation3] sm:$0x7]
    %v1146 = vpack.c.bf16 %v1145, %v1145
    %v1147 = vld [vmem:[%s9] sm:$0xf]
    %v1148 = vld [vmem:[%s9 + $0x4] sm:$0xf]
    %v1149 = vld [vmem:[%s9 + $0x8] sm:$0xf]
    %v1150 = vld [vmem:[%s9 + $0xc] sm:$0xf]
    %v1151 = vld [vmem:[%s9 + $0x10] sm:$0xf]
    %v1152 = vld [vmem:[%s9 + $0x14] sm:$0xf]
    %v1153 = vld [vmem:[%s9 + $0x18] sm:$0xf]
    %v1154 = vld [vmem:[%s9 + $0x1c] sm:$0xf]
    %v1155 = vld [vmem:[%s9 + $0x20] sm:$0xf]
    %v1156 = vld [vmem:[%s9 + $0x24] sm:$0xf]
    %v1157 = vld [vmem:[%s9 + $0x28] sm:$0xf]
    %v1158 = vld [vmem:[%s9 + $0x2c] sm:$0xf]
    %v1159 = vld [vmem:[%s9 + $0x30] sm:$0xf]
    %v1160 = vld [vmem:[%s9 + $0x34] sm:$0xf]
    %v1161 = vld [vmem:[%s9 + $0x38] sm:$0xf]
    %v1162 = vld [vmem:[%s9 + $0x3c] sm:$0xf]
    %v1163 = vld [vmem:[#allocation3 + $0x1] sm:$0x7]
    %v1164 = vpack.c.bf16 %v1163, %v1163
    %s1165 = scalar_lea.vmem %s9, 64
    %v1166 = vld [vmem:[%s1165] sm:$0xf]
    %v1167 = vld [vmem:[%s1165 + $0x4] sm:$0xf]
    %v1168 = vld [vmem:[%s1165 + $0x8] sm:$0xf]
    %v1169 = vld [vmem:[%s1165 + $0xc] sm:$0xf]
    %v1170 = vld [vmem:[%s1165 + $0x10] sm:$0xf]
    %v1171 = vld [vmem:[%s1165 + $0x14] sm:$0xf]
    %v1172 = vld [vmem:[%s1165 + $0x18] sm:$0xf]
    %v1173 = vld [vmem:[%s1165 + $0x1c] sm:$0xf]
    %v1174 = vld [vmem:[%s1165 + $0x20] sm:$0xf]
    %v1175 = vld [vmem:[%s1165 + $0x24] sm:$0xf]
    %v1176 = vld [vmem:[%s1165 + $0x28] sm:$0xf]
    %v1177 = vld [vmem:[%s1165 + $0x2c] sm:$0xf]
    %v1178 = vld [vmem:[%s1165 + $0x30] sm:$0xf]
    %v1179 = vld [vmem:[%s1165 + $0x34] sm:$0xf]
    %v1180 = vld [vmem:[%s1165 + $0x38] sm:$0xf]
    %v1181 = vld [vmem:[%s1165 + $0x3c] sm:$0xf]
    %v1198 = vunpack.c.l.b16 %v1166
    %v1199 = vunpack.c.l.b16 %v1167
    %v1200 = vunpack.c.l.b16 %v1168
    %v1201 = vunpack.c.l.b16 %v1169
    %v1202 = vunpack.c.l.b16 %v1170
    %v1203 = vunpack.c.l.b16 %v1171
    %v1204 = vunpack.c.l.b16 %v1172
    %v1205 = vunpack.c.l.b16 %v1173
    %v1206 = vunpack.c.l.b16 %v1174
    %v1207 = vunpack.c.l.b16 %v1175
    %v1208 = vunpack.c.l.b16 %v1176
    %v1209 = vunpack.c.l.b16 %v1177
    %v1210 = vunpack.c.l.b16 %v1178
    %v1211 = vunpack.c.l.b16 %v1179
    %v1212 = vunpack.c.l.b16 %v1180
    %v1213 = vunpack.c.l.b16 %v1181
    %v1214 = vpack.c.b16 %v1199, %v1198
    %v1215 = vpack.c.b16 %v1201, %v1200
    %v1216 = vpack.c.b16 %v1203, %v1202
    %v1217 = vpack.c.b16 %v1205, %v1204
    %v1218 = vpack.c.b16 %v1207, %v1206
    %v1219 = vpack.c.b16 %v1209, %v1208
    %v1220 = vpack.c.b16 %v1211, %v1210
    %v1221 = vpack.c.b16 %v1213, %v1212
    %1230 = vmatprep.subr.bf16.mxu0 0
    %1231 = vmatpush1.bf16.msra.mxu0 %v1221
    %1232 = vmatprep.subr.bf16.mxu0 0
    %1233 = vmatpush1.bf16.msra.mxu0 %v1220
    %1234 = vmatprep.subr.bf16.mxu0 0
    %1235 = vmatpush1.bf16.msra.mxu0 %v1219
    %1236 = vmatprep.subr.bf16.mxu0 0
    %1237 = vmatpush1.bf16.msra.mxu0 %v1218
    %1238 = vmatprep.subr.bf16.mxu0 0
    %1239 = vmatpush1.bf16.msra.mxu0 %v1217
    %1240 = vmatprep.subr.bf16.mxu0 0
    %1241 = vmatpush1.bf16.msra.mxu0 %v1216
    %1242 = vmatprep.subr.bf16.mxu0 0
    %1243 = vmatpush1.bf16.msra.mxu0 %v1215
    %1244 = vmatprep.subr.bf16.mxu0 0
    %1245 = vmatpush1.bf16.msra.mxu0 %v1214
    %1246 = vmatprep.subr.bf16.mxu0 0
    %1247 = vmatpush2.bf16.msra.mxu0 0
    %1248 = vmatprep.subr.bf16.mxu0 0
    %1249 = vmatpush2.bf16.msra.mxu0 0
    %1250 = vmatprep.subr.bf16.mxu0 0
    %1251 = vmatpush2.bf16.msra.mxu0 0
    %1252 = vmatprep.subr.bf16.mxu0 0
    %1253 = vmatpush2.bf16.msra.mxu0 0
    %1254 = vmatprep.subr.bf16.mxu0 0
    %1255 = vmatpush2.bf16.msra.mxu0 0
    %1256 = vmatprep.subr.bf16.mxu0 0
    %1257 = vmatpush2.bf16.msra.mxu0 0
    %1258 = vmatprep.subr.bf16.mxu0 0
    %1259 = vmatpush2.bf16.msra.mxu0 0
    %1260 = vmatprep.subr.bf16.mxu0 0
    %1261 = vmatpush2.bf16.msra.mxu0 0
    %1262 = vmatprep.mubr.bf16.mxu0 0
    %1263 = vmatmul.mubr.bf16.gmra.mxu0 %v1164
    %v1264 = vpop.f32.mrf.mxu0
    %v1265 = vadd.f32 0.0, %v1264
    %v1266 = vpop.f32.mrf.mxu0
    %v1267 = vpop.f32.mrf.mxu0
    %v1268 = vpop.f32.mrf.mxu0
    %1269 = vdwg.mxu0
    %v1286 = vunpack.c.l.b16 %v1147
    %v1287 = vunpack.c.l.b16 %v1148
    %v1288 = vunpack.c.l.b16 %v1149
    %v1289 = vunpack.c.l.b16 %v1150
    %v1290 = vunpack.c.l.b16 %v1151
    %v1291 = vunpack.c.l.b16 %v1152
    %v1292 = vunpack.c.l.b16 %v1153
    %v1293 = vunpack.c.l.b16 %v1154
    %v1294 = vunpack.c.l.b16 %v1155
    %v1295 = vunpack.c.l.b16 %v1156
    %v1296 = vunpack.c.l.b16 %v1157
    %v1297 = vunpack.c.l.b16 %v1158
    %v1298 = vunpack.c.l.b16 %v1159
    %v1299 = vunpack.c.l.b16 %v1160
    %v1300 = vunpack.c.l.b16 %v1161
    %v1301 = vunpack.c.l.b16 %v1162
    %v1302 = vpack.c.b16 %v1287, %v1286
    %v1303 = vpack.c.b16 %v1289, %v1288
    %v1304 = vpack.c.b16 %v1291, %v1290
    %v1305 = vpack.c.b16 %v1293, %v1292
    %v1306 = vpack.c.b16 %v1295, %v1294
    %v1307 = vpack.c.b16 %v1297, %v1296
    %v1308 = vpack.c.b16 %v1299, %v1298
    %v1309 = vpack.c.b16 %v1301, %v1300
    %1318 = vmatprep.subr.bf16.mxu0 0
    %1319 = vmatpush1.bf16.msra.mxu0 %v1309
    %1320 = vmatprep.subr.bf16.mxu0 0
    %1321 = vmatpush1.bf16.msra.mxu0 %v1308
    %1322 = vmatprep.subr.bf16.mxu0 0
    %1323 = vmatpush1.bf16.msra.mxu0 %v1307
    %1324 = vmatprep.subr.bf16.mxu0 0
    %1325 = vmatpush1.bf16.msra.mxu0 %v1306
    %1326 = vmatprep.subr.bf16.mxu0 0
    %1327 = vmatpush1.bf16.msra.mxu0 %v1305
    %1328 = vmatprep.subr.bf16.mxu0 0
    %1329 = vmatpush1.bf16.msra.mxu0 %v1304
    %1330 = vmatprep.subr.bf16.mxu0 0
    %1331 = vmatpush1.bf16.msra.mxu0 %v1303
    %1332 = vmatprep.subr.bf16.mxu0 0
    %1333 = vmatpush1.bf16.msra.mxu0 %v1302
    %1334 = vmatprep.subr.bf16.mxu0 0
    %1335 = vmatpush2.bf16.msra.mxu0 0
    %1336 = vmatprep.subr.bf16.mxu0 0
    %1337 = vmatpush2.bf16.msra.mxu0 0
    %1338 = vmatprep.subr.bf16.mxu0 0
    %1339 = vmatpush2.bf16.msra.mxu0 0
    %1340 = vmatprep.subr.bf16.mxu0 0
    %1341 = vmatpush2.bf16.msra.mxu0 0
    %1342 = vmatprep.subr.bf16.mxu0 0
    %1343 = vmatpush2.bf16.msra.mxu0 0
    %1344 = vmatprep.subr.bf16.mxu0 0
    %1345 = vmatpush2.bf16.msra.mxu0 0
    %1346 = vmatprep.subr.bf16.mxu0 0
    %1347 = vmatpush2.bf16.msra.mxu0 0
    %1348 = vmatprep.subr.bf16.mxu0 0
    %1349 = vmatpush2.bf16.msra.mxu0 0
    %1350 = vmatprep.mubr.bf16.mxu0 0
    %1351 = vmatmul.mubr.bf16.gmra.mxu0 %v1146
    %v1352 = vpop.f32.mrf.mxu0
    %v1353 = vadd.f32 %v1265, %v1352
    %v1354 = vpop.f32.mrf.mxu0
    %v1355 = vpop.f32.mrf.mxu0
    %v1356 = vpop.f32.mrf.mxu0
    %1357 = vdwg.mxu0
    %v1358 = vld [vmem:[#allocation3 + $0x2] sm:$0x7]
    %v1359 = vpack.c.bf16 %v1358, %v1358
    %s1360 = scalar_lea.vmem %s9, 128
    %v1361 = vld [vmem:[%s1360] sm:$0xf]
    %v1362 = vld [vmem:[%s1360 + $0x4] sm:$0xf]
    %v1363 = vld [vmem:[%s1360 + $0x8] sm:$0xf]
    %v1364 = vld [vmem:[%s1360 + $0xc] sm:$0xf]
    %v1365 = vld [vmem:[%s1360 + $0x10] sm:$0xf]
    %v1366 = vld [vmem:[%s1360 + $0x14] sm:$0xf]
    %v1367 = vld [vmem:[%s1360 + $0x18] sm:$0xf]
    %v1368 = vld [vmem:[%s1360 + $0x1c] sm:$0xf]
    %v1369 = vld [vmem:[%s1360 + $0x20] sm:$0xf]
    %v1370 = vld [vmem:[%s1360 + $0x24] sm:$0xf]
    %v1371 = vld [vmem:[%s1360 + $0x28] sm:$0xf]
    %v1372 = vld [vmem:[%s1360 + $0x2c] sm:$0xf]
    %v1373 = vld [vmem:[%s1360 + $0x30] sm:$0xf]
    %v1374 = vld [vmem:[%s1360 + $0x34] sm:$0xf]
    %v1375 = vld [vmem:[%s1360 + $0x38] sm:$0xf]
    %v1376 = vld [vmem:[%s1360 + $0x3c] sm:$0xf]
    %v1393 = vunpack.c.l.b16 %v1361
    %v1394 = vunpack.c.l.b16 %v1362
    %v1395 = vunpack.c.l.b16 %v1363
    %v1396 = vunpack.c.l.b16 %v1364
    %v1397 = vunpack.c.l.b16 %v1365
    %v1398 = vunpack.c.l.b16 %v1366
    %v1399 = vunpack.c.l.b16 %v1367
    %v1400 = vunpack.c.l.b16 %v1368
    %v1401 = vunpack.c.l.b16 %v1369
    %v1402 = vunpack.c.l.b16 %v1370
    %v1403 = vunpack.c.l.b16 %v1371
    %v1404 = vunpack.c.l.b16 %v1372
    %v1405 = vunpack.c.l.b16 %v1373
    %v1406 = vunpack.c.l.b16 %v1374
    %v1407 = vunpack.c.l.b16 %v1375
    %v1408 = vunpack.c.l.b16 %v1376
    %v1409 = vpack.c.b16 %v1394, %v1393
    %v1410 = vpack.c.b16 %v1396, %v1395
    %v1411 = vpack.c.b16 %v1398, %v1397
    %v1412 = vpack.c.b16 %v1400, %v1399
    %v1413 = vpack.c.b16 %v1402, %v1401
    %v1414 = vpack.c.b16 %v1404, %v1403
    %v1415 = vpack.c.b16 %v1406, %v1405
    %v1416 = vpack.c.b16 %v1408, %v1407
    %1425 = vmatprep.subr.bf16.mxu0 0
    %1426 = vmatpush1.bf16.msra.mxu0 %v1416
    %1427 = vmatprep.subr.bf16.mxu0 0
    %1428 = vmatpush1.bf16.msra.mxu0 %v1415
    %1429 = vmatprep.subr.bf16.mxu0 0
    %1430 = vmatpush1.bf16.msra.mxu0 %v1414
    %1431 = vmatprep.subr.bf16.mxu0 0
    %1432 = vmatpush1.bf16.msra.mxu0 %v1413
    %1433 = vmatprep.subr.bf16.mxu0 0
    %1434 = vmatpush1.bf16.msra.mxu0 %v1412
    %1435 = vmatprep.subr.bf16.mxu0 0
    %1436 = vmatpush1.bf16.msra.mxu0 %v1411
    %1437 = vmatprep.subr.bf16.mxu0 0
    %1438 = vmatpush1.bf16.msra.mxu0 %v1410
    %1439 = vmatprep.subr.bf16.mxu0 0
    %1440 = vmatpush1.bf16.msra.mxu0 %v1409
    %1441 = vmatprep.subr.bf16.mxu0 0
    %1442 = vmatpush2.bf16.msra.mxu0 0
    %1443 = vmatprep.subr.bf16.mxu0 0
    %1444 = vmatpush2.bf16.msra.mxu0 0
    %1445 = vmatprep.subr.bf16.mxu0 0
    %1446 = vmatpush2.bf16.msra.mxu0 0
    %1447 = vmatprep.subr.bf16.mxu0 0
    %1448 = vmatpush2.bf16.msra.mxu0 0
    %1449 = vmatprep.subr.bf16.mxu0 0
    %1450 = vmatpush2.bf16.msra.mxu0 0
    %1451 = vmatprep.subr.bf16.mxu0 0
    %1452 = vmatpush2.bf16.msra.mxu0 0
    %1453 = vmatprep.subr.bf16.mxu0 0
    %1454 = vmatpush2.bf16.msra.mxu0 0
    %1455 = vmatprep.subr.bf16.mxu0 0
    %1456 = vmatpush2.bf16.msra.mxu0 0
    %1457 = vmatprep.mubr.bf16.mxu0 0
    %1458 = vmatmul.mubr.bf16.gmra.mxu0 %v1359
    %v1459 = vpop.f32.mrf.mxu0
    %v1460 = vadd.f32 0.0, %v1459
    %v1461 = vpop.f32.mrf.mxu0
    %v1462 = vpop.f32.mrf.mxu0
    %v1463 = vpop.f32.mrf.mxu0
    %1464 = vdwg.mxu0
    %v1465 = vadd.f32 %v1353, %v1460
    %v1467 = vlaneseq
    %v1468 = vshrl.u32 %v1467, 7
    %v1469 = vsub.s32 0, %v1468
    %v1470 = vrot.slane %v130, %v1469
    %v1472 = vadd.f32 %v1465, %v1470
    %v1473 = vmax.f32 %v1472, 0.0
    %1474 = vst [vmem:[#allocation4] sm:$0x7] %v1473
    %v1475 = vld [vmem:[#allocation4] sm:$0x1]
    %v1476 = vpack.c.bf16 %v1475, %v1475
    %v1477 = vld [vmem:[%s11] sm:$0xff]
    %v1478 = vld [vmem:[%s11 + $0x8] sm:$0xff]
    %v1479 = vld [vmem:[%s11 + $0x10] sm:$0xff]
    %v1480 = vld [vmem:[%s11 + $0x18] sm:$0xff]
    %v1481 = vld [vmem:[%s11 + $0x20] sm:$0xff]
    %v1482 = vld [vmem:[%s11 + $0x28] sm:$0xff]
    %v1483 = vld [vmem:[%s11 + $0x30] sm:$0xff]
    %v1484 = vld [vmem:[%s11 + $0x38] sm:$0xff]
    %v1485 = vld [vmem:[%s11 + $0x40] sm:$0xff]
    %v1486 = vld [vmem:[%s11 + $0x48] sm:$0xff]
    %v1487 = vld [vmem:[%s11 + $0x50] sm:$0xff]
    %v1488 = vld [vmem:[%s11 + $0x58] sm:$0xff]
    %v1489 = vld [vmem:[%s11 + $0x60] sm:$0xff]
    %v1490 = vld [vmem:[%s11 + $0x68] sm:$0xff]
    %v1491 = vld [vmem:[%s11 + $0x70] sm:$0xff]
    %v1492 = vld [vmem:[%s11 + $0x78] sm:$0xff]
    %v1509 = vunpack.c.l.b16 %v1477
    %v1510 = vunpack.c.h.b16 %v1477
    %v1511 = vunpack.c.l.b16 %v1478
    %v1512 = vunpack.c.h.b16 %v1478
    %v1513 = vunpack.c.l.b16 %v1479
    %v1514 = vunpack.c.h.b16 %v1479
    %v1515 = vunpack.c.l.b16 %v1480
    %v1516 = vunpack.c.h.b16 %v1480
    %v1517 = vunpack.c.l.b16 %v1481
    %v1518 = vunpack.c.h.b16 %v1481
    %v1519 = vunpack.c.l.b16 %v1482
    %v1520 = vunpack.c.h.b16 %v1482
    %v1521 = vunpack.c.l.b16 %v1483
    %v1522 = vunpack.c.h.b16 %v1483
    %v1523 = vunpack.c.l.b16 %v1484
    %v1524 = vunpack.c.h.b16 %v1484
    %v1525 = vunpack.c.l.b16 %v1485
    %v1526 = vunpack.c.h.b16 %v1485
    %v1527 = vunpack.c.l.b16 %v1486
    %v1528 = vunpack.c.h.b16 %v1486
    %v1529 = vunpack.c.l.b16 %v1487
    %v1530 = vunpack.c.h.b16 %v1487
    %v1531 = vunpack.c.l.b16 %v1488
    %v1532 = vunpack.c.h.b16 %v1488
    %v1533 = vunpack.c.l.b16 %v1489
    %v1534 = vunpack.c.h.b16 %v1489
    %v1535 = vunpack.c.l.b16 %v1490
    %v1536 = vunpack.c.h.b16 %v1490
    %v1537 = vunpack.c.l.b16 %v1491
    %v1538 = vunpack.c.h.b16 %v1491
    %v1539 = vunpack.c.l.b16 %v1492
    %v1540 = vunpack.c.h.b16 %v1492
    %v1541 = vpack.c.b16 %v1511, %v1509
    %v1542 = vpack.c.b16 %v1512, %v1510
    %v1543 = vpack.c.b16 %v1515, %v1513
    %v1544 = vpack.c.b16 %v1516, %v1514
    %v1545 = vpack.c.b16 %v1519, %v1517
    %v1546 = vpack.c.b16 %v1520, %v1518
    %v1547 = vpack.c.b16 %v1523, %v1521
    %v1548 = vpack.c.b16 %v1524, %v1522
    %v1549 = vpack.c.b16 %v1527, %v1525
    %v1550 = vpack.c.b16 %v1528, %v1526
    %v1551 = vpack.c.b16 %v1531, %v1529
    %v1552 = vpack.c.b16 %v1532, %v1530
    %v1553 = vpack.c.b16 %v1535, %v1533
    %v1554 = vpack.c.b16 %v1536, %v1534
    %v1555 = vpack.c.b16 %v1539, %v1537
    %v1556 = vpack.c.b16 %v1540, %v1538
    %1573 = vmatprep.subr.bf16.mxu0 %v1556
    %1574 = vmatpush1.bf16.msra.mxu0 %v1555
    %1575 = vmatprep.subr.bf16.mxu0 %v1554
    %1576 = vmatpush1.bf16.msra.mxu0 %v1553
    %1577 = vmatprep.subr.bf16.mxu0 %v1552
    %1578 = vmatpush1.bf16.msra.mxu0 %v1551
    %1579 = vmatprep.subr.bf16.mxu0 %v1550
    %1580 = vmatpush1.bf16.msra.mxu0 %v1549
    %1581 = vmatprep.subr.bf16.mxu0 %v1548
    %1582 = vmatpush1.bf16.msra.mxu0 %v1547
    %1583 = vmatprep.subr.bf16.mxu0 %v1546
    %1584 = vmatpush1.bf16.msra.mxu0 %v1545
    %1585 = vmatprep.subr.bf16.mxu0 %v1544
    %1586 = vmatpush1.bf16.msra.mxu0 %v1543
    %1587 = vmatprep.subr.bf16.mxu0 %v1542
    %1588 = vmatpush1.bf16.msra.mxu0 %v1541
    %1589 = vmatprep.subr.bf16.mxu0 0
    %1590 = vmatpush2.bf16.msra.mxu0 0
    %1591 = vmatprep.subr.bf16.mxu0 0
    %1592 = vmatpush2.bf16.msra.mxu0 0
    %1593 = vmatprep.subr.bf16.mxu0 0
    %1594 = vmatpush2.bf16.msra.mxu0 0
    %1595 = vmatprep.subr.bf16.mxu0 0
    %1596 = vmatpush2.bf16.msra.mxu0 0
    %1597 = vmatprep.subr.bf16.mxu0 0
    %1598 = vmatpush2.bf16.msra.mxu0 0
    %1599 = vmatprep.subr.bf16.mxu0 0
    %1600 = vmatpush2.bf16.msra.mxu0 0
    %1601 = vmatprep.subr.bf16.mxu0 0
    %1602 = vmatpush2.bf16.msra.mxu0 0
    %1603 = vmatprep.subr.bf16.mxu0 0
    %1604 = vmatpush2.bf16.msra.mxu0 0
    %1605 = vmatprep.mubr.bf16.mxu0 0
    %1606 = vmatmul.mubr.bf16.gmra.mxu0 %v1476
    %v1607 = vpop.f32.mrf.mxu0
    %v1608 = vadd.f32 0.0, %v1607
    %v1609 = vpop.f32.mrf.mxu0
    %v1610 = vadd.f32 0.0, %v1609
    %v1611 = vpop.f32.mrf.mxu0
    %v1612 = vpop.f32.mrf.mxu0
    %1613 = vdwg.mxu0
    %v1616 = vcombine.low %v1608, %v1610
    %v1618 = vunpack.c.l.s4 1966171168
    %v1619 = vunpack.c.0.s8 %v1618
    %v1620 = vlaneseq
    %v1621 = vshrl.u32 %v1620, 7
    %v1622 = vsub.s32 %v1619, %v1621
    %v1623 = vrot.slane %v1616, %v1622
    %v1625 = vunpack.c.l.s4 1966171168
    %v1626 = vunpack.c.0.s8 %v1625
    %v1627 = vlaneseq
    %v1628 = vshrl.u32 %v1627, 7
    %v1629 = vsub.s32 %v1626, %v1628
    %v1630 = vrot.slane %v1623, %v1629
    %v1632 = vadd.f32 %v165, %v1630
    %v1633 = vld [vmem:[#allocation4 + $0x1] sm:$0x1]
    %v1634 = vpack.c.bf16 %v1633, %v1633
    %s1635 = scalar_lea.vmem %s11, 128
    %v1636 = vld [vmem:[%s1635] sm:$0xff]
    %v1637 = vld [vmem:[%s1635 + $0x8] sm:$0xff]
    %v1638 = vld [vmem:[%s1635 + $0x10] sm:$0xff]
    %v1639 = vld [vmem:[%s1635 + $0x18] sm:$0xff]
    %v1640 = vld [vmem:[%s1635 + $0x20] sm:$0xff]
    %v1641 = vld [vmem:[%s1635 + $0x28] sm:$0xff]
    %v1642 = vld [vmem:[%s1635 + $0x30] sm:$0xff]
    %v1643 = vld [vmem:[%s1635 + $0x38] sm:$0xff]
    %v1644 = vld [vmem:[%s1635 + $0x40] sm:$0xff]
    %v1645 = vld [vmem:[%s1635 + $0x48] sm:$0xff]
    %v1646 = vld [vmem:[%s1635 + $0x50] sm:$0xff]
    %v1647 = vld [vmem:[%s1635 + $0x58] sm:$0xff]
    %v1648 = vld [vmem:[%s1635 + $0x60] sm:$0xff]
    %v1649 = vld [vmem:[%s1635 + $0x68] sm:$0xff]
    %v1650 = vld [vmem:[%s1635 + $0x70] sm:$0xff]
    %v1651 = vld [vmem:[%s1635 + $0x78] sm:$0xff]
    %v1668 = vunpack.c.l.b16 %v1636
    %v1669 = vunpack.c.h.b16 %v1636
    %v1670 = vunpack.c.l.b16 %v1637
    %v1671 = vunpack.c.h.b16 %v1637
    %v1672 = vunpack.c.l.b16 %v1638
    %v1673 = vunpack.c.h.b16 %v1638
    %v1674 = vunpack.c.l.b16 %v1639
    %v1675 = vunpack.c.h.b16 %v1639
    %v1676 = vunpack.c.l.b16 %v1640
    %v1677 = vunpack.c.h.b16 %v1640
    %v1678 = vunpack.c.l.b16 %v1641
    %v1679 = vunpack.c.h.b16 %v1641
    %v1680 = vunpack.c.l.b16 %v1642
    %v1681 = vunpack.c.h.b16 %v1642
    %v1682 = vunpack.c.l.b16 %v1643
    %v1683 = vunpack.c.h.b16 %v1643
    %v1684 = vunpack.c.l.b16 %v1644
    %v1685 = vunpack.c.h.b16 %v1644
    %v1686 = vunpack.c.l.b16 %v1645
    %v1687 = vunpack.c.h.b16 %v1645
    %v1688 = vunpack.c.l.b16 %v1646
    %v1689 = vunpack.c.h.b16 %v1646
    %v1690 = vunpack.c.l.b16 %v1647
    %v1691 = vunpack.c.h.b16 %v1647
    %v1692 = vunpack.c.l.b16 %v1648
    %v1693 = vunpack.c.h.b16 %v1648
    %v1694 = vunpack.c.l.b16 %v1649
    %v1695 = vunpack.c.h.b16 %v1649
    %v1696 = vunpack.c.l.b16 %v1650
    %v1697 = vunpack.c.h.b16 %v1650
    %v1698 = vunpack.c.l.b16 %v1651
    %v1699 = vunpack.c.h.b16 %v1651
    %v1700 = vpack.c.b16 %v1670, %v1668
    %v1701 = vpack.c.b16 %v1671, %v1669
    %v1702 = vpack.c.b16 %v1674, %v1672
    %v1703 = vpack.c.b16 %v1675, %v1673
    %v1704 = vpack.c.b16 %v1678, %v1676
    %v1705 = vpack.c.b16 %v1679, %v1677
    %v1706 = vpack.c.b16 %v1682, %v1680
    %v1707 = vpack.c.b16 %v1683, %v1681
    %v1708 = vpack.c.b16 %v1686, %v1684
    %v1709 = vpack.c.b16 %v1687, %v1685
    %v1710 = vpack.c.b16 %v1690, %v1688
    %v1711 = vpack.c.b16 %v1691, %v1689
    %v1712 = vpack.c.b16 %v1694, %v1692
    %v1713 = vpack.c.b16 %v1695, %v1693
    %v1714 = vpack.c.b16 %v1698, %v1696
    %v1715 = vpack.c.b16 %v1699, %v1697
    %1732 = vmatprep.subr.bf16.mxu0 %v1715
    %1733 = vmatpush1.bf16.msra.mxu0 %v1714
    %1734 = vmatprep.subr.bf16.mxu0 %v1713
    %1735 = vmatpush1.bf16.msra.mxu0 %v1712
    %1736 = vmatprep.subr.bf16.mxu0 %v1711
    %1737 = vmatpush1.bf16.msra.mxu0 %v1710
    %1738 = vmatprep.subr.bf16.mxu0 %v1709
    %1739 = vmatpush1.bf16.msra.mxu0 %v1708
    %1740 = vmatprep.subr.bf16.mxu0 %v1707
    %1741 = vmatpush1.bf16.msra.mxu0 %v1706
    %1742 = vmatprep.subr.bf16.mxu0 %v1705
    %1743 = vmatpush1.bf16.msra.mxu0 %v1704
    %1744 = vmatprep.subr.bf16.mxu0 %v1703
    %1745 = vmatpush1.bf16.msra.mxu0 %v1702
    %1746 = vmatprep.subr.bf16.mxu0 %v1701
    %1747 = vmatpush1.bf16.msra.mxu0 %v1700
    %1748 = vmatprep.subr.bf16.mxu0 0
    %1749 = vmatpush2.bf16.msra.mxu0 0
    %1750 = vmatprep.subr.bf16.mxu0 0
    %1751 = vmatpush2.bf16.msra.mxu0 0
    %1752 = vmatprep.subr.bf16.mxu0 0
    %1753 = vmatpush2.bf16.msra.mxu0 0
    %1754 = vmatprep.subr.bf16.mxu0 0
    %1755 = vmatpush2.bf16.msra.mxu0 0
    %1756 = vmatprep.subr.bf16.mxu0 0
    %1757 = vmatpush2.bf16.msra.mxu0 0
    %1758 = vmatprep.subr.bf16.mxu0 0
    %1759 = vmatpush2.bf16.msra.mxu0 0
    %1760 = vmatprep.subr.bf16.mxu0 0
    %1761 = vmatpush2.bf16.msra.mxu0 0
    %1762 = vmatprep.subr.bf16.mxu0 0
    %1763 = vmatpush2.bf16.msra.mxu0 0
    %1764 = vmatprep.mubr.bf16.mxu0 0
    %1765 = vmatmul.mubr.bf16.gmra.mxu0 %v1634
    %v1766 = vpop.f32.mrf.mxu0
    %v1767 = vadd.f32 0.0, %v1766
    %v1768 = vpop.f32.mrf.mxu0
    %v1769 = vadd.f32 0.0, %v1768
    %v1770 = vpop.f32.mrf.mxu0
    %v1771 = vpop.f32.mrf.mxu0
    %1772 = vdwg.mxu0
    %v1775 = vcombine.low %v1767, %v1769
    %v1777 = vunpack.c.l.s4 1966171168
    %v1778 = vunpack.c.0.s8 %v1777
    %v1779 = vlaneseq
    %v1780 = vshrl.u32 %v1779, 7
    %v1781 = vsub.s32 %v1778, %v1780
    %v1782 = vrot.slane %v1775, %v1781
    %v1784 = vunpack.c.l.s4 1966171168
    %v1785 = vunpack.c.0.s8 %v1784
    %v1786 = vlaneseq
    %v1787 = vshrl.u32 %v1786, 7
    %v1788 = vsub.s32 %v1785, %v1787
    %v1789 = vrot.slane %v1782, %v1788
    %v1791 = vadd.f32 %v1632, %v1789
    %v1792 = vld [vmem:[#allocation4 + $0x2] sm:$0x1]
    %v1793 = vpack.c.bf16 %v1792, %v1792
    %s1794 = scalar_lea.vmem %s11, 256
    %v1795 = vld [vmem:[%s1794] sm:$0xff]
    %v1796 = vld [vmem:[%s1794 + $0x8] sm:$0xff]
    %v1797 = vld [vmem:[%s1794 + $0x10] sm:$0xff]
    %v1798 = vld [vmem:[%s1794 + $0x18] sm:$0xff]
    %v1799 = vld [vmem:[%s1794 + $0x20] sm:$0xff]
    %v1800 = vld [vmem:[%s1794 + $0x28] sm:$0xff]
    %v1801 = vld [vmem:[%s1794 + $0x30] sm:$0xff]
    %v1802 = vld [vmem:[%s1794 + $0x38] sm:$0xff]
    %v1803 = vld [vmem:[%s1794 + $0x40] sm:$0xff]
    %v1804 = vld [vmem:[%s1794 + $0x48] sm:$0xff]
    %v1805 = vld [vmem:[%s1794 + $0x50] sm:$0xff]
    %v1806 = vld [vmem:[%s1794 + $0x58] sm:$0xff]
    %v1807 = vld [vmem:[%s1794 + $0x60] sm:$0xff]
    %v1808 = vld [vmem:[%s1794 + $0x68] sm:$0xff]
    %v1809 = vld [vmem:[%s1794 + $0x70] sm:$0xff]
    %v1810 = vld [vmem:[%s1794 + $0x78] sm:$0xff]
    %v1827 = vunpack.c.l.b16 %v1795
    %v1828 = vunpack.c.h.b16 %v1795
    %v1829 = vunpack.c.l.b16 %v1796
    %v1830 = vunpack.c.h.b16 %v1796
    %v1831 = vunpack.c.l.b16 %v1797
    %v1832 = vunpack.c.h.b16 %v1797
    %v1833 = vunpack.c.l.b16 %v1798
    %v1834 = vunpack.c.h.b16 %v1798
    %v1835 = vunpack.c.l.b16 %v1799
    %v1836 = vunpack.c.h.b16 %v1799
    %v1837 = vunpack.c.l.b16 %v1800
    %v1838 = vunpack.c.h.b16 %v1800
    %v1839 = vunpack.c.l.b16 %v1801
    %v1840 = vunpack.c.h.b16 %v1801
    %v1841 = vunpack.c.l.b16 %v1802
    %v1842 = vunpack.c.h.b16 %v1802
    %v1843 = vunpack.c.l.b16 %v1803
    %v1844 = vunpack.c.h.b16 %v1803
    %v1845 = vunpack.c.l.b16 %v1804
    %v1846 = vunpack.c.h.b16 %v1804
    %v1847 = vunpack.c.l.b16 %v1805
    %v1848 = vunpack.c.h.b16 %v1805
    %v1849 = vunpack.c.l.b16 %v1806
    %v1850 = vunpack.c.h.b16 %v1806
    %v1851 = vunpack.c.l.b16 %v1807
    %v1852 = vunpack.c.h.b16 %v1807
    %v1853 = vunpack.c.l.b16 %v1808
    %v1854 = vunpack.c.h.b16 %v1808
    %v1855 = vunpack.c.l.b16 %v1809
    %v1856 = vunpack.c.h.b16 %v1809
    %v1857 = vunpack.c.l.b16 %v1810
    %v1858 = vunpack.c.h.b16 %v1810
    %v1859 = vpack.c.b16 %v1829, %v1827
    %v1860 = vpack.c.b16 %v1830, %v1828
    %v1861 = vpack.c.b16 %v1833, %v1831
    %v1862 = vpack.c.b16 %v1834, %v1832
    %v1863 = vpack.c.b16 %v1837, %v1835
    %v1864 = vpack.c.b16 %v1838, %v1836
    %v1865 = vpack.c.b16 %v1841, %v1839
    %v1866 = vpack.c.b16 %v1842, %v1840
    %v1867 = vpack.c.b16 %v1845, %v1843
    %v1868 = vpack.c.b16 %v1846, %v1844
    %v1869 = vpack.c.b16 %v1849, %v1847
    %v1870 = vpack.c.b16 %v1850, %v1848
    %v1871 = vpack.c.b16 %v1853, %v1851
    %v1872 = vpack.c.b16 %v1854, %v1852
    %v1873 = vpack.c.b16 %v1857, %v1855
    %v1874 = vpack.c.b16 %v1858, %v1856
    %1891 = vmatprep.subr.bf16.mxu0 %v1874
    %1892 = vmatpush1.bf16.msra.mxu0 %v1873
    %1893 = vmatprep.subr.bf16.mxu0 %v1872
    %1894 = vmatpush1.bf16.msra.mxu0 %v1871
    %1895 = vmatprep.subr.bf16.mxu0 %v1870
    %1896 = vmatpush1.bf16.msra.mxu0 %v1869
    %1897 = vmatprep.subr.bf16.mxu0 %v1868
    %1898 = vmatpush1.bf16.msra.mxu0 %v1867
    %1899 = vmatprep.subr.bf16.mxu0 %v1866
    %1900 = vmatpush1.bf16.msra.mxu0 %v1865
    %1901 = vmatprep.subr.bf16.mxu0 %v1864
    %1902 = vmatpush1.bf16.msra.mxu0 %v1863
    %1903 = vmatprep.subr.bf16.mxu0 %v1862
    %1904 = vmatpush1.bf16.msra.mxu0 %v1861
    %1905 = vmatprep.subr.bf16.mxu0 %v1860
    %1906 = vmatpush1.bf16.msra.mxu0 %v1859
    %1907 = vmatprep.subr.bf16.mxu0 0
    %1908 = vmatpush2.bf16.msra.mxu0 0
    %1909 = vmatprep.subr.bf16.mxu0 0
    %1910 = vmatpush2.bf16.msra.mxu0 0
    %1911 = vmatprep.subr.bf16.mxu0 0
    %1912 = vmatpush2.bf16.msra.mxu0 0
    %1913 = vmatprep.subr.bf16.mxu0 0
    %1914 = vmatpush2.bf16.msra.mxu0 0
    %1915 = vmatprep.subr.bf16.mxu0 0
    %1916 = vmatpush2.bf16.msra.mxu0 0
    %1917 = vmatprep.subr.bf16.mxu0 0
    %1918 = vmatpush2.bf16.msra.mxu0 0
    %1919 = vmatprep.subr.bf16.mxu0 0
    %1920 = vmatpush2.bf16.msra.mxu0 0
    %1921 = vmatprep.subr.bf16.mxu0 0
    %1922 = vmatpush2.bf16.msra.mxu0 0
    %1923 = vmatprep.mubr.bf16.mxu0 0
    %1924 = vmatmul.mubr.bf16.gmra.mxu0 %v1793
    %v1925 = vpop.f32.mrf.mxu0
    %v1926 = vadd.f32 0.0, %v1925
    %v1927 = vpop.f32.mrf.mxu0
    %v1928 = vadd.f32 0.0, %v1927
    %v1929 = vpop.f32.mrf.mxu0
    %v1930 = vpop.f32.mrf.mxu0
    %1931 = vdwg.mxu0
    %v1934 = vcombine.low %v1926, %v1928
    %v1936 = vunpack.c.l.s4 1966171168
    %v1937 = vunpack.c.0.s8 %v1936
    %v1938 = vlaneseq
    %v1939 = vshrl.u32 %v1938, 7
    %v1940 = vsub.s32 %v1937, %v1939
    %v1941 = vrot.slane %v1934, %v1940
    %v1943 = vunpack.c.l.s4 1966171168
    %v1944 = vunpack.c.0.s8 %v1943
    %v1945 = vlaneseq
    %v1946 = vshrl.u32 %v1945, 7
    %v1947 = vsub.s32 %v1944, %v1946
    %v1948 = vrot.slane %v1941, %v1947
    %v1950 = vadd.f32 %v1791, %v1948
    %v1951 = vlaneseq
    %vm1952 = vcmp.ge.s32.totalorder %v1951, 0
    %vm1953 = vcmp.lt.s32.totalorder %v1951, 192
    %vm1954 = vmand %vm1952, %vm1953
    %1955 = vst.msk [vmem:[#allocation5] ss:$2 sm:$0x3] %vm1954, %v1950
    %s1956 = scalar_lea.vmem [#allocation6], 8
    %v1957 = vld [vmem:[%s1956] sm:$0xf]
    %v1958 = vld [vmem:[%s1956 + $0x4] sm:$0x7]
    %v1959 = vld [vmem:[%s1] sm:$0xf]
    %v1960 = vld [vmem:[%s1 + $0x4] sm:$0xf]
    %v1961 = vld [vmem:[%s1 + $0x8] sm:$0xf]
    %v1962 = vld [vmem:[%s1 + $0xc] sm:$0xf]
    %v1963 = vld [vmem:[%s1 + $0x10] sm:$0xf]
    %v1964 = vld [vmem:[%s1 + $0x14] sm:$0xf]
    %v1965 = vld [vmem:[%s1 + $0x18] sm:$0xf]
    %v1966 = vld [vmem:[%s1 + $0x1c] sm:$0xf]
    %v1967 = vld [vmem:[%s1 + $0x20] sm:$0xf]
    %v1968 = vld [vmem:[%s1 + $0x24] sm:$0xf]
    %v1969 = vld [vmem:[%s1 + $0x28] sm:$0xf]
    %v1970 = vld [vmem:[%s1 + $0x2c] sm:$0xf]
    %v1971 = vld [vmem:[%s1 + $0x30] sm:$0xf]
    %v1972 = vld [vmem:[%s1 + $0x34] sm:$0xf]
    %v1973 = vld [vmem:[%s1 + $0x38] sm:$0xf]
    %v1974 = vld [vmem:[%s1 + $0x3c] sm:$0xf]
    %v1975 = vld [vmem:[%s1956 + $0x4] sm:$0xf]
    %v1976 = vld [vmem:[%s185] sm:$0xf]
    %v1977 = vld [vmem:[%s185 + $0x4] sm:$0xf]
    %v1978 = vld [vmem:[%s185 + $0x8] sm:$0xf]
    %v1979 = vld [vmem:[%s185 + $0xc] sm:$0xf]
    %v1980 = vld [vmem:[%s185 + $0x10] sm:$0xf]
    %v1981 = vld [vmem:[%s185 + $0x14] sm:$0xf]
    %v1982 = vld [vmem:[%s185 + $0x18] sm:$0xf]
    %v1983 = vld [vmem:[%s185 + $0x1c] sm:$0xf]
    %v1984 = vld [vmem:[%s185 + $0x20] sm:$0xf]
    %v1985 = vld [vmem:[%s185 + $0x24] sm:$0xf]
    %v1986 = vld [vmem:[%s185 + $0x28] sm:$0xf]
    %v1987 = vld [vmem:[%s185 + $0x2c] sm:$0xf]
    %v1988 = vld [vmem:[%s185 + $0x30] sm:$0xf]
    %v1989 = vld [vmem:[%s185 + $0x34] sm:$0xf]
    %v1990 = vld [vmem:[%s185 + $0x38] sm:$0xf]
    %v1991 = vld [vmem:[%s185 + $0x3c] sm:$0xf]
    %v1994 = vunpack.c.l.b16 %v1957
    %v1995 = vunpack.c.l.b16 %v1975
    %v1996 = vpack.c.b16 %v1995, %v1994
    %v1998 = vshrl.u32 %v1996, 16
    %v2000 = vshll.u32 %v1996, 16
    %v2002 = vrot.slane %v2000, 1
    %v2003 = vor.u32 %v1998, %v2002
    %v2021 = vunpack.c.l.b16 %v1976
    %v2022 = vunpack.c.l.b16 %v1977
    %v2023 = vunpack.c.l.b16 %v1978
    %v2024 = vunpack.c.l.b16 %v1979
    %v2025 = vunpack.c.l.b16 %v1980
    %v2026 = vunpack.c.l.b16 %v1981
    %v2027 = vunpack.c.l.b16 %v1982
    %v2028 = vunpack.c.l.b16 %v1983
    %v2029 = vunpack.c.l.b16 %v1984
    %v2030 = vunpack.c.l.b16 %v1985
    %v2031 = vunpack.c.l.b16 %v1986
    %v2032 = vunpack.c.l.b16 %v1987
    %v2033 = vunpack.c.l.b16 %v1988
    %v2034 = vunpack.c.l.b16 %v1989
    %v2035 = vunpack.c.l.b16 %v1990
    %v2036 = vunpack.c.l.b16 %v1991
    %v2037 = vpack.c.b16 %v2022, %v2021
    %v2038 = vpack.c.b16 %v2024, %v2023
    %v2039 = vpack.c.b16 %v2026, %v2025
    %v2040 = vpack.c.b16 %v2028, %v2027
    %v2041 = vpack.c.b16 %v2030, %v2029
    %v2042 = vpack.c.b16 %v2032, %v2031
    %v2043 = vpack.c.b16 %v2034, %v2033
    %v2044 = vpack.c.b16 %v2036, %v2035
    %2053 = vmatprep.subr.bf16.mxu0 0
    %2054 = vmatpush1.bf16.msra.mxu0 %v2044
    %2055 = vmatprep.subr.bf16.mxu0 0
    %2056 = vmatpush1.bf16.msra.mxu0 %v2043
    %2057 = vmatprep.subr.bf16.mxu0 0
    %2058 = vmatpush1.bf16.msra.mxu0 %v2042
    %2059 = vmatprep.subr.bf16.mxu0 0
    %2060 = vmatpush1.bf16.msra.mxu0 %v2041
    %2061 = vmatprep.subr.bf16.mxu0 0
    %2062 = vmatpush1.bf16.msra.mxu0 %v2040
    %2063 = vmatprep.subr.bf16.mxu0 0
    %2064 = vmatpush1.bf16.msra.mxu0 %v2039
    %2065 = vmatprep.subr.bf16.mxu0 0
    %2066 = vmatpush1.bf16.msra.mxu0 %v2038
    %2067 = vmatprep.subr.bf16.mxu0 0
    %2068 = vmatpush1.bf16.msra.mxu0 %v2037
    %2069 = vmatprep.subr.bf16.mxu0 0
    %2070 = vmatpush2.bf16.msra.mxu0 0
    %2071 = vmatprep.subr.bf16.mxu0 0
    %2072 = vmatpush2.bf16.msra.mxu0 0
    %2073 = vmatprep.subr.bf16.mxu0 0
    %2074 = vmatpush2.bf16.msra.mxu0 0
    %2075 = vmatprep.subr.bf16.mxu0 0
    %2076 = vmatpush2.bf16.msra.mxu0 0
    %2077 = vmatprep.subr.bf16.mxu0 0
    %2078 = vmatpush2.bf16.msra.mxu0 0
    %2079 = vmatprep.subr.bf16.mxu0 0
    %2080 = vmatpush2.bf16.msra.mxu0 0
    %2081 = vmatprep.subr.bf16.mxu0 0
    %2082 = vmatpush2.bf16.msra.mxu0 0
    %2083 = vmatprep.subr.bf16.mxu0 0
    %2084 = vmatpush2.bf16.msra.mxu0 0
    %2085 = vmatprep.mubr.bf16.mxu0 0
    %2086 = vmatmul.mubr.bf16.gmra.mxu0 %v2003
    %v2087 = vpop.f32.mrf.mxu0
    %v2088 = vadd.f32 0.0, %v2087
    %v2089 = vpop.f32.mrf.mxu0
    %v2090 = vpop.f32.mrf.mxu0
    %v2091 = vadd.f32 0.0, %v2090
    %v2092 = vpop.f32.mrf.mxu0
    %2093 = vdwg.mxu0
    %v2095 = vunpack.c.l.b16 %v1958
    %v2096 = vpack.c.b16 %v2095, %v1994
    %v2114 = vunpack.c.l.b16 %v1959
    %v2115 = vunpack.c.l.b16 %v1960
    %v2116 = vunpack.c.l.b16 %v1961
    %v2117 = vunpack.c.l.b16 %v1962
    %v2118 = vunpack.c.l.b16 %v1963
    %v2119 = vunpack.c.l.b16 %v1964
    %v2120 = vunpack.c.l.b16 %v1965
    %v2121 = vunpack.c.l.b16 %v1966
    %v2122 = vunpack.c.l.b16 %v1967
    %v2123 = vunpack.c.l.b16 %v1968
    %v2124 = vunpack.c.l.b16 %v1969
    %v2125 = vunpack.c.l.b16 %v1970
    %v2126 = vunpack.c.l.b16 %v1971
    %v2127 = vunpack.c.l.b16 %v1972
    %v2128 = vunpack.c.l.b16 %v1973
    %v2129 = vunpack.c.l.b16 %v1974
    %v2130 = vpack.c.b16 %v2115, %v2114
    %v2131 = vpack.c.b16 %v2117, %v2116
    %v2132 = vpack.c.b16 %v2119, %v2118
    %v2133 = vpack.c.b16 %v2121, %v2120
    %v2134 = vpack.c.b16 %v2123, %v2122
    %v2135 = vpack.c.b16 %v2125, %v2124
    %v2136 = vpack.c.b16 %v2127, %v2126
    %v2137 = vpack.c.b16 %v2129, %v2128
    %2146 = vmatprep.subr.bf16.mxu0 0
    %2147 = vmatpush1.bf16.msra.mxu0 %v2137
    %2148 = vmatprep.subr.bf16.mxu0 0
    %2149 = vmatpush1.bf16.msra.mxu0 %v2136
    %2150 = vmatprep.subr.bf16.mxu0 0
    %2151 = vmatpush1.bf16.msra.mxu0 %v2135
    %2152 = vmatprep.subr.bf16.mxu0 0
    %2153 = vmatpush1.bf16.msra.mxu0 %v2134
    %2154 = vmatprep.subr.bf16.mxu0 0
    %2155 = vmatpush1.bf16.msra.mxu0 %v2133
    %2156 = vmatprep.subr.bf16.mxu0 0
    %2157 = vmatpush1.bf16.msra.mxu0 %v2132
    %2158 = vmatprep.subr.bf16.mxu0 0
    %2159 = vmatpush1.bf16.msra.mxu0 %v2131
    %2160 = vmatprep.subr.bf16.mxu0 0
    %2161 = vmatpush1.bf16.msra.mxu0 %v2130
    %2162 = vmatprep.subr.bf16.mxu0 0
    %2163 = vmatpush2.bf16.msra.mxu0 0
    %2164 = vmatprep.subr.bf16.mxu0 0
    %2165 = vmatpush2.bf16.msra.mxu0 0
    %2166 = vmatprep.subr.bf16.mxu0 0
    %2167 = vmatpush2.bf16.msra.mxu0 0
    %2168 = vmatprep.subr.bf16.mxu0 0
    %2169 = vmatpush2.bf16.msra.mxu0 0
    %2170 = vmatprep.subr.bf16.mxu0 0
    %2171 = vmatpush2.bf16.msra.mxu0 0
    %2172 = vmatprep.subr.bf16.mxu0 0
    %2173 = vmatpush2.bf16.msra.mxu0 0
    %2174 = vmatprep.subr.bf16.mxu0 0
    %2175 = vmatpush2.bf16.msra.mxu0 0
    %2176 = vmatprep.subr.bf16.mxu0 0
    %2177 = vmatpush2.bf16.msra.mxu0 0
    %2178 = vmatprep.mubr.bf16.mxu0 0
    %2179 = vmatmul.mubr.bf16.gmra.mxu0 %v2096
    %v2180 = vpop.f32.mrf.mxu0
    %v2181 = vadd.f32 %v2088, %v2180
    %v2182 = vpop.f32.mrf.mxu0
    %v2183 = vpop.f32.mrf.mxu0
    %v2184 = vadd.f32 %v2091, %v2183
    %v2185 = vpop.f32.mrf.mxu0
    %2186 = vdwg.mxu0
    %v2187 = vld [vmem:[%s1956] sm:$0xe]
    %v2188 = vld [vmem:[%s398] sm:$0xf]
    %v2189 = vld [vmem:[%s398 + $0x4] sm:$0xf]
    %v2190 = vld [vmem:[%s398 + $0x8] sm:$0xf]
    %v2191 = vld [vmem:[%s398 + $0xc] sm:$0xf]
    %v2192 = vld [vmem:[%s398 + $0x10] sm:$0xf]
    %v2193 = vld [vmem:[%s398 + $0x14] sm:$0xf]
    %v2194 = vld [vmem:[%s398 + $0x18] sm:$0xf]
    %v2195 = vld [vmem:[%s398 + $0x1c] sm:$0xf]
    %v2196 = vld [vmem:[%s398 + $0x20] sm:$0xf]
    %v2197 = vld [vmem:[%s398 + $0x24] sm:$0xf]
    %v2198 = vld [vmem:[%s398 + $0x28] sm:$0xf]
    %v2199 = vld [vmem:[%s398 + $0x2c] sm:$0xf]
    %v2200 = vld [vmem:[%s398 + $0x30] sm:$0xf]
    %v2201 = vld [vmem:[%s398 + $0x34] sm:$0xf]
    %v2202 = vld [vmem:[%s398 + $0x38] sm:$0xf]
    %v2203 = vld [vmem:[%s398 + $0x3c] sm:$0xf]
    %v2205 = vunpack.c.l.b16 %v2187
    %v2206 = vpack.c.b16 %v1995, %v2205
    %v2207 = vrot.slane %v2206, 1
    %v2225 = vunpack.c.l.b16 %v2188
    %v2226 = vunpack.c.l.b16 %v2189
    %v2227 = vunpack.c.l.b16 %v2190
    %v2228 = vunpack.c.l.b16 %v2191
    %v2229 = vunpack.c.l.b16 %v2192
    %v2230 = vunpack.c.l.b16 %v2193
    %v2231 = vunpack.c.l.b16 %v2194
    %v2232 = vunpack.c.l.b16 %v2195
    %v2233 = vunpack.c.l.b16 %v2196
    %v2234 = vunpack.c.l.b16 %v2197
    %v2235 = vunpack.c.l.b16 %v2198
    %v2236 = vunpack.c.l.b16 %v2199
    %v2237 = vunpack.c.l.b16 %v2200
    %v2238 = vunpack.c.l.b16 %v2201
    %v2239 = vunpack.c.l.b16 %v2202
    %v2240 = vunpack.c.l.b16 %v2203
    %v2241 = vpack.c.b16 %v2226, %v2225
    %v2242 = vpack.c.b16 %v2228, %v2227
    %v2243 = vpack.c.b16 %v2230, %v2229
    %v2244 = vpack.c.b16 %v2232, %v2231
    %v2245 = vpack.c.b16 %v2234, %v2233
    %v2246 = vpack.c.b16 %v2236, %v2235
    %v2247 = vpack.c.b16 %v2238, %v2237
    %v2248 = vpack.c.b16 %v2240, %v2239
    %2257 = vmatprep.subr.bf16.mxu0 0
    %2258 = vmatpush1.bf16.msra.mxu0 %v2248
    %2259 = vmatprep.subr.bf16.mxu0 0
    %2260 = vmatpush1.bf16.msra.mxu0 %v2247
    %2261 = vmatprep.subr.bf16.mxu0 0
    %2262 = vmatpush1.bf16.msra.mxu0 %v2246
    %2263 = vmatprep.subr.bf16.mxu0 0
    %2264 = vmatpush1.bf16.msra.mxu0 %v2245
    %2265 = vmatprep.subr.bf16.mxu0 0
    %2266 = vmatpush1.bf16.msra.mxu0 %v2244
    %2267 = vmatprep.subr.bf16.mxu0 0
    %2268 = vmatpush1.bf16.msra.mxu0 %v2243
    %2269 = vmatprep.subr.bf16.mxu0 0
    %2270 = vmatpush1.bf16.msra.mxu0 %v2242
    %2271 = vmatprep.subr.bf16.mxu0 0
    %2272 = vmatpush1.bf16.msra.mxu0 %v2241
    %2273 = vmatprep.subr.bf16.mxu0 0
    %2274 = vmatpush2.bf16.msra.mxu0 0
    %2275 = vmatprep.subr.bf16.mxu0 0
    %2276 = vmatpush2.bf16.msra.mxu0 0
    %2277 = vmatprep.subr.bf16.mxu0 0
    %2278 = vmatpush2.bf16.msra.mxu0 0
    %2279 = vmatprep.subr.bf16.mxu0 0
    %2280 = vmatpush2.bf16.msra.mxu0 0
    %2281 = vmatprep.subr.bf16.mxu0 0
    %2282 = vmatpush2.bf16.msra.mxu0 0
    %2283 = vmatprep.subr.bf16.mxu0 0
    %2284 = vmatpush2.bf16.msra.mxu0 0
    %2285 = vmatprep.subr.bf16.mxu0 0
    %2286 = vmatpush2.bf16.msra.mxu0 0
    %2287 = vmatprep.subr.bf16.mxu0 0
    %2288 = vmatpush2.bf16.msra.mxu0 0
    %2289 = vmatprep.mubr.bf16.mxu0 0
    %2290 = vmatmul.mubr.bf16.gmra.mxu0 %v2207
    %v2291 = vpop.f32.mrf.mxu0
    %v2292 = vadd.f32 0.0, %v2291
    %v2293 = vpop.f32.mrf.mxu0
    %v2294 = vpop.f32.mrf.mxu0
    %v2295 = vadd.f32 0.0, %v2294
    %v2296 = vpop.f32.mrf.mxu0
    %2297 = vdwg.mxu0
    %v2298 = vadd.f32 %v2181, %v2292
    %v2299 = vadd.f32 %v2184, %v2295
    %v2300 = vadd.f32 %v2298, %v515
    %v2301 = vadd.f32 %v2299, %v515
    %v2302 = vmax.f32 %v2300, 0.0
    %v2303 = vmax.f32 %v2301, 0.0
    %v2305 = vsel %vm525, %v2303, 0
    %2307 = vmatprep.subr.mxu0 0.0
    %2308 = vmatpush1.msra.mxu0 0.0
    %2309 = vmatprep.subr.mxu0 0.0
    %2310 = vmatpush1.msra.mxu0 0.0
    %2311 = vmatprep.subr.mxu0 0.0
    %2312 = vmatpush1.msra.mxu0 0.0
    %2313 = vmatprep.subr.mxu0 0.0
    %2314 = vmatpush1.msra.mxu0 0.0
    %2315 = vmatprep.subr.mxu0 0.0
    %2316 = vmatpush1.msra.mxu0 0.0
    %2317 = vmatprep.subr.mxu0 0.0
    %2318 = vmatpush1.msra.mxu0 0.0
    %2319 = vmatprep.subr.mxu0 0.0
    %2320 = vmatpush1.msra.mxu0 0.0
    %2321 = vmatprep.subr.mxu0 0.0
    %2322 = vmatpush1.msra.mxu0 0.0
    %2323 = vmatprep.subr.mxu0 0.0
    %2324 = vmatpush1.msra.mxu0 0.0
    %2325 = vmatprep.subr.mxu0 0.0
    %2326 = vmatpush1.msra.mxu0 0.0
    %2327 = vmatprep.subr.mxu0 0.0
    %2328 = vmatpush1.msra.mxu0 0.0
    %2329 = vmatprep.subr.mxu0 0.0
    %2330 = vmatpush1.msra.mxu0 0.0
    %2331 = vmatprep.subr.mxu0 0.0
    %2332 = vmatpush1.msra.mxu0 0.0
    %2333 = vmatprep.subr.mxu0 0.0
    %2334 = vmatpush1.msra.mxu0 0.0
    %2335 = vmatprep.subr.mxu0 0.0
    %2336 = vmatpush1.msra.mxu0 %v2305
    %2337 = vmatprep.subr.mxu0 0.0
    %2338 = vmatpush1.msra.mxu0 %v2302
    %2339 = vmatprep.subr.mxu0 0.0
    %2340 = vmatpush2.msra.mxu0 0.0
    %2341 = vmatprep.subr.mxu0 0.0
    %2342 = vmatpush2.msra.mxu0 0.0
    %2343 = vmatprep.subr.mxu0 0.0
    %2344 = vmatpush2.msra.mxu0 0.0
    %2345 = vmatprep.subr.mxu0 0.0
    %2346 = vmatpush2.msra.mxu0 0.0
    %2347 = vmatprep.subr.mxu0 0.0
    %2348 = vmatpush2.msra.mxu0 0.0
    %2349 = vmatprep.subr.mxu0 0.0
    %2350 = vmatpush2.msra.mxu0 0.0
    %2351 = vmatprep.subr.mxu0 0.0
    %2352 = vmatpush2.msra.mxu0 0.0
    %2353 = vmatprep.subr.mxu0 0.0
    %2354 = vmatpush2.msra.mxu0 0.0
    %2355 = vmatprep.subr.mxu0 0.0
    %2356 = vmatpush2.msra.mxu0 0.0
    %2357 = vmatprep.subr.mxu0 0.0
    %2358 = vmatpush2.msra.mxu0 0.0
    %2359 = vmatprep.subr.mxu0 0.0
    %2360 = vmatpush2.msra.mxu0 0.0
    %2361 = vmatprep.subr.mxu0 0.0
    %2362 = vmatpush2.msra.mxu0 0.0
    %2363 = vmatprep.subr.mxu0 0.0
    %2364 = vmatpush2.msra.mxu0 0.0
    %2365 = vmatprep.subr.mxu0 0.0
    %2366 = vmatpush2.msra.mxu0 0.0
    %2367 = vmatprep.subr.mxu0 0.0
    %2368 = vmatpush2.msra.mxu0 0.0
    %2369 = vmatprep.subr.mxu0 0.0
    %2370 = vmatpush2.msra.mxu0 0.0
    %2371 = vmatprep.mubr.f32.mxu0 0.0
    %2372 = vmatmul.mubr.f32.gmra.mxu0 %v523
    %v2373 = vpop.f32.mrf.mxu0
    %v2374 = vadd.f32 0.0, %v2373
    %v2375 = vpop.f32.mrf.mxu0
    %2376 = vdwg.mxu0
    %2377 = vmatprep.subr.mxu0 0.0
    %2378 = vmatpush1.msra.mxu0 0.0
    %2379 = vmatprep.subr.mxu0 0.0
    %2380 = vmatpush1.msra.mxu0 0.0
    %2381 = vmatprep.subr.mxu0 0.0
    %2382 = vmatpush1.msra.mxu0 0.0
    %2383 = vmatprep.subr.mxu0 0.0
    %2384 = vmatpush1.msra.mxu0 0.0
    %2385 = vmatprep.subr.mxu0 0.0
    %2386 = vmatpush1.msra.mxu0 0.0
    %2387 = vmatprep.subr.mxu0 0.0
    %2388 = vmatpush1.msra.mxu0 0.0
    %2389 = vmatprep.subr.mxu0 0.0
    %2390 = vmatpush1.msra.mxu0 0.0
    %2391 = vmatprep.subr.mxu0 0.0
    %2392 = vmatpush1.msra.mxu0 0.0
    %2393 = vmatprep.subr.mxu0 0.0
    %2394 = vmatpush1.msra.mxu0 0.0
    %2395 = vmatprep.subr.mxu0 0.0
    %2396 = vmatpush1.msra.mxu0 0.0
    %2397 = vmatprep.subr.mxu0 0.0
    %2398 = vmatpush1.msra.mxu0 0.0
    %2399 = vmatprep.subr.mxu0 0.0
    %2400 = vmatpush1.msra.mxu0 0.0
    %2401 = vmatprep.subr.mxu0 0.0
    %2402 = vmatpush1.msra.mxu0 0.0
    %2403 = vmatprep.subr.mxu0 0.0
    %2404 = vmatpush1.msra.mxu0 0.0
    %2405 = vmatprep.subr.mxu0 0.0
    %2406 = vmatpush1.msra.mxu0 %v2305
    %2407 = vmatprep.subr.mxu0 0.0
    %2408 = vmatpush1.msra.mxu0 %v2302
    %2409 = vmatprep.subr.mxu0 0.0
    %2410 = vmatpush2.msra.mxu0 0.0
    %2411 = vmatprep.subr.mxu0 0.0
    %2412 = vmatpush2.msra.mxu0 0.0
    %2413 = vmatprep.subr.mxu0 0.0
    %2414 = vmatpush2.msra.mxu0 0.0
    %2415 = vmatprep.subr.mxu0 0.0
    %2416 = vmatpush2.msra.mxu0 0.0
    %2417 = vmatprep.subr.mxu0 0.0
    %2418 = vmatpush2.msra.mxu0 0.0
    %2419 = vmatprep.subr.mxu0 0.0
    %2420 = vmatpush2.msra.mxu0 0.0
    %2421 = vmatprep.subr.mxu0 0.0
    %2422 = vmatpush2.msra.mxu0 0.0
    %2423 = vmatprep.subr.mxu0 0.0
    %2424 = vmatpush2.msra.mxu0 0.0
    %2425 = vmatprep.subr.mxu0 0.0
    %2426 = vmatpush2.msra.mxu0 0.0
    %2427 = vmatprep.subr.mxu0 0.0
    %2428 = vmatpush2.msra.mxu0 0.0
    %2429 = vmatprep.subr.mxu0 0.0
    %2430 = vmatpush2.msra.mxu0 0.0
    %2431 = vmatprep.subr.mxu0 0.0
    %2432 = vmatpush2.msra.mxu0 0.0
    %2433 = vmatprep.subr.mxu0 0.0
    %2434 = vmatpush2.msra.mxu0 0.0
    %2435 = vmatprep.subr.mxu0 0.0
    %2436 = vmatpush2.msra.mxu0 0.0
    %2437 = vmatprep.subr.mxu0 0.0
    %2438 = vmatpush2.msra.mxu0 0.0
    %2439 = vmatprep.subr.mxu0 0.0
    %2440 = vmatpush2.msra.mxu0 0.0
    %2441 = vmatprep.mubr.f32.mxu0 0.0
    %2442 = vmatmul.mubr.f32.gmra.mxu0 %v600
    %v2443 = vpop.f32.mrf.mxu0
    %v2444 = vadd.f32 0.0, %v2443
    %v2445 = vpop.f32.mrf.mxu0
    %2446 = vdwg.mxu0
    %v2447 = vmax.f32 %v2374, %v2444
    %2448 = vmatprep.subr.mxu0 0.0
    %2449 = vmatpush1.msra.mxu0 %v148
    %2450 = vmatprep.subr.mxu0 0.0
    %2451 = vmatpush1.msra.mxu0 %v147
    %2452 = vmatprep.subr.mxu0 0.0
    %2453 = vmatpush1.msra.mxu0 %v146
    %2454 = vmatprep.subr.mxu0 0.0
    %2455 = vmatpush1.msra.mxu0 %v145
    %2456 = vmatprep.subr.mxu0 0.0
    %2457 = vmatpush1.msra.mxu0 %v144
    %2458 = vmatprep.subr.mxu0 0.0
    %2459 = vmatpush1.msra.mxu0 %v143
    %2460 = vmatprep.subr.mxu0 0.0
    %2461 = vmatpush1.msra.mxu0 %v142
    %2462 = vmatprep.subr.mxu0 0.0
    %2463 = vmatpush1.msra.mxu0 %v141
    %2464 = vmatprep.subr.mxu0 0.0
    %2465 = vmatpush1.msra.mxu0 %v140
    %2466 = vmatprep.subr.mxu0 0.0
    %2467 = vmatpush1.msra.mxu0 %v139
    %2468 = vmatprep.subr.mxu0 0.0
    %2469 = vmatpush1.msra.mxu0 %v138
    %2470 = vmatprep.subr.mxu0 0.0
    %2471 = vmatpush1.msra.mxu0 %v137
    %2472 = vmatprep.subr.mxu0 0.0
    %2473 = vmatpush1.msra.mxu0 %v136
    %2474 = vmatprep.subr.mxu0 0.0
    %2475 = vmatpush1.msra.mxu0 %v135
    %2476 = vmatprep.subr.mxu0 0.0
    %2477 = vmatpush1.msra.mxu0 %v134
    %2478 = vmatprep.subr.mxu0 0.0
    %2479 = vmatpush1.msra.mxu0 %v133
    %2480 = vmatprep.subr.mxu0 0.0
    %2481 = vmatpush2.msra.mxu0 0.0
    %2482 = vmatprep.subr.mxu0 0.0
    %2483 = vmatpush2.msra.mxu0 0.0
    %2484 = vmatprep.subr.mxu0 0.0
    %2485 = vmatpush2.msra.mxu0 0.0
    %2486 = vmatprep.subr.mxu0 0.0
    %2487 = vmatpush2.msra.mxu0 0.0
    %2488 = vmatprep.subr.mxu0 0.0
    %2489 = vmatpush2.msra.mxu0 0.0
    %2490 = vmatprep.subr.mxu0 0.0
    %2491 = vmatpush2.msra.mxu0 0.0
    %2492 = vmatprep.subr.mxu0 0.0
    %2493 = vmatpush2.msra.mxu0 0.0
    %2494 = vmatprep.subr.mxu0 0.0
    %2495 = vmatpush2.msra.mxu0 0.0
    %2496 = vmatprep.subr.mxu0 0.0
    %2497 = vmatpush2.msra.mxu0 0.0
    %2498 = vmatprep.subr.mxu0 0.0
    %2499 = vmatpush2.msra.mxu0 0.0
    %2500 = vmatprep.subr.mxu0 0.0
    %2501 = vmatpush2.msra.mxu0 0.0
    %2502 = vmatprep.subr.mxu0 0.0
    %2503 = vmatpush2.msra.mxu0 0.0
    %2504 = vmatprep.subr.mxu0 0.0
    %2505 = vmatpush2.msra.mxu0 0.0
    %2506 = vmatprep.subr.mxu0 0.0
    %2507 = vmatpush2.msra.mxu0 0.0
    %2508 = vmatprep.subr.mxu0 0.0
    %2509 = vmatpush2.msra.mxu0 0.0
    %2510 = vmatprep.subr.mxu0 0.0
    %2511 = vmatpush2.msra.mxu0 0.0
    %2512 = vmatprep.mubr.f32.mxu0 0.0
    %2513 = vmatmul.mubr.f32.gmra.mxu0 %v2447
    %v2514 = vpop.f32.mrf.mxu0
    %v2515 = vadd.f32 0.0, %v2514
    %v2516 = vpop.f32.mrf.mxu0
    %2517 = vdwg.mxu0
    %2518 = vmatprep.subr.mxu0 0.0
    %2519 = vmatpush1.msra.mxu0 %v164
    %2520 = vmatprep.subr.mxu0 0.0
    %2521 = vmatpush1.msra.mxu0 %v163
    %2522 = vmatprep.subr.mxu0 0.0
    %2523 = vmatpush1.msra.mxu0 %v162
    %2524 = vmatprep.subr.mxu0 0.0
    %2525 = vmatpush1.msra.mxu0 %v161
    %2526 = vmatprep.subr.mxu0 0.0
    %2527 = vmatpush1.msra.mxu0 %v160
    %2528 = vmatprep.subr.mxu0 0.0
    %2529 = vmatpush1.msra.mxu0 %v159
    %2530 = vmatprep.subr.mxu0 0.0
    %2531 = vmatpush1.msra.mxu0 %v158
    %2532 = vmatprep.subr.mxu0 0.0
    %2533 = vmatpush1.msra.mxu0 %v157
    %2534 = vmatprep.subr.mxu0 0.0
    %2535 = vmatpush1.msra.mxu0 %v156
    %2536 = vmatprep.subr.mxu0 0.0
    %2537 = vmatpush1.msra.mxu0 %v155
    %2538 = vmatprep.subr.mxu0 0.0
    %2539 = vmatpush1.msra.mxu0 %v154
    %2540 = vmatprep.subr.mxu0 0.0
    %2541 = vmatpush1.msra.mxu0 %v153
    %2542 = vmatprep.subr.mxu0 0.0
    %2543 = vmatpush1.msra.mxu0 %v152
    %2544 = vmatprep.subr.mxu0 0.0
    %2545 = vmatpush1.msra.mxu0 %v151
    %2546 = vmatprep.subr.mxu0 0.0
    %2547 = vmatpush1.msra.mxu0 %v150
    %2548 = vmatprep.subr.mxu0 0.0
    %2549 = vmatpush1.msra.mxu0 %v149
    %2550 = vmatprep.subr.mxu0 0.0
    %2551 = vmatpush2.msra.mxu0 0.0
    %2552 = vmatprep.subr.mxu0 0.0
    %2553 = vmatpush2.msra.mxu0 0.0
    %2554 = vmatprep.subr.mxu0 0.0
    %2555 = vmatpush2.msra.mxu0 0.0
    %2556 = vmatprep.subr.mxu0 0.0
    %2557 = vmatpush2.msra.mxu0 0.0
    %2558 = vmatprep.subr.mxu0 0.0
    %2559 = vmatpush2.msra.mxu0 0.0
    %2560 = vmatprep.subr.mxu0 0.0
    %2561 = vmatpush2.msra.mxu0 0.0
    %2562 = vmatprep.subr.mxu0 0.0
    %2563 = vmatpush2.msra.mxu0 0.0
    %2564 = vmatprep.subr.mxu0 0.0
    %2565 = vmatpush2.msra.mxu0 0.0
    %2566 = vmatprep.subr.mxu0 0.0
    %2567 = vmatpush2.msra.mxu0 0.0
    %2568 = vmatprep.subr.mxu0 0.0
    %2569 = vmatpush2.msra.mxu0 0.0
    %2570 = vmatprep.subr.mxu0 0.0
    %2571 = vmatpush2.msra.mxu0 0.0
    %2572 = vmatprep.subr.mxu0 0.0
    %2573 = vmatpush2.msra.mxu0 0.0
    %2574 = vmatprep.subr.mxu0 0.0
    %2575 = vmatpush2.msra.mxu0 0.0
    %2576 = vmatprep.subr.mxu0 0.0
    %2577 = vmatpush2.msra.mxu0 0.0
    %2578 = vmatprep.subr.mxu0 0.0
    %2579 = vmatpush2.msra.mxu0 0.0
    %2580 = vmatprep.subr.mxu0 0.0
    %2581 = vmatpush2.msra.mxu0 0.0
    %2582 = vmatprep.mubr.f32.mxu0 0.0
    %2583 = vmatmul.mubr.f32.gmra.mxu0 %v2447
    %v2584 = vpop.f32.mrf.mxu0
    %v2585 = vadd.f32 0.0, %v2584
    %v2586 = vpop.f32.mrf.mxu0
    %2587 = vdwg.mxu0
    %v2588 = vmax.f32 %v2515, %v2585
    %s2589 = scalar_lea.vmem [#allocation2], 8
    %2590 = vst [vmem:[%s2589] sm:$0x7f] %v2588
    %v2591 = vld [vmem:[%s2589] sm:$0x1f]
    %v2592 = vpack.c.bf16 %v2591, %v2591
    %v2593 = vld [vmem:[%s7] sm:$0xf]
    %v2594 = vld [vmem:[%s7 + $0x4] sm:$0xf]
    %v2595 = vld [vmem:[%s7 + $0x8] sm:$0xf]
    %v2596 = vld [vmem:[%s7 + $0xc] sm:$0xf]
    %v2597 = vld [vmem:[%s7 + $0x10] sm:$0xf]
    %v2598 = vld [vmem:[%s7 + $0x14] sm:$0xf]
    %v2599 = vld [vmem:[%s7 + $0x18] sm:$0xf]
    %v2600 = vld [vmem:[%s7 + $0x1c] sm:$0xf]
    %v2601 = vld [vmem:[%s7 + $0x20] sm:$0xf]
    %v2602 = vld [vmem:[%s7 + $0x24] sm:$0xf]
    %v2603 = vld [vmem:[%s7 + $0x28] sm:$0xf]
    %v2604 = vld [vmem:[%s7 + $0x2c] sm:$0xf]
    %v2605 = vld [vmem:[%s7 + $0x30] sm:$0xf]
    %v2606 = vld [vmem:[%s7 + $0x34] sm:$0xf]
    %v2607 = vld [vmem:[%s7 + $0x38] sm:$0xf]
    %v2608 = vld [vmem:[%s7 + $0x3c] sm:$0xf]
    %v2609 = vld [vmem:[%s2589 + $0x1] sm:$0x1f]
    %v2610 = vpack.c.bf16 %v2609, %v2609
    %v2611 = vld [vmem:[%s835] sm:$0xf]
    %v2612 = vld [vmem:[%s835 + $0x4] sm:$0xf]
    %v2613 = vld [vmem:[%s835 + $0x8] sm:$0xf]
    %v2614 = vld [vmem:[%s835 + $0xc] sm:$0xf]
    %v2615 = vld [vmem:[%s835 + $0x10] sm:$0xf]
    %v2616 = vld [vmem:[%s835 + $0x14] sm:$0xf]
    %v2617 = vld [vmem:[%s835 + $0x18] sm:$0xf]
    %v2618 = vld [vmem:[%s835 + $0x1c] sm:$0xf]
    %v2619 = vld [vmem:[%s835 + $0x20] sm:$0xf]
    %v2620 = vld [vmem:[%s835 + $0x24] sm:$0xf]
    %v2621 = vld [vmem:[%s835 + $0x28] sm:$0xf]
    %v2622 = vld [vmem:[%s835 + $0x2c] sm:$0xf]
    %v2623 = vld [vmem:[%s835 + $0x30] sm:$0xf]
    %v2624 = vld [vmem:[%s835 + $0x34] sm:$0xf]
    %v2625 = vld [vmem:[%s835 + $0x38] sm:$0xf]
    %v2626 = vld [vmem:[%s835 + $0x3c] sm:$0xf]
    %v2643 = vunpack.c.l.b16 %v2611
    %v2644 = vunpack.c.l.b16 %v2612
    %v2645 = vunpack.c.l.b16 %v2613
    %v2646 = vunpack.c.l.b16 %v2614
    %v2647 = vunpack.c.l.b16 %v2615
    %v2648 = vunpack.c.l.b16 %v2616
    %v2649 = vunpack.c.l.b16 %v2617
    %v2650 = vunpack.c.l.b16 %v2618
    %v2651 = vunpack.c.l.b16 %v2619
    %v2652 = vunpack.c.l.b16 %v2620
    %v2653 = vunpack.c.l.b16 %v2621
    %v2654 = vunpack.c.l.b16 %v2622
    %v2655 = vunpack.c.l.b16 %v2623
    %v2656 = vunpack.c.l.b16 %v2624
    %v2657 = vunpack.c.l.b16 %v2625
    %v2658 = vunpack.c.l.b16 %v2626
    %v2659 = vpack.c.b16 %v2644, %v2643
    %v2660 = vpack.c.b16 %v2646, %v2645
    %v2661 = vpack.c.b16 %v2648, %v2647
    %v2662 = vpack.c.b16 %v2650, %v2649
    %v2663 = vpack.c.b16 %v2652, %v2651
    %v2664 = vpack.c.b16 %v2654, %v2653
    %v2665 = vpack.c.b16 %v2656, %v2655
    %v2666 = vpack.c.b16 %v2658, %v2657
    %2675 = vmatprep.subr.bf16.mxu0 0
    %2676 = vmatpush1.bf16.msra.mxu0 %v2666
    %2677 = vmatprep.subr.bf16.mxu0 0
    %2678 = vmatpush1.bf16.msra.mxu0 %v2665
    %2679 = vmatprep.subr.bf16.mxu0 0
    %2680 = vmatpush1.bf16.msra.mxu0 %v2664
    %2681 = vmatprep.subr.bf16.mxu0 0
    %2682 = vmatpush1.bf16.msra.mxu0 %v2663
    %2683 = vmatprep.subr.bf16.mxu0 0
    %2684 = vmatpush1.bf16.msra.mxu0 %v2662
    %2685 = vmatprep.subr.bf16.mxu0 0
    %2686 = vmatpush1.bf16.msra.mxu0 %v2661
    %2687 = vmatprep.subr.bf16.mxu0 0
    %2688 = vmatpush1.bf16.msra.mxu0 %v2660
    %2689 = vmatprep.subr.bf16.mxu0 0
    %2690 = vmatpush1.bf16.msra.mxu0 %v2659
    %2691 = vmatprep.subr.bf16.mxu0 0
    %2692 = vmatpush2.bf16.msra.mxu0 0
    %2693 = vmatprep.subr.bf16.mxu0 0
    %2694 = vmatpush2.bf16.msra.mxu0 0
    %2695 = vmatprep.subr.bf16.mxu0 0
    %2696 = vmatpush2.bf16.msra.mxu0 0
    %2697 = vmatprep.subr.bf16.mxu0 0
    %2698 = vmatpush2.bf16.msra.mxu0 0
    %2699 = vmatprep.subr.bf16.mxu0 0
    %2700 = vmatpush2.bf16.msra.mxu0 0
    %2701 = vmatprep.subr.bf16.mxu0 0
    %2702 = vmatpush2.bf16.msra.mxu0 0
    %2703 = vmatprep.subr.bf16.mxu0 0
    %2704 = vmatpush2.bf16.msra.mxu0 0
    %2705 = vmatprep.subr.bf16.mxu0 0
    %2706 = vmatpush2.bf16.msra.mxu0 0
    %2707 = vmatprep.mubr.bf16.mxu0 0
    %2708 = vmatmul.mubr.bf16.gmra.mxu0 %v2610
    %v2709 = vpop.f32.mrf.mxu0
    %v2710 = vadd.f32 0.0, %v2709
    %v2711 = vpop.f32.mrf.mxu0
    %v2712 = vpop.f32.mrf.mxu0
    %v2713 = vpop.f32.mrf.mxu0
    %2714 = vdwg.mxu0
    %v2731 = vunpack.c.l.b16 %v2593
    %v2732 = vunpack.c.l.b16 %v2594
    %v2733 = vunpack.c.l.b16 %v2595
    %v2734 = vunpack.c.l.b16 %v2596
    %v2735 = vunpack.c.l.b16 %v2597
    %v2736 = vunpack.c.l.b16 %v2598
    %v2737 = vunpack.c.l.b16 %v2599
    %v2738 = vunpack.c.l.b16 %v2600
    %v2739 = vunpack.c.l.b16 %v2601
    %v2740 = vunpack.c.l.b16 %v2602
    %v2741 = vunpack.c.l.b16 %v2603
    %v2742 = vunpack.c.l.b16 %v2604
    %v2743 = vunpack.c.l.b16 %v2605
    %v2744 = vunpack.c.l.b16 %v2606
    %v2745 = vunpack.c.l.b16 %v2607
    %v2746 = vunpack.c.l.b16 %v2608
    %v2747 = vpack.c.b16 %v2732, %v2731
    %v2748 = vpack.c.b16 %v2734, %v2733
    %v2749 = vpack.c.b16 %v2736, %v2735
    %v2750 = vpack.c.b16 %v2738, %v2737
    %v2751 = vpack.c.b16 %v2740, %v2739
    %v2752 = vpack.c.b16 %v2742, %v2741
    %v2753 = vpack.c.b16 %v2744, %v2743
    %v2754 = vpack.c.b16 %v2746, %v2745
    %2763 = vmatprep.subr.bf16.mxu0 0
    %2764 = vmatpush1.bf16.msra.mxu0 %v2754
    %2765 = vmatprep.subr.bf16.mxu0 0
    %2766 = vmatpush1.bf16.msra.mxu0 %v2753
    %2767 = vmatprep.subr.bf16.mxu0 0
    %2768 = vmatpush1.bf16.msra.mxu0 %v2752
    %2769 = vmatprep.subr.bf16.mxu0 0
    %2770 = vmatpush1.bf16.msra.mxu0 %v2751
    %2771 = vmatprep.subr.bf16.mxu0 0
    %2772 = vmatpush1.bf16.msra.mxu0 %v2750
    %2773 = vmatprep.subr.bf16.mxu0 0
    %2774 = vmatpush1.bf16.msra.mxu0 %v2749
    %2775 = vmatprep.subr.bf16.mxu0 0
    %2776 = vmatpush1.bf16.msra.mxu0 %v2748
    %2777 = vmatprep.subr.bf16.mxu0 0
    %2778 = vmatpush1.bf16.msra.mxu0 %v2747
    %2779 = vmatprep.subr.bf16.mxu0 0
    %2780 = vmatpush2.bf16.msra.mxu0 0
    %2781 = vmatprep.subr.bf16.mxu0 0
    %2782 = vmatpush2.bf16.msra.mxu0 0
    %2783 = vmatprep.subr.bf16.mxu0 0
    %2784 = vmatpush2.bf16.msra.mxu0 0
    %2785 = vmatprep.subr.bf16.mxu0 0
    %2786 = vmatpush2.bf16.msra.mxu0 0
    %2787 = vmatprep.subr.bf16.mxu0 0
    %2788 = vmatpush2.bf16.msra.mxu0 0
    %2789 = vmatprep.subr.bf16.mxu0 0
    %2790 = vmatpush2.bf16.msra.mxu0 0
    %2791 = vmatprep.subr.bf16.mxu0 0
    %2792 = vmatpush2.bf16.msra.mxu0 0
    %2793 = vmatprep.subr.bf16.mxu0 0
    %2794 = vmatpush2.bf16.msra.mxu0 0
    %2795 = vmatprep.mubr.bf16.mxu0 0
    %2796 = vmatmul.mubr.bf16.gmra.mxu0 %v2592
    %v2797 = vpop.f32.mrf.mxu0
    %v2798 = vadd.f32 %v2710, %v2797
    %v2799 = vpop.f32.mrf.mxu0
    %v2800 = vpop.f32.mrf.mxu0
    %v2801 = vpop.f32.mrf.mxu0
    %2802 = vdwg.mxu0
    %v2803 = vld [vmem:[%s2589 + $0x2] sm:$0x1f]
    %v2804 = vpack.c.bf16 %v2803, %v2803
    %v2805 = vld [vmem:[%s1030] sm:$0xf]
    %v2806 = vld [vmem:[%s1030 + $0x4] sm:$0xf]
    %v2807 = vld [vmem:[%s1030 + $0x8] sm:$0xf]
    %v2808 = vld [vmem:[%s1030 + $0xc] sm:$0xf]
    %v2809 = vld [vmem:[%s1030 + $0x10] sm:$0xf]
    %v2810 = vld [vmem:[%s1030 + $0x14] sm:$0xf]
    %v2811 = vld [vmem:[%s1030 + $0x18] sm:$0xf]
    %v2812 = vld [vmem:[%s1030 + $0x1c] sm:$0xf]
    %v2813 = vld [vmem:[%s1030 + $0x20] sm:$0xf]
    %v2814 = vld [vmem:[%s1030 + $0x24] sm:$0xf]
    %v2815 = vld [vmem:[%s1030 + $0x28] sm:$0xf]
    %v2816 = vld [vmem:[%s1030 + $0x2c] sm:$0xf]
    %v2817 = vld [vmem:[%s1030 + $0x30] sm:$0xf]
    %v2818 = vld [vmem:[%s1030 + $0x34] sm:$0xf]
    %v2819 = vld [vmem:[%s1030 + $0x38] sm:$0xf]
    %v2820 = vld [vmem:[%s1030 + $0x3c] sm:$0xf]
    %v2837 = vunpack.c.l.b16 %v2805
    %v2838 = vunpack.c.l.b16 %v2806
    %v2839 = vunpack.c.l.b16 %v2807
    %v2840 = vunpack.c.l.b16 %v2808
    %v2841 = vunpack.c.l.b16 %v2809
    %v2842 = vunpack.c.l.b16 %v2810
    %v2843 = vunpack.c.l.b16 %v2811
    %v2844 = vunpack.c.l.b16 %v2812
    %v2845 = vunpack.c.l.b16 %v2813
    %v2846 = vunpack.c.l.b16 %v2814
    %v2847 = vunpack.c.l.b16 %v2815
    %v2848 = vunpack.c.l.b16 %v2816
    %v2849 = vunpack.c.l.b16 %v2817
    %v2850 = vunpack.c.l.b16 %v2818
    %v2851 = vunpack.c.l.b16 %v2819
    %v2852 = vunpack.c.l.b16 %v2820
    %v2853 = vpack.c.b16 %v2838, %v2837
    %v2854 = vpack.c.b16 %v2840, %v2839
    %v2855 = vpack.c.b16 %v2842, %v2841
    %v2856 = vpack.c.b16 %v2844, %v2843
    %v2857 = vpack.c.b16 %v2846, %v2845
    %v2858 = vpack.c.b16 %v2848, %v2847
    %v2859 = vpack.c.b16 %v2850, %v2849
    %v2860 = vpack.c.b16 %v2852, %v2851
    %2869 = vmatprep.subr.bf16.mxu0 0
    %2870 = vmatpush1.bf16.msra.mxu0 %v2860
    %2871 = vmatprep.subr.bf16.mxu0 0
    %2872 = vmatpush1.bf16.msra.mxu0 %v2859
    %2873 = vmatprep.subr.bf16.mxu0 0
    %2874 = vmatpush1.bf16.msra.mxu0 %v2858
    %2875 = vmatprep.subr.bf16.mxu0 0
    %2876 = vmatpush1.bf16.msra.mxu0 %v2857
    %2877 = vmatprep.subr.bf16.mxu0 0
    %2878 = vmatpush1.bf16.msra.mxu0 %v2856
    %2879 = vmatprep.subr.bf16.mxu0 0
    %2880 = vmatpush1.bf16.msra.mxu0 %v2855
    %2881 = vmatprep.subr.bf16.mxu0 0
    %2882 = vmatpush1.bf16.msra.mxu0 %v2854
    %2883 = vmatprep.subr.bf16.mxu0 0
    %2884 = vmatpush1.bf16.msra.mxu0 %v2853
    %2885 = vmatprep.subr.bf16.mxu0 0
    %2886 = vmatpush2.bf16.msra.mxu0 0
    %2887 = vmatprep.subr.bf16.mxu0 0
    %2888 = vmatpush2.bf16.msra.mxu0 0
    %2889 = vmatprep.subr.bf16.mxu0 0
    %2890 = vmatpush2.bf16.msra.mxu0 0
    %2891 = vmatprep.subr.bf16.mxu0 0
    %2892 = vmatpush2.bf16.msra.mxu0 0
    %2893 = vmatprep.subr.bf16.mxu0 0
    %2894 = vmatpush2.bf16.msra.mxu0 0
    %2895 = vmatprep.subr.bf16.mxu0 0
    %2896 = vmatpush2.bf16.msra.mxu0 0
    %2897 = vmatprep.subr.bf16.mxu0 0
    %2898 = vmatpush2.bf16.msra.mxu0 0
    %2899 = vmatprep.subr.bf16.mxu0 0
    %2900 = vmatpush2.bf16.msra.mxu0 0
    %2901 = vmatprep.mubr.bf16.mxu0 0
    %2902 = vmatmul.mubr.bf16.gmra.mxu0 %v2804
    %v2903 = vpop.f32.mrf.mxu0
    %v2904 = vadd.f32 0.0, %v2903
    %v2905 = vpop.f32.mrf.mxu0
    %v2906 = vpop.f32.mrf.mxu0
    %v2907 = vpop.f32.mrf.mxu0
    %2908 = vdwg.mxu0
    %v2909 = vadd.f32 %v2798, %v2904
    %v2910 = vadd.f32 %v2909, %v1140
    %v2911 = vmax.f32 %v2910, 0.0
    %s2912 = scalar_lea.vmem [#allocation3], 8
    %2913 = vst [vmem:[%s2912] sm:$0x1f] %v2911
    %v2914 = vld [vmem:[%s2912] sm:$0x7]
    %v2915 = vpack.c.bf16 %v2914, %v2914
    %v2916 = vld [vmem:[%s9] sm:$0xf]
    %v2917 = vld [vmem:[%s9 + $0x4] sm:$0xf]
    %v2918 = vld [vmem:[%s9 + $0x8] sm:$0xf]
    %v2919 = vld [vmem:[%s9 + $0xc] sm:$0xf]
    %v2920 = vld [vmem:[%s9 + $0x10] sm:$0xf]
    %v2921 = vld [vmem:[%s9 + $0x14] sm:$0xf]
    %v2922 = vld [vmem:[%s9 + $0x18] sm:$0xf]
    %v2923 = vld [vmem:[%s9 + $0x1c] sm:$0xf]
    %v2924 = vld [vmem:[%s9 + $0x20] sm:$0xf]
    %v2925 = vld [vmem:[%s9 + $0x24] sm:$0xf]
    %v2926 = vld [vmem:[%s9 + $0x28] sm:$0xf]
    %v2927 = vld [vmem:[%s9 + $0x2c] sm:$0xf]
    %v2928 = vld [vmem:[%s9 + $0x30] sm:$0xf]
    %v2929 = vld [vmem:[%s9 + $0x34] sm:$0xf]
    %v2930 = vld [vmem:[%s9 + $0x38] sm:$0xf]
    %v2931 = vld [vmem:[%s9 + $0x3c] sm:$0xf]
    %v2932 = vld [vmem:[%s2912 + $0x1] sm:$0x7]
    %v2933 = vpack.c.bf16 %v2932, %v2932
    %v2934 = vld [vmem:[%s1165] sm:$0xf]
    %v2935 = vld [vmem:[%s1165 + $0x4] sm:$0xf]
    %v2936 = vld [vmem:[%s1165 + $0x8] sm:$0xf]
    %v2937 = vld [vmem:[%s1165 + $0xc] sm:$0xf]
    %v2938 = vld [vmem:[%s1165 + $0x10] sm:$0xf]
    %v2939 = vld [vmem:[%s1165 + $0x14] sm:$0xf]
    %v2940 = vld [vmem:[%s1165 + $0x18] sm:$0xf]
    %v2941 = vld [vmem:[%s1165 + $0x1c] sm:$0xf]
    %v2942 = vld [vmem:[%s1165 + $0x20] sm:$0xf]
    %v2943 = vld [vmem:[%s1165 + $0x24] sm:$0xf]
    %v2944 = vld [vmem:[%s1165 + $0x28] sm:$0xf]
    %v2945 = vld [vmem:[%s1165 + $0x2c] sm:$0xf]
    %v2946 = vld [vmem:[%s1165 + $0x30] sm:$0xf]
    %v2947 = vld [vmem:[%s1165 + $0x34] sm:$0xf]
    %v2948 = vld [vmem:[%s1165 + $0x38] sm:$0xf]
    %v2949 = vld [vmem:[%s1165 + $0x3c] sm:$0xf]
    %v2966 = vunpack.c.l.b16 %v2934
    %v2967 = vunpack.c.l.b16 %v2935
    %v2968 = vunpack.c.l.b16 %v2936
    %v2969 = vunpack.c.l.b16 %v2937
    %v2970 = vunpack.c.l.b16 %v2938
    %v2971 = vunpack.c.l.b16 %v2939
    %v2972 = vunpack.c.l.b16 %v2940
    %v2973 = vunpack.c.l.b16 %v2941
    %v2974 = vunpack.c.l.b16 %v2942
    %v2975 = vunpack.c.l.b16 %v2943
    %v2976 = vunpack.c.l.b16 %v2944
    %v2977 = vunpack.c.l.b16 %v2945
    %v2978 = vunpack.c.l.b16 %v2946
    %v2979 = vunpack.c.l.b16 %v2947
    %v2980 = vunpack.c.l.b16 %v2948
    %v2981 = vunpack.c.l.b16 %v2949
    %v2982 = vpack.c.b16 %v2967, %v2966
    %v2983 = vpack.c.b16 %v2969, %v2968
    %v2984 = vpack.c.b16 %v2971, %v2970
    %v2985 = vpack.c.b16 %v2973, %v2972
    %v2986 = vpack.c.b16 %v2975, %v2974
    %v2987 = vpack.c.b16 %v2977, %v2976
    %v2988 = vpack.c.b16 %v2979, %v2978
    %v2989 = vpack.c.b16 %v2981, %v2980
    %2998 = vmatprep.subr.bf16.mxu0 0
    %2999 = vmatpush1.bf16.msra.mxu0 %v2989
    %3000 = vmatprep.subr.bf16.mxu0 0
    %3001 = vmatpush1.bf16.msra.mxu0 %v2988
    %3002 = vmatprep.subr.bf16.mxu0 0
    %3003 = vmatpush1.bf16.msra.mxu0 %v2987
    %3004 = vmatprep.subr.bf16.mxu0 0
    %3005 = vmatpush1.bf16.msra.mxu0 %v2986
    %3006 = vmatprep.subr.bf16.mxu0 0
    %3007 = vmatpush1.bf16.msra.mxu0 %v2985
    %3008 = vmatprep.subr.bf16.mxu0 0
    %3009 = vmatpush1.bf16.msra.mxu0 %v2984
    %3010 = vmatprep.subr.bf16.mxu0 0
    %3011 = vmatpush1.bf16.msra.mxu0 %v2983
    %3012 = vmatprep.subr.bf16.mxu0 0
    %3013 = vmatpush1.bf16.msra.mxu0 %v2982
    %3014 = vmatprep.subr.bf16.mxu0 0
    %3015 = vmatpush2.bf16.msra.mxu0 0
    %3016 = vmatprep.subr.bf16.mxu0 0
    %3017 = vmatpush2.bf16.msra.mxu0 0
    %3018 = vmatprep.subr.bf16.mxu0 0
    %3019 = vmatpush2.bf16.msra.mxu0 0
    %3020 = vmatprep.subr.bf16.mxu0 0
    %3021 = vmatpush2.bf16.msra.mxu0 0
    %3022 = vmatprep.subr.bf16.mxu0 0
    %3023 = vmatpush2.bf16.msra.mxu0 0
    %3024 = vmatprep.subr.bf16.mxu0 0
    %3025 = vmatpush2.bf16.msra.mxu0 0
    %3026 = vmatprep.subr.bf16.mxu0 0
    %3027 = vmatpush2.bf16.msra.mxu0 0
    %3028 = vmatprep.subr.bf16.mxu0 0
    %3029 = vmatpush2.bf16.msra.mxu0 0
    %3030 = vmatprep.mubr.bf16.mxu0 0
    %3031 = vmatmul.mubr.bf16.gmra.mxu0 %v2933
    %v3032 = vpop.f32.mrf.mxu0
    %v3033 = vadd.f32 0.0, %v3032
    %v3034 = vpop.f32.mrf.mxu0
    %v3035 = vpop.f32.mrf.mxu0
    %v3036 = vpop.f32.mrf.mxu0
    %3037 = vdwg.mxu0
    %v3054 = vunpack.c.l.b16 %v2916
    %v3055 = vunpack.c.l.b16 %v2917
    %v3056 = vunpack.c.l.b16 %v2918
    %v3057 = vunpack.c.l.b16 %v2919
    %v3058 = vunpack.c.l.b16 %v2920
    %v3059 = vunpack.c.l.b16 %v2921
    %v3060 = vunpack.c.l.b16 %v2922
    %v3061 = vunpack.c.l.b16 %v2923
    %v3062 = vunpack.c.l.b16 %v2924
    %v3063 = vunpack.c.l.b16 %v2925
    %v3064 = vunpack.c.l.b16 %v2926
    %v3065 = vunpack.c.l.b16 %v2927
    %v3066 = vunpack.c.l.b16 %v2928
    %v3067 = vunpack.c.l.b16 %v2929
    %v3068 = vunpack.c.l.b16 %v2930
    %v3069 = vunpack.c.l.b16 %v2931
    %v3070 = vpack.c.b16 %v3055, %v3054
    %v3071 = vpack.c.b16 %v3057, %v3056
    %v3072 = vpack.c.b16 %v3059, %v3058
    %v3073 = vpack.c.b16 %v3061, %v3060
    %v3074 = vpack.c.b16 %v3063, %v3062
    %v3075 = vpack.c.b16 %v3065, %v3064
    %v3076 = vpack.c.b16 %v3067, %v3066
    %v3077 = vpack.c.b16 %v3069, %v3068
    %3086 = vmatprep.subr.bf16.mxu0 0
    %3087 = vmatpush1.bf16.msra.mxu0 %v3077
    %3088 = vmatprep.subr.bf16.mxu0 0
    %3089 = vmatpush1.bf16.msra.mxu0 %v3076
    %3090 = vmatprep.subr.bf16.mxu0 0
    %3091 = vmatpush1.bf16.msra.mxu0 %v3075
    %3092 = vmatprep.subr.bf16.mxu0 0
    %3093 = vmatpush1.bf16.msra.mxu0 %v3074
    %3094 = vmatprep.subr.bf16.mxu0 0
    %3095 = vmatpush1.bf16.msra.mxu0 %v3073
    %3096 = vmatprep.subr.bf16.mxu0 0
    %3097 = vmatpush1.bf16.msra.mxu0 %v3072
    %3098 = vmatprep.subr.bf16.mxu0 0
    %3099 = vmatpush1.bf16.msra.mxu0 %v3071
    %3100 = vmatprep.subr.bf16.mxu0 0
    %3101 = vmatpush1.bf16.msra.mxu0 %v3070
    %3102 = vmatprep.subr.bf16.mxu0 0
    %3103 = vmatpush2.bf16.msra.mxu0 0
    %3104 = vmatprep.subr.bf16.mxu0 0
    %3105 = vmatpush2.bf16.msra.mxu0 0
    %3106 = vmatprep.subr.bf16.mxu0 0
    %3107 = vmatpush2.bf16.msra.mxu0 0
    %3108 = vmatprep.subr.bf16.mxu0 0
    %3109 = vmatpush2.bf16.msra.mxu0 0
    %3110 = vmatprep.subr.bf16.mxu0 0
    %3111 = vmatpush2.bf16.msra.mxu0 0
    %3112 = vmatprep.subr.bf16.mxu0 0
    %3113 = vmatpush2.bf16.msra.mxu0 0
    %3114 = vmatprep.subr.bf16.mxu0 0
    %3115 = vmatpush2.bf16.msra.mxu0 0
    %3116 = vmatprep.subr.bf16.mxu0 0
    %3117 = vmatpush2.bf16.msra.mxu0 0
    %3118 = vmatprep.mubr.bf16.mxu0 0
    %3119 = vmatmul.mubr.bf16.gmra.mxu0 %v2915
    %v3120 = vpop.f32.mrf.mxu0
    %v3121 = vadd.f32 %v3033, %v3120
    %v3122 = vpop.f32.mrf.mxu0
    %v3123 = vpop.f32.mrf.mxu0
    %v3124 = vpop.f32.mrf.mxu0
    %3125 = vdwg.mxu0
    %v3126 = vld [vmem:[%s2912 + $0x2] sm:$0x7]
    %v3127 = vpack.c.bf16 %v3126, %v3126
    %v3128 = vld [vmem:[%s1360] sm:$0xf]
    %v3129 = vld [vmem:[%s1360 + $0x4] sm:$0xf]
    %v3130 = vld [vmem:[%s1360 + $0x8] sm:$0xf]
    %v3131 = vld [vmem:[%s1360 + $0xc] sm:$0xf]
    %v3132 = vld [vmem:[%s1360 + $0x10] sm:$0xf]
    %v3133 = vld [vmem:[%s1360 + $0x14] sm:$0xf]
    %v3134 = vld [vmem:[%s1360 + $0x18] sm:$0xf]
    %v3135 = vld [vmem:[%s1360 + $0x1c] sm:$0xf]
    %v3136 = vld [vmem:[%s1360 + $0x20] sm:$0xf]
    %v3137 = vld [vmem:[%s1360 + $0x24] sm:$0xf]
    %v3138 = vld [vmem:[%s1360 + $0x28] sm:$0xf]
    %v3139 = vld [vmem:[%s1360 + $0x2c] sm:$0xf]
    %v3140 = vld [vmem:[%s1360 + $0x30] sm:$0xf]
    %v3141 = vld [vmem:[%s1360 + $0x34] sm:$0xf]
    %v3142 = vld [vmem:[%s1360 + $0x38] sm:$0xf]
    %v3143 = vld [vmem:[%s1360 + $0x3c] sm:$0xf]
    %v3160 = vunpack.c.l.b16 %v3128
    %v3161 = vunpack.c.l.b16 %v3129
    %v3162 = vunpack.c.l.b16 %v3130
    %v3163 = vunpack.c.l.b16 %v3131
    %v3164 = vunpack.c.l.b16 %v3132
    %v3165 = vunpack.c.l.b16 %v3133
    %v3166 = vunpack.c.l.b16 %v3134
    %v3167 = vunpack.c.l.b16 %v3135
    %v3168 = vunpack.c.l.b16 %v3136
    %v3169 = vunpack.c.l.b16 %v3137
    %v3170 = vunpack.c.l.b16 %v3138
    %v3171 = vunpack.c.l.b16 %v3139
    %v3172 = vunpack.c.l.b16 %v3140
    %v3173 = vunpack.c.l.b16 %v3141
    %v3174 = vunpack.c.l.b16 %v3142
    %v3175 = vunpack.c.l.b16 %v3143
    %v3176 = vpack.c.b16 %v3161, %v3160
    %v3177 = vpack.c.b16 %v3163, %v3162
    %v3178 = vpack.c.b16 %v3165, %v3164
    %v3179 = vpack.c.b16 %v3167, %v3166
    %v3180 = vpack.c.b16 %v3169, %v3168
    %v3181 = vpack.c.b16 %v3171, %v3170
    %v3182 = vpack.c.b16 %v3173, %v3172
    %v3183 = vpack.c.b16 %v3175, %v3174
    %3192 = vmatprep.subr.bf16.mxu0 0
    %3193 = vmatpush1.bf16.msra.mxu0 %v3183
    %3194 = vmatprep.subr.bf16.mxu0 0
    %3195 = vmatpush1.bf16.msra.mxu0 %v3182
    %3196 = vmatprep.subr.bf16.mxu0 0
    %3197 = vmatpush1.bf16.msra.mxu0 %v3181
    %3198 = vmatprep.subr.bf16.mxu0 0
    %3199 = vmatpush1.bf16.msra.mxu0 %v3180
    %3200 = vmatprep.subr.bf16.mxu0 0
    %3201 = vmatpush1.bf16.msra.mxu0 %v3179
    %3202 = vmatprep.subr.bf16.mxu0 0
    %3203 = vmatpush1.bf16.msra.mxu0 %v3178
    %3204 = vmatprep.subr.bf16.mxu0 0
    %3205 = vmatpush1.bf16.msra.mxu0 %v3177
    %3206 = vmatprep.subr.bf16.mxu0 0
    %3207 = vmatpush1.bf16.msra.mxu0 %v3176
    %3208 = vmatprep.subr.bf16.mxu0 0
    %3209 = vmatpush2.bf16.msra.mxu0 0
    %3210 = vmatprep.subr.bf16.mxu0 0
    %3211 = vmatpush2.bf16.msra.mxu0 0
    %3212 = vmatprep.subr.bf16.mxu0 0
    %3213 = vmatpush2.bf16.msra.mxu0 0
    %3214 = vmatprep.subr.bf16.mxu0 0
    %3215 = vmatpush2.bf16.msra.mxu0 0
    %3216 = vmatprep.subr.bf16.mxu0 0
    %3217 = vmatpush2.bf16.msra.mxu0 0
    %3218 = vmatprep.subr.bf16.mxu0 0
    %3219 = vmatpush2.bf16.msra.mxu0 0
    %3220 = vmatprep.subr.bf16.mxu0 0
    %3221 = vmatpush2.bf16.msra.mxu0 0
    %3222 = vmatprep.subr.bf16.mxu0 0
    %3223 = vmatpush2.bf16.msra.mxu0 0
    %3224 = vmatprep.mubr.bf16.mxu0 0
    %3225 = vmatmul.mubr.bf16.gmra.mxu0 %v3127
    %v3226 = vpop.f32.mrf.mxu0
    %v3227 = vadd.f32 0.0, %v3226
    %v3228 = vpop.f32.mrf.mxu0
    %v3229 = vpop.f32.mrf.mxu0
    %v3230 = vpop.f32.mrf.mxu0
    %3231 = vdwg.mxu0
    %v3232 = vadd.f32 %v3121, %v3227
    %v3233 = vadd.f32 %v3232, %v1470
    %v3234 = vmax.f32 %v3233, 0.0
    %s3235 = scalar_lea.vmem [#allocation4], 4
    %3236 = vst [vmem:[%s3235] sm:$0x7] %v3234
    %v3237 = vld [vmem:[%s3235] sm:$0x1]
    %v3238 = vpack.c.bf16 %v3237, %v3237
    %v3239 = vld [vmem:[%s11] sm:$0xff]
    %v3240 = vld [vmem:[%s11 + $0x8] sm:$0xff]
    %v3241 = vld [vmem:[%s11 + $0x10] sm:$0xff]
    %v3242 = vld [vmem:[%s11 + $0x18] sm:$0xff]
    %v3243 = vld [vmem:[%s11 + $0x20] sm:$0xff]
    %v3244 = vld [vmem:[%s11 + $0x28] sm:$0xff]
    %v3245 = vld [vmem:[%s11 + $0x30] sm:$0xff]
    %v3246 = vld [vmem:[%s11 + $0x38] sm:$0xff]
    %v3247 = vld [vmem:[%s11 + $0x40] sm:$0xff]
    %v3248 = vld [vmem:[%s11 + $0x48] sm:$0xff]
    %v3249 = vld [vmem:[%s11 + $0x50] sm:$0xff]
    %v3250 = vld [vmem:[%s11 + $0x58] sm:$0xff]
    %v3251 = vld [vmem:[%s11 + $0x60] sm:$0xff]
    %v3252 = vld [vmem:[%s11 + $0x68] sm:$0xff]
    %v3253 = vld [vmem:[%s11 + $0x70] sm:$0xff]
    %v3254 = vld [vmem:[%s11 + $0x78] sm:$0xff]
    %v3271 = vunpack.c.l.b16 %v3239
    %v3272 = vunpack.c.h.b16 %v3239
    %v3273 = vunpack.c.l.b16 %v3240
    %v3274 = vunpack.c.h.b16 %v3240
    %v3275 = vunpack.c.l.b16 %v3241
    %v3276 = vunpack.c.h.b16 %v3241
    %v3277 = vunpack.c.l.b16 %v3242
    %v3278 = vunpack.c.h.b16 %v3242
    %v3279 = vunpack.c.l.b16 %v3243
    %v3280 = vunpack.c.h.b16 %v3243
    %v3281 = vunpack.c.l.b16 %v3244
    %v3282 = vunpack.c.h.b16 %v3244
    %v3283 = vunpack.c.l.b16 %v3245
    %v3284 = vunpack.c.h.b16 %v3245
    %v3285 = vunpack.c.l.b16 %v3246
    %v3286 = vunpack.c.h.b16 %v3246
    %v3287 = vunpack.c.l.b16 %v3247
    %v3288 = vunpack.c.h.b16 %v3247
    %v3289 = vunpack.c.l.b16 %v3248
    %v3290 = vunpack.c.h.b16 %v3248
    %v3291 = vunpack.c.l.b16 %v3249
    %v3292 = vunpack.c.h.b16 %v3249
    %v3293 = vunpack.c.l.b16 %v3250
    %v3294 = vunpack.c.h.b16 %v3250
    %v3295 = vunpack.c.l.b16 %v3251
    %v3296 = vunpack.c.h.b16 %v3251
    %v3297 = vunpack.c.l.b16 %v3252
    %v3298 = vunpack.c.h.b16 %v3252
    %v3299 = vunpack.c.l.b16 %v3253
    %v3300 = vunpack.c.h.b16 %v3253
    %v3301 = vunpack.c.l.b16 %v3254
    %v3302 = vunpack.c.h.b16 %v3254
    %v3303 = vpack.c.b16 %v3273, %v3271
    %v3304 = vpack.c.b16 %v3274, %v3272
    %v3305 = vpack.c.b16 %v3277, %v3275
    %v3306 = vpack.c.b16 %v3278, %v3276
    %v3307 = vpack.c.b16 %v3281, %v3279
    %v3308 = vpack.c.b16 %v3282, %v3280
    %v3309 = vpack.c.b16 %v3285, %v3283
    %v3310 = vpack.c.b16 %v3286, %v3284
    %v3311 = vpack.c.b16 %v3289, %v3287
    %v3312 = vpack.c.b16 %v3290, %v3288
    %v3313 = vpack.c.b16 %v3293, %v3291
    %v3314 = vpack.c.b16 %v3294, %v3292
    %v3315 = vpack.c.b16 %v3297, %v3295
    %v3316 = vpack.c.b16 %v3298, %v3296
    %v3317 = vpack.c.b16 %v3301, %v3299
    %v3318 = vpack.c.b16 %v3302, %v3300
    %3335 = vmatprep.subr.bf16.mxu0 %v3318
    %3336 = vmatpush1.bf16.msra.mxu0 %v3317
    %3337 = vmatprep.subr.bf16.mxu0 %v3316
    %3338 = vmatpush1.bf16.msra.mxu0 %v3315
    %3339 = vmatprep.subr.bf16.mxu0 %v3314
    %3340 = vmatpush1.bf16.msra.mxu0 %v3313
    %3341 = vmatprep.subr.bf16.mxu0 %v3312
    %3342 = vmatpush1.bf16.msra.mxu0 %v3311
    %3343 = vmatprep.subr.bf16.mxu0 %v3310
    %3344 = vmatpush1.bf16.msra.mxu0 %v3309
    %3345 = vmatprep.subr.bf16.mxu0 %v3308
    %3346 = vmatpush1.bf16.msra.mxu0 %v3307
    %3347 = vmatprep.subr.bf16.mxu0 %v3306
    %3348 = vmatpush1.bf16.msra.mxu0 %v3305
    %3349 = vmatprep.subr.bf16.mxu0 %v3304
    %3350 = vmatpush1.bf16.msra.mxu0 %v3303
    %3351 = vmatprep.subr.bf16.mxu0 0
    %3352 = vmatpush2.bf16.msra.mxu0 0
    %3353 = vmatprep.subr.bf16.mxu0 0
    %3354 = vmatpush2.bf16.msra.mxu0 0
    %3355 = vmatprep.subr.bf16.mxu0 0
    %3356 = vmatpush2.bf16.msra.mxu0 0
    %3357 = vmatprep.subr.bf16.mxu0 0
    %3358 = vmatpush2.bf16.msra.mxu0 0
    %3359 = vmatprep.subr.bf16.mxu0 0
    %3360 = vmatpush2.bf16.msra.mxu0 0
    %3361 = vmatprep.subr.bf16.mxu0 0
    %3362 = vmatpush2.bf16.msra.mxu0 0
    %3363 = vmatprep.subr.bf16.mxu0 0
    %3364 = vmatpush2.bf16.msra.mxu0 0
    %3365 = vmatprep.subr.bf16.mxu0 0
    %3366 = vmatpush2.bf16.msra.mxu0 0
    %3367 = vmatprep.mubr.bf16.mxu0 0
    %3368 = vmatmul.mubr.bf16.gmra.mxu0 %v3238
    %v3369 = vpop.f32.mrf.mxu0
    %v3370 = vadd.f32 0.0, %v3369
    %v3371 = vpop.f32.mrf.mxu0
    %v3372 = vadd.f32 0.0, %v3371
    %v3373 = vpop.f32.mrf.mxu0
    %v3374 = vpop.f32.mrf.mxu0
    %3375 = vdwg.mxu0
    %v3378 = vcombine.low %v3370, %v3372
    %v3380 = vunpack.c.l.s4 1966171168
    %v3381 = vunpack.c.0.s8 %v3380
    %v3382 = vlaneseq
    %v3383 = vshrl.u32 %v3382, 7
    %v3384 = vsub.s32 %v3381, %v3383
    %v3385 = vrot.slane %v3378, %v3384
    %v3387 = vunpack.c.l.s4 1966171168
    %v3388 = vunpack.c.0.s8 %v3387
    %v3389 = vlaneseq
    %v3390 = vshrl.u32 %v3389, 7
    %v3391 = vsub.s32 %v3388, %v3390
    %v3392 = vrot.slane %v3385, %v3391
    %v3394 = vadd.f32 %v165, %v3392
    %v3395 = vld [vmem:[%s3235 + $0x1] sm:$0x1]
    %v3396 = vpack.c.bf16 %v3395, %v3395
    %v3397 = vld [vmem:[%s1635] sm:$0xff]
    %v3398 = vld [vmem:[%s1635 + $0x8] sm:$0xff]
    %v3399 = vld [vmem:[%s1635 + $0x10] sm:$0xff]
    %v3400 = vld [vmem:[%s1635 + $0x18] sm:$0xff]
    %v3401 = vld [vmem:[%s1635 + $0x20] sm:$0xff]
    %v3402 = vld [vmem:[%s1635 + $0x28] sm:$0xff]
    %v3403 = vld [vmem:[%s1635 + $0x30] sm:$0xff]
    %v3404 = vld [vmem:[%s1635 + $0x38] sm:$0xff]
    %v3405 = vld [vmem:[%s1635 + $0x40] sm:$0xff]
    %v3406 = vld [vmem:[%s1635 + $0x48] sm:$0xff]
    %v3407 = vld [vmem:[%s1635 + $0x50] sm:$0xff]
    %v3408 = vld [vmem:[%s1635 + $0x58] sm:$0xff]
    %v3409 = vld [vmem:[%s1635 + $0x60] sm:$0xff]
    %v3410 = vld [vmem:[%s1635 + $0x68] sm:$0xff]
    %v3411 = vld [vmem:[%s1635 + $0x70] sm:$0xff]
    %v3412 = vld [vmem:[%s1635 + $0x78] sm:$0xff]
    %v3429 = vunpack.c.l.b16 %v3397
    %v3430 = vunpack.c.h.b16 %v3397
    %v3431 = vunpack.c.l.b16 %v3398
    %v3432 = vunpack.c.h.b16 %v3398
    %v3433 = vunpack.c.l.b16 %v3399
    %v3434 = vunpack.c.h.b16 %v3399
    %v3435 = vunpack.c.l.b16 %v3400
    %v3436 = vunpack.c.h.b16 %v3400
    %v3437 = vunpack.c.l.b16 %v3401
    %v3438 = vunpack.c.h.b16 %v3401
    %v3439 = vunpack.c.l.b16 %v3402
    %v3440 = vunpack.c.h.b16 %v3402
    %v3441 = vunpack.c.l.b16 %v3403
    %v3442 = vunpack.c.h.b16 %v3403
    %v3443 = vunpack.c.l.b16 %v3404
    %v3444 = vunpack.c.h.b16 %v3404
    %v3445 = vunpack.c.l.b16 %v3405
    %v3446 = vunpack.c.h.b16 %v3405
    %v3447 = vunpack.c.l.b16 %v3406
    %v3448 = vunpack.c.h.b16 %v3406
    %v3449 = vunpack.c.l.b16 %v3407
    %v3450 = vunpack.c.h.b16 %v3407
    %v3451 = vunpack.c.l.b16 %v3408
    %v3452 = vunpack.c.h.b16 %v3408
    %v3453 = vunpack.c.l.b16 %v3409
    %v3454 = vunpack.c.h.b16 %v3409
    %v3455 = vunpack.c.l.b16 %v3410
    %v3456 = vunpack.c.h.b16 %v3410
    %v3457 = vunpack.c.l.b16 %v3411
    %v3458 = vunpack.c.h.b16 %v3411
    %v3459 = vunpack.c.l.b16 %v3412
    %v3460 = vunpack.c.h.b16 %v3412
    %v3461 = vpack.c.b16 %v3431, %v3429
    %v3462 = vpack.c.b16 %v3432, %v3430
    %v3463 = vpack.c.b16 %v3435, %v3433
    %v3464 = vpack.c.b16 %v3436, %v3434
    %v3465 = vpack.c.b16 %v3439, %v3437
    %v3466 = vpack.c.b16 %v3440, %v3438
    %v3467 = vpack.c.b16 %v3443, %v3441
    %v3468 = vpack.c.b16 %v3444, %v3442
    %v3469 = vpack.c.b16 %v3447, %v3445
    %v3470 = vpack.c.b16 %v3448, %v3446
    %v3471 = vpack.c.b16 %v3451, %v3449
    %v3472 = vpack.c.b16 %v3452, %v3450
    %v3473 = vpack.c.b16 %v3455, %v3453
    %v3474 = vpack.c.b16 %v3456, %v3454
    %v3475 = vpack.c.b16 %v3459, %v3457
    %v3476 = vpack.c.b16 %v3460, %v3458
    %3493 = vmatprep.subr.bf16.mxu0 %v3476
    %3494 = vmatpush1.bf16.msra.mxu0 %v3475
    %3495 = vmatprep.subr.bf16.mxu0 %v3474
    %3496 = vmatpush1.bf16.msra.mxu0 %v3473
    %3497 = vmatprep.subr.bf16.mxu0 %v3472
    %3498 = vmatpush1.bf16.msra.mxu0 %v3471
    %3499 = vmatprep.subr.bf16.mxu0 %v3470
    %3500 = vmatpush1.bf16.msra.mxu0 %v3469
    %3501 = vmatprep.subr.bf16.mxu0 %v3468
    %3502 = vmatpush1.bf16.msra.mxu0 %v3467
    %3503 = vmatprep.subr.bf16.mxu0 %v3466
    %3504 = vmatpush1.bf16.msra.mxu0 %v3465
    %3505 = vmatprep.subr.bf16.mxu0 %v3464
    %3506 = vmatpush1.bf16.msra.mxu0 %v3463
    %3507 = vmatprep.subr.bf16.mxu0 %v3462
    %3508 = vmatpush1.bf16.msra.mxu0 %v3461
    %3509 = vmatprep.subr.bf16.mxu0 0
    %3510 = vmatpush2.bf16.msra.mxu0 0
    %3511 = vmatprep.subr.bf16.mxu0 0
    %3512 = vmatpush2.bf16.msra.mxu0 0
    %3513 = vmatprep.subr.bf16.mxu0 0
    %3514 = vmatpush2.bf16.msra.mxu0 0
    %3515 = vmatprep.subr.bf16.mxu0 0
    %3516 = vmatpush2.bf16.msra.mxu0 0
    %3517 = vmatprep.subr.bf16.mxu0 0
    %3518 = vmatpush2.bf16.msra.mxu0 0
    %3519 = vmatprep.subr.bf16.mxu0 0
    %3520 = vmatpush2.bf16.msra.mxu0 0
    %3521 = vmatprep.subr.bf16.mxu0 0
    %3522 = vmatpush2.bf16.msra.mxu0 0
    %3523 = vmatprep.subr.bf16.mxu0 0
    %3524 = vmatpush2.bf16.msra.mxu0 0
    %3525 = vmatprep.mubr.bf16.mxu0 0
    %3526 = vmatmul.mubr.bf16.gmra.mxu0 %v3396
    %v3527 = vpop.f32.mrf.mxu0
    %v3528 = vadd.f32 0.0, %v3527
    %v3529 = vpop.f32.mrf.mxu0
    %v3530 = vadd.f32 0.0, %v3529
    %v3531 = vpop.f32.mrf.mxu0
    %v3532 = vpop.f32.mrf.mxu0
    %3533 = vdwg.mxu0
    %v3536 = vcombine.low %v3528, %v3530
    %v3538 = vunpack.c.l.s4 1966171168
    %v3539 = vunpack.c.0.s8 %v3538
    %v3540 = vlaneseq
    %v3541 = vshrl.u32 %v3540, 7
    %v3542 = vsub.s32 %v3539, %v3541
    %v3543 = vrot.slane %v3536, %v3542
    %v3545 = vunpack.c.l.s4 1966171168
    %v3546 = vunpack.c.0.s8 %v3545
    %v3547 = vlaneseq
    %v3548 = vshrl.u32 %v3547, 7
    %v3549 = vsub.s32 %v3546, %v3548
    %v3550 = vrot.slane %v3543, %v3549
    %v3552 = vadd.f32 %v3394, %v3550
    %v3553 = vld [vmem:[%s3235 + $0x2] sm:$0x1]
    %v3554 = vpack.c.bf16 %v3553, %v3553
    %v3555 = vld [vmem:[%s1794] sm:$0xff]
    %v3556 = vld [vmem:[%s1794 + $0x8] sm:$0xff]
    %v3557 = vld [vmem:[%s1794 + $0x10] sm:$0xff]
    %v3558 = vld [vmem:[%s1794 + $0x18] sm:$0xff]
    %v3559 = vld [vmem:[%s1794 + $0x20] sm:$0xff]
    %v3560 = vld [vmem:[%s1794 + $0x28] sm:$0xff]
    %v3561 = vld [vmem:[%s1794 + $0x30] sm:$0xff]
    %v3562 = vld [vmem:[%s1794 + $0x38] sm:$0xff]
    %v3563 = vld [vmem:[%s1794 + $0x40] sm:$0xff]
    %v3564 = vld [vmem:[%s1794 + $0x48] sm:$0xff]
    %v3565 = vld [vmem:[%s1794 + $0x50] sm:$0xff]
    %v3566 = vld [vmem:[%s1794 + $0x58] sm:$0xff]
    %v3567 = vld [vmem:[%s1794 + $0x60] sm:$0xff]
    %v3568 = vld [vmem:[%s1794 + $0x68] sm:$0xff]
    %v3569 = vld [vmem:[%s1794 + $0x70] sm:$0xff]
    %v3570 = vld [vmem:[%s1794 + $0x78] sm:$0xff]
    %v3587 = vunpack.c.l.b16 %v3555
    %v3588 = vunpack.c.h.b16 %v3555
    %v3589 = vunpack.c.l.b16 %v3556
    %v3590 = vunpack.c.h.b16 %v3556
    %v3591 = vunpack.c.l.b16 %v3557
    %v3592 = vunpack.c.h.b16 %v3557
    %v3593 = vunpack.c.l.b16 %v3558
    %v3594 = vunpack.c.h.b16 %v3558
    %v3595 = vunpack.c.l.b16 %v3559
    %v3596 = vunpack.c.h.b16 %v3559
    %v3597 = vunpack.c.l.b16 %v3560
    %v3598 = vunpack.c.h.b16 %v3560
    %v3599 = vunpack.c.l.b16 %v3561
    %v3600 = vunpack.c.h.b16 %v3561
    %v3601 = vunpack.c.l.b16 %v3562
    %v3602 = vunpack.c.h.b16 %v3562
    %v3603 = vunpack.c.l.b16 %v3563
    %v3604 = vunpack.c.h.b16 %v3563
    %v3605 = vunpack.c.l.b16 %v3564
    %v3606 = vunpack.c.h.b16 %v3564
    %v3607 = vunpack.c.l.b16 %v3565
    %v3608 = vunpack.c.h.b16 %v3565
    %v3609 = vunpack.c.l.b16 %v3566
    %v3610 = vunpack.c.h.b16 %v3566
    %v3611 = vunpack.c.l.b16 %v3567
    %v3612 = vunpack.c.h.b16 %v3567
    %v3613 = vunpack.c.l.b16 %v3568
    %v3614 = vunpack.c.h.b16 %v3568
    %v3615 = vunpack.c.l.b16 %v3569
    %v3616 = vunpack.c.h.b16 %v3569
    %v3617 = vunpack.c.l.b16 %v3570
    %v3618 = vunpack.c.h.b16 %v3570
    %v3619 = vpack.c.b16 %v3589, %v3587
    %v3620 = vpack.c.b16 %v3590, %v3588
    %v3621 = vpack.c.b16 %v3593, %v3591
    %v3622 = vpack.c.b16 %v3594, %v3592
    %v3623 = vpack.c.b16 %v3597, %v3595
    %v3624 = vpack.c.b16 %v3598, %v3596
    %v3625 = vpack.c.b16 %v3601, %v3599
    %v3626 = vpack.c.b16 %v3602, %v3600
    %v3627 = vpack.c.b16 %v3605, %v3603
    %v3628 = vpack.c.b16 %v3606, %v3604
    %v3629 = vpack.c.b16 %v3609, %v3607
    %v3630 = vpack.c.b16 %v3610, %v3608
    %v3631 = vpack.c.b16 %v3613, %v3611
    %v3632 = vpack.c.b16 %v3614, %v3612
    %v3633 = vpack.c.b16 %v3617, %v3615
    %v3634 = vpack.c.b16 %v3618, %v3616
    %3651 = vmatprep.subr.bf16.mxu0 %v3634
    %3652 = vmatpush1.bf16.msra.mxu0 %v3633
    %3653 = vmatprep.subr.bf16.mxu0 %v3632
    %3654 = vmatpush1.bf16.msra.mxu0 %v3631
    %3655 = vmatprep.subr.bf16.mxu0 %v3630
    %3656 = vmatpush1.bf16.msra.mxu0 %v3629
    %3657 = vmatprep.subr.bf16.mxu0 %v3628
    %3658 = vmatpush1.bf16.msra.mxu0 %v3627
    %3659 = vmatprep.subr.bf16.mxu0 %v3626
    %3660 = vmatpush1.bf16.msra.mxu0 %v3625
    %3661 = vmatprep.subr.bf16.mxu0 %v3624
    %3662 = vmatpush1.bf16.msra.mxu0 %v3623
    %3663 = vmatprep.subr.bf16.mxu0 %v3622
    %3664 = vmatpush1.bf16.msra.mxu0 %v3621
    %3665 = vmatprep.subr.bf16.mxu0 %v3620
    %3666 = vmatpush1.bf16.msra.mxu0 %v3619
    %3667 = vmatprep.subr.bf16.mxu0 0
    %3668 = vmatpush2.bf16.msra.mxu0 0
    %3669 = vmatprep.subr.bf16.mxu0 0
    %3670 = vmatpush2.bf16.msra.mxu0 0
    %3671 = vmatprep.subr.bf16.mxu0 0
    %3672 = vmatpush2.bf16.msra.mxu0 0
    %3673 = vmatprep.subr.bf16.mxu0 0
    %3674 = vmatpush2.bf16.msra.mxu0 0
    %3675 = vmatprep.subr.bf16.mxu0 0
    %3676 = vmatpush2.bf16.msra.mxu0 0
    %3677 = vmatprep.subr.bf16.mxu0 0
    %3678 = vmatpush2.bf16.msra.mxu0 0
    %3679 = vmatprep.subr.bf16.mxu0 0
    %3680 = vmatpush2.bf16.msra.mxu0 0
    %3681 = vmatprep.subr.bf16.mxu0 0
    %3682 = vmatpush2.bf16.msra.mxu0 0
    %3683 = vmatprep.mubr.bf16.mxu0 0
    %3684 = vmatmul.mubr.bf16.gmra.mxu0 %v3554
    %v3685 = vpop.f32.mrf.mxu0
    %v3686 = vadd.f32 0.0, %v3685
    %v3687 = vpop.f32.mrf.mxu0
    %v3688 = vadd.f32 0.0, %v3687
    %v3689 = vpop.f32.mrf.mxu0
    %v3690 = vpop.f32.mrf.mxu0
    %3691 = vdwg.mxu0
    %v3694 = vcombine.low %v3686, %v3688
    %v3696 = vunpack.c.l.s4 1966171168
    %v3697 = vunpack.c.0.s8 %v3696
    %v3698 = vlaneseq
    %v3699 = vshrl.u32 %v3698, 7
    %v3700 = vsub.s32 %v3697, %v3699
    %v3701 = vrot.slane %v3694, %v3700
    %v3703 = vunpack.c.l.s4 1966171168
    %v3704 = vunpack.c.0.s8 %v3703
    %v3705 = vlaneseq
    %v3706 = vshrl.u32 %v3705, 7
    %v3707 = vsub.s32 %v3704, %v3706
    %v3708 = vrot.slane %v3701, %v3707
    %v3710 = vadd.f32 %v3552, %v3708
    %s3711 = scalar_lea.vmem [#allocation5], 1
    %3712 = vst.msk [vmem:[%s3711] ss:$2 sm:$0x3] %vm1954, %v3710
    %v3713 = vld [vmem:[#allocation5] sm:$0xf]
    %v3716 = vunpack.c.l.s4 1983009808
    %v3717 = vunpack.c.0.s8 %v3716
    %v3718 = vlaneseq
    %v3719 = vshrl.u32 %v3718, 7
    %v3720 = vsub.s32 %v3717, %v3719
    %v3721 = vrot.slane %v3713, %v3720
    %v3722 = vcombine.high %v3721, %v3721
    %v3725 = vpack.c.bf16 %v3721, %v3721
    %v3726 = vpack.c.bf16 %v3722, %v3722
    %v3727 = vld [vmem:[%s13] sm:$0xf]
    %v3728 = vld [vmem:[%s13 + $0x4] sm:$0xf]
    %v3729 = vld [vmem:[%s13 + $0x8] sm:$0xf]
    %v3730 = vld [vmem:[%s13 + $0xc] sm:$0xf]
    %v3731 = vld [vmem:[%s13 + $0x10] sm:$0xf]
    %v3732 = vld [vmem:[%s13 + $0x14] sm:$0xf]
    %v3733 = vld [vmem:[%s13 + $0x18] sm:$0xf]
    %v3734 = vld [vmem:[%s13 + $0x1c] sm:$0xf]
    %v3735 = vld [vmem:[%s13 + $0x20] sm:$0xf]
    %v3736 = vld [vmem:[%s13 + $0x24] sm:$0xf]
    %v3737 = vld [vmem:[%s13 + $0x28] sm:$0xf]
    %v3738 = vld [vmem:[%s13 + $0x2c] sm:$0xf]
    %v3739 = vld [vmem:[%s13 + $0x30] sm:$0xf]
    %v3740 = vld [vmem:[%s13 + $0x34] sm:$0xf]
    %v3741 = vld [vmem:[%s13 + $0x38] sm:$0xf]
    %v3742 = vld [vmem:[%s13 + $0x3c] sm:$0xf]
    %v3743 = vld [vmem:[%s13 + $0x40] sm:$0xf]
    %v3744 = vld [vmem:[%s13 + $0x44] sm:$0xf]
    %v3745 = vld [vmem:[%s13 + $0x48] sm:$0xf]
    %v3746 = vld [vmem:[%s13 + $0x4c] sm:$0xf]
    %v3747 = vld [vmem:[%s13 + $0x50] sm:$0xf]
    %v3748 = vld [vmem:[%s13 + $0x54] sm:$0xf]
    %v3749 = vld [vmem:[%s13 + $0x58] sm:$0xf]
    %v3750 = vld [vmem:[%s13 + $0x5c] sm:$0xf]
    %v3751 = vld [vmem:[%s14] sm:$0x1]
    %v3753 = vlaneseq
    %v3754 = vshrl.u32 %v3753, 7
    %v3755 = vsub.s32 0, %v3754
    %v3756 = vrot.slane %v3751, %v3755
    %v3782 = vunpack.c.l.b16 %v3727
    %v3783 = vunpack.c.l.b16 %v3728
    %v3784 = vunpack.c.l.b16 %v3729
    %v3785 = vunpack.c.l.b16 %v3730
    %v3786 = vunpack.c.l.b16 %v3731
    %v3787 = vunpack.c.l.b16 %v3732
    %v3788 = vunpack.c.l.b16 %v3733
    %v3789 = vunpack.c.l.b16 %v3734
    %v3790 = vunpack.c.l.b16 %v3735
    %v3791 = vunpack.c.l.b16 %v3736
    %v3792 = vunpack.c.l.b16 %v3737
    %v3793 = vunpack.c.l.b16 %v3738
    %v3794 = vunpack.c.l.b16 %v3739
    %v3795 = vunpack.c.l.b16 %v3740
    %v3796 = vunpack.c.l.b16 %v3741
    %v3797 = vunpack.c.l.b16 %v3742
    %v3798 = vunpack.c.l.b16 %v3743
    %v3799 = vunpack.c.l.b16 %v3744
    %v3800 = vunpack.c.l.b16 %v3745
    %v3801 = vunpack.c.l.b16 %v3746
    %v3802 = vunpack.c.l.b16 %v3747
    %v3803 = vunpack.c.l.b16 %v3748
    %v3804 = vunpack.c.l.b16 %v3749
    %v3805 = vunpack.c.l.b16 %v3750
    %v3806 = vpack.c.b16 %v3783, %v3782
    %v3807 = vpack.c.b16 %v3785, %v3784
    %v3808 = vpack.c.b16 %v3787, %v3786
    %v3809 = vpack.c.b16 %v3789, %v3788
    %v3810 = vpack.c.b16 %v3791, %v3790
    %v3811 = vpack.c.b16 %v3793, %v3792
    %v3812 = vpack.c.b16 %v3795, %v3794
    %v3813 = vpack.c.b16 %v3797, %v3796
    %v3814 = vpack.c.b16 %v3799, %v3798
    %v3815 = vpack.c.b16 %v3801, %v3800
    %v3816 = vpack.c.b16 %v3803, %v3802
    %v3817 = vpack.c.b16 %v3805, %v3804
    %vm3830 = vcmask 523264
    %v3832 = vsel %vm3830, %v3726, 0
    %3834 = vmatprep.subr.bf16.mxu0 0
    %3835 = vmatpush1.bf16.msra.mxu0 %v3813
    %3836 = vmatprep.subr.bf16.mxu0 0
    %3837 = vmatpush1.bf16.msra.mxu0 %v3812
    %3838 = vmatprep.subr.bf16.mxu0 0
    %3839 = vmatpush1.bf16.msra.mxu0 %v3811
    %3840 = vmatprep.subr.bf16.mxu0 0
    %3841 = vmatpush1.bf16.msra.mxu0 %v3810
    %3842 = vmatprep.subr.bf16.mxu0 0
    %3843 = vmatpush1.bf16.msra.mxu0 %v3809
    %3844 = vmatprep.subr.bf16.mxu0 0
    %3845 = vmatpush1.bf16.msra.mxu0 %v3808
    %3846 = vmatprep.subr.bf16.mxu0 0
    %3847 = vmatpush1.bf16.msra.mxu0 %v3807
    %3848 = vmatprep.subr.bf16.mxu0 0
    %3849 = vmatpush1.bf16.msra.mxu0 %v3806
    %3850 = vmatprep.subr.bf16.mxu0 0
    %3851 = vmatpush2.bf16.msra.mxu0 0
    %3852 = vmatprep.subr.bf16.mxu0 0
    %3853 = vmatpush2.bf16.msra.mxu0 0
    %3854 = vmatprep.subr.bf16.mxu0 0
    %3855 = vmatpush2.bf16.msra.mxu0 0
    %3856 = vmatprep.subr.bf16.mxu0 0
    %3857 = vmatpush2.bf16.msra.mxu0 0
    %3858 = vmatprep.subr.bf16.mxu0 0
    %3859 = vmatpush2.bf16.msra.mxu0 %v3817
    %3860 = vmatprep.subr.bf16.mxu0 0
    %3861 = vmatpush2.bf16.msra.mxu0 %v3816
    %3862 = vmatprep.subr.bf16.mxu0 0
    %3863 = vmatpush2.bf16.msra.mxu0 %v3815
    %3864 = vmatprep.subr.bf16.mxu0 0
    %3865 = vmatpush2.bf16.msra.mxu0 %v3814
    %3866 = vmatprep.mubr.bf16.mxu0 %v3832
    %3867 = vmatmul.mubr.bf16.gmra.mxu0 %v3725
    %v3868 = vpop.f32.mrf.mxu0
    %v3869 = vadd.f32 %v3756, %v3868
    %v3870 = vpop.f32.mrf.mxu0
    %v3871 = vpop.f32.mrf.mxu0
    %v3872 = vpop.f32.mrf.mxu0
    %3873 = vdwg.mxu0
    %3874 = vst [vmem:[#allocation17] sm:$0x3] %v3869
    // Predicated region
    $region86: #{tpu_custom_call.1} parent=1 // pred_check
      _
    $region87: #{tpu_custom_call.1} parent=1 // pred_check_branch
      %3876 = sbr.rel (0) target = $region89
    $region88: #{tpu_custom_call.1} parent=1 // pred_region
      %s3878 = ssub.s32 32, 32
      %3879 = vsyncadd [#allocation8], %s3878
      %s3881 = sshll.u32 [#allocation17], 4
      %s3882 = int_to_ptr.vmem [resolvable:$true] %s3881
      %3884 = dma.vmem_to_hbm [thread:$0]  %s3882, 32, %s15, [#allocation8]
    $region89: #{tpu_custom_call.1} parent=1 // pred_fallthru
      _
    // Predicated region
    $region90: #{tpu_custom_call.1} parent=1 // pred_check
      _
    $region91: #{tpu_custom_call.1} parent=1 // pred_check_branch
      %3886 = sbr.rel (0) target = $region93
    $region92: #{tpu_custom_call.1} parent=1 // pred_region
      %3887 = dma.done [#allocation8], 32
    $region93: #{tpu_custom_call.1} parent=1 // pred_fallthru
      _
    %3888 = vsyncpa [#allocation7], 1
    %3889 = vsyncpa [#allocation10], 1
    %3890 = vsyncpa [#allocation13], 1
    %3891 = vsyncpa [#allocation16], 1
    %3892 = vsyncpa [#allocation8], 1

</llo_original>
